<compile_context>
chip_gen: v6e
topology: v6e:2x2x1
jax: 0.10.0
libtpu: 0.0.40
codegen_flags: <defaults>
</compile_context>

<pallas_src>
import functools

import jax
import jax.numpy as jnp
from jax.experimental import pallas as pl
from jax.experimental.pallas import tpu as pltpu

BN_EPS = 1e-5
NUM_CLASSES = 5
VMEM_LIMIT = 32 * 1024 * 1024          # safe on v5e (128M), v6e (128M), v7x (64M)

# (name, planes(cmid), cout, n_blocks, first-block stride)
RESNET50_CFG = (
    ("layer1", 64, 256, 3, 1),
    ("layer2", 128, 512, 4, 2),
    ("layer3", 256, 1024, 6, 2),
    ("layer4", 512, 2048, 3, 2),
)


def _round_up(x, m):
    return (x + m - 1) // m * m


def _pick_tn(n):
    for t in (256, 128):
        if n % t == 0:
            return t
    return n                     # small N (e.g. 64): use the full dim (lane-dense enough)


# ---------------------------------------------------------------------------
# Fused matmul kernel (1x1 convs + fc head):
#   out = [relu]( (A @ W) * scale + bias [+ residual] )
# Single full-K block, f32 accumulation, bf16 operands, bf16/f32 output.
# ---------------------------------------------------------------------------
@functools.lru_cache(maxsize=None)
def _make_matmul_kernel(relu, has_res):
    def kernel(*refs):
        if has_res:
            a_ref, w_ref, s_ref, b_ref, r_ref, o_ref = refs
        else:
            a_ref, w_ref, s_ref, b_ref, o_ref = refs
        y = jnp.dot(a_ref[...], w_ref[...], preferred_element_type=jnp.float32)
        y = y * s_ref[...] + b_ref[...]
        if has_res:
            y = y + r_ref[...].astype(jnp.float32)
        if relu:
            y = jnp.maximum(y, 0.0)
        o_ref[...] = y.astype(o_ref.dtype)
    return kernel


@functools.partial(jax.jit, static_argnames=("relu", "out_dtype"))
def matmul_bn_act(a, w, scale, bias, residual=None, *, relu, out_dtype=jnp.bfloat16):
    """A:(M,K) -> bf16, W:(K,N) bf16 pre-folded, scale/bias:(1,N) f32."""
    M, K = a.shape
    N = w.shape[1]
    tm = _round_up(M, 8) if M <= 512 else 256       # adaptive TM (min sublane tile)
    mp = _round_up(M, tm)
    tn = _pick_tn(N)

    a = a.astype(jnp.bfloat16)
    if mp != M:
        a = jnp.pad(a, ((0, mp - M), (0, 0)))
    operands = [a, w, scale, bias]
    in_specs = [
        pl.BlockSpec((tm, K), lambda i, j: (i, 0)),
        pl.BlockSpec((K, tn), lambda i, j: (0, j)),
        pl.BlockSpec((1, tn), lambda i, j: (0, j)),
        pl.BlockSpec((1, tn), lambda i, j: (0, j)),
    ]
    if residual is not None:
        r = residual.astype(jnp.bfloat16)
        if mp != M:
            r = jnp.pad(r, ((0, mp - M), (0, 0)))
        operands.append(r)
        in_specs.append(pl.BlockSpec((tm, tn), lambda i, j: (i, j)))

    out = pl.pallas_call(
        _make_matmul_kernel(relu, residual is not None),
        out_shape=jax.ShapeDtypeStruct((mp, N), out_dtype),
        grid_spec=pltpu.PrefetchScalarGridSpec(
            num_scalar_prefetch=0,
            grid=(mp // tm, N // tn),             # N innermost: A tile stays resident
            in_specs=in_specs,
            out_specs=pl.BlockSpec((tm, tn), lambda i, j: (i, j)),
        ),
        compiler_params=pltpu.CompilerParams(
            dimension_semantics=("parallel", "parallel"),
            vmem_limit_bytes=VMEM_LIMIT),
    )(*operands)
    return out if mp == M else out[:M]


# ---------------------------------------------------------------------------
# Direct spatial conv kernel (3x3 and 7x7, stride 1 or 2) + folded BN + ReLU.
# No im2col: per grid step one output row (all Wo columns) for one Cout tile.
# ---------------------------------------------------------------------------
@functools.lru_cache(maxsize=None)
def _make_conv_kernel(kh, kw, nph, wo, relu):
    n_x = kh * nph

    def kernel(*refs):
        x_refs = refs[:n_x]
        w_ref, s_ref, b_ref, o_ref = refs[n_x:]
        acc = None
        for i in range(kh):                               # row taps
            for p in range(nph):                          # column phases (stride)
                xv = x_refs[i * nph + p][0, 0]            # (Wc_p, Cin) bf16 row
                for j in range(p, kw, nph):               # column taps of this phase
                    off = j // nph
                    a = xv[off:off + wo, :]               # static contiguous slice
                    d = jnp.dot(a, w_ref[i * kw + j],
                                preferred_element_type=jnp.float32)
                    acc = d if acc is None else acc + d
        y = acc * s_ref[...] + b_ref[...]
        if relu:
            y = jnp.maximum(y, 0.0)
        o_ref[0, 0] = y.astype(o_ref.dtype)
    return kernel


@functools.partial(jax.jit, static_argnames=("kh", "kw", "stride", "pad", "relu"))
def conv_bn_act_spatial(x, p, *, kh, kw, stride, pad, relu):
    B, H, W, cin = x.shape
    w = p["w"]                                   # (kh*kw, cin, cout) bf16
    cout = w.shape[-1]
    ho = (H + 2 * pad - kh) // stride + 1
    wo = (W + 2 * pad - kw) // stride + 1
    tn = _pick_tn(cout)

    xp = jnp.pad(x.astype(jnp.bfloat16), ((0, 0), (pad, pad), (pad, pad), (0, 0)))
    nph = stride                                  # 1 or 2 column phases
    need = (kw - 1) // stride + wo
    phases = []
    for ph in range(nph):
        pv = xp[:, :, ph::stride, :]
        if pv.shape[2] < need:
            pv = jnp.pad(pv, ((0, 0), (0, 0), (0, need - pv.shape[2]), (0, 0)))
        phases.append(pv)

    def row_map(i):
        return lambda n, b, h: (b, h * stride + i, 0, 0)

    operands, in_specs = [], []
    for i in range(kh):
        for ph in range(nph):
            pv = phases[ph]
            operands.append(pv)
            in_specs.append(pl.BlockSpec((1, 1, pv.shape[2], cin), row_map(i)))
    operands += [w, p["scale"], p["bias"]]
    in_specs += [
        pl.BlockSpec((kh * kw, cin, tn), lambda n, b, h: (0, 0, n)),
        pl.BlockSpec((1, tn), lambda n, b, h: (0, n)),
        pl.BlockSpec((1, tn), lambda n, b, h: (0, n)),
    ]

    return pl.pallas_call(
        _make_conv_kernel(kh, kw, nph, wo, relu),
        out_shape=jax.ShapeDtypeStruct((B, ho, wo, cout), jnp.bfloat16),
        grid_spec=pltpu.PrefetchScalarGridSpec(
            num_scalar_prefetch=0,
            grid=(cout // tn, B, ho),             # cout tile outermost: weights stay resident
            in_specs=in_specs,
            out_specs=pl.BlockSpec((1, 1, wo, tn), lambda n, b, h: (b, h, 0, n)),
        ),
        compiler_params=pltpu.CompilerParams(
            dimension_semantics=("parallel", "parallel", "parallel"),
            vmem_limit_bytes=VMEM_LIMIT),
    )(*operands)


# ---------------------------------------------------------------------------
# 3x3 stride-2 max-pool (same row-tap structure, no 9-way HBM stack).
# ---------------------------------------------------------------------------
@functools.lru_cache(maxsize=None)
def _make_maxpool_kernel(kh, kw, nph, wo):
    n_x = kh * nph

    def kernel(*refs):
        x_refs, o_ref = refs[:n_x], refs[n_x]
        m = None
        for i in range(kh):
            for p in range(nph):
                xv = x_refs[i * nph + p][0, 0]
                for j in range(p, kw, nph):
                    off = j // nph
                    a = xv[off:off + wo, :]
                    m = a if m is None else jnp.maximum(m, a)
        o_ref[0, 0] = m
    return kernel


@jax.jit
def maxpool_3x3_s2(x):
    B, H, W, C = x.shape
    kh = kw = 3
    stride, pad = 2, 1
    ho = (H + 2 * pad - kh) // stride + 1
    wo = (W + 2 * pad - kw) // stride + 1
    neg = float(jnp.finfo(x.dtype).min)
    xp = jnp.pad(x, ((0, 0), (pad, pad), (pad, pad), (0, 0)), constant_values=neg)
    nph = stride
    need = (kw - 1) // stride + wo
    phases = []
    for ph in range(nph):
        pv = xp[:, :, ph::stride, :]
        if pv.shape[2] < need:
            pv = jnp.pad(pv, ((0, 0), (0, 0), (0, need - pv.shape[2]), (0, 0)),
                         constant_values=neg)
        phases.append(pv)

    def row_map(i):
        return lambda b, h: (b, h * stride + i, 0, 0)

    operands, in_specs = [], []
    for i in range(kh):
        for ph in range(nph):
            pv = phases[ph]
            operands.append(pv)
            in_specs.append(pl.BlockSpec((1, 1, pv.shape[2], C), row_map(i)))

    return pl.pallas_call(
        _make_maxpool_kernel(kh, kw, nph, wo),
        out_shape=jax.ShapeDtypeStruct((B, ho, wo, C), x.dtype),
        grid_spec=pltpu.PrefetchScalarGridSpec(
            num_scalar_prefetch=0, grid=(B, ho),
            in_specs=in_specs,
            out_specs=pl.BlockSpec((1, 1, wo, C), lambda b, h: (b, h, 0, 0)),
        ),
        compiler_params=pltpu.CompilerParams(
            dimension_semantics=("parallel", "parallel"),
            vmem_limit_bytes=VMEM_LIMIT),
    )(*operands)


# ---------------------------------------------------------------------------
# Global average pool, gridded over batch with C lane-dense.
# ---------------------------------------------------------------------------
def _gap_kernel(x_ref, o_ref):
    hw = x_ref.shape[1] * x_ref.shape[2]
    s = jnp.sum(x_ref[...].astype(jnp.float32), axis=(1, 2))
    o_ref[...] = s * (1.0 / hw)


@jax.jit
def global_avg_pool(x):
    B, H, W, C = x.shape
    return pl.pallas_call(
        _gap_kernel,
        out_shape=jax.ShapeDtypeStruct((B, C), jnp.float32),
        grid_spec=pltpu.PrefetchScalarGridSpec(
            num_scalar_prefetch=0, grid=(B,),
            in_specs=[pl.BlockSpec((1, H, W, C), lambda b: (b, 0, 0, 0))],
            out_specs=pl.BlockSpec((1, C), lambda b: (b, 0)),
        ),
        compiler_params=pltpu.CompilerParams(
            dimension_semantics=("parallel",),
            vmem_limit_bytes=VMEM_LIMIT),
    )(x)


# ---------------------------------------------------------------------------
# Deterministic parameter construction (synthetic; no checkpoint loading),
# then one-time preparation: fold eval-mode BN, reshape + cast weights to bf16,
# pre-pad the final head to 128 lanes.
# ---------------------------------------------------------------------------
def init_conv_bn(key, kh, kw, cin, cout):
    kconv, kg, kb, km, kv = jax.random.split(key, 5)
    fan_in = kh * kw * cin
    return dict(
        w=jax.random.normal(kconv, (kh, kw, cin, cout), jnp.float32)
          * jnp.sqrt(2.0 / fan_in),
        gamma=1.0 + 0.1 * jax.random.normal(kg, (cout,), jnp.float32),
        beta=0.1 * jax.random.normal(kb, (cout,), jnp.float32),
        mean=0.1 * jax.random.normal(km, (cout,), jnp.float32),
        var=1.0 + 0.1 * jax.random.uniform(kv, (cout,), jnp.float32),
    )


def init_bottleneck(key, cin, cmid, cout, has_down):
    keys = jax.random.split(key, 4)
    p = dict(conv1=init_conv_bn(keys[0], 1, 1, cin, cmid),
             conv2=init_conv_bn(keys[1], 3, 3, cmid, cmid),
             conv3=init_conv_bn(keys[2], 1, 1, cmid, cout))
    if has_down:
        p['down'] = init_conv_bn(keys[3], 1, 1, cin, cout)
    return p


def init_params(key, n_classes=NUM_CLASSES):
    keys = iter(jax.random.split(key, 64))
    params = {'conv1': init_conv_bn(next(keys), 7, 7, 3, 64)}
    cin = 64
    for name, cmid, cout, nblocks, _ in RESNET50_CFG:
        blocks = []
        for b in range(nblocks):
            blocks.append(init_bottleneck(next(keys), cin, cmid, cout,
                                          has_down=(b == 0)))
            cin = cout
        params[name] = blocks
    d = 2048
    k1, k2, k3, k4, k5, k6, k7, k8 = jax.random.split(next(keys), 8)
    params['head'] = dict(
        w1=jax.random.normal(k1, (d, d), jnp.float32) / jnp.sqrt(d),
        b1=0.01 * jax.random.normal(k2, (d,), jnp.float32),
        gamma=1.0 + 0.1 * jax.random.normal(k3, (d,), jnp.float32),
        beta=0.1 * jax.random.normal(k4, (d,), jnp.float32),
        mean=0.1 * jax.random.normal(k5, (d,), jnp.float32),
        var=1.0 + 0.1 * jax.random.uniform(k6, (d,), jnp.float32),
        w2=jax.random.normal(k7, (d, n_classes), jnp.float32) / jnp.sqrt(d),
        b2=0.01 * jax.random.normal(k8, (n_classes,), jnp.float32),
    )
    return params


def _prep_conv(p):
    kh, kw, cin, cout = p['w'].shape
    scale = (p['gamma'] * jax.lax.rsqrt(p['var'] + BN_EPS)).astype(jnp.float32)
    bias = (p['beta'] - p['mean'] * scale).astype(jnp.float32)
    w = p['w'].astype(jnp.bfloat16)
    w = w.reshape(cin, cout) if (kh == 1 and kw == 1) else w.reshape(kh * kw, cin, cout)
    return dict(w=w, scale=scale.reshape(1, cout), bias=bias.reshape(1, cout))


def prepare_params(raw):
    prep = {'conv1': _prep_conv(raw['conv1'])}
    for name, _, _, _, _ in RESNET50_CFG:
        blocks = []
        for rb in raw[name]:
            pb = {k: _prep_conv(rb[k]) for k in ('conv1', 'conv2', 'conv3')}
            if 'down' in rb:
                pb['down'] = _prep_conv(rb['down'])
            blocks.append(pb)
        prep[name] = blocks
    h = raw['head']
    s1 = (h['gamma'] * jax.lax.rsqrt(h['var'] + BN_EPS)).astype(jnp.float32)
    b1 = ((h['b1'] - h['mean']) * s1 + h['beta']).astype(jnp.float32)
    d, n = h['w2'].shape
    npad = max(128, _round_up(n, 128))            # lane-dense final output
    w2 = jnp.zeros((d, npad), jnp.bfloat16).at[:, :n].set(h['w2'].astype(jnp.bfloat16))
    b2 = jnp.zeros((1, npad), jnp.float32).at[0, :n].set(h['b2'].astype(jnp.float32))
    prep['head'] = dict(
        w1=h['w1'].astype(jnp.bfloat16),
        scale1=s1.reshape(1, d), bias1=b1.reshape(1, d),
        w2=w2, scale2=jnp.ones((1, npad), jnp.float32), bias2=b2,
    )
    return prep


# ---------------------------------------------------------------------------
# Forward pass (dropout=False branch of RGBResnetClassifier.forward)
# ---------------------------------------------------------------------------
def bottleneck_fwd(x, p, stride):
    B, H, W, C = x.shape
    out = matmul_bn_act(x.reshape(B * H * W, C), p['conv1']['w'],
                        p['conv1']['scale'], p['conv1']['bias'], relu=True)
    cmid = p['conv1']['w'].shape[1]
    out = out.reshape(B, H, W, cmid)
    out = conv_bn_act_spatial(out, p['conv2'], kh=3, kw=3, stride=stride,
                              pad=1, relu=True)
    Bo, Ho, Wo, _ = out.shape
    cout = p['conv3']['w'].shape[1]
    if 'down' in p:
        xd = x if stride == 1 else x[:, ::stride, ::stride, :]
        identity = matmul_bn_act(xd.reshape(Bo * Ho * Wo, C), p['down']['w'],
                                 p['down']['scale'], p['down']['bias'], relu=False)
    else:
        identity = x.reshape(Bo * Ho * Wo, C)
    out = matmul_bn_act(out.reshape(Bo * Ho * Wo, cmid), p['conv3']['w'],
                        p['conv3']['scale'], p['conv3']['bias'], identity,
                        relu=True)
    return out.reshape(Bo, Ho, Wo, cout)


def rgb_resnet_classifier_forward(params, x_nchw):
    x = x_nchw.astype(jnp.float32)                       # x = x.float()
    x = jnp.transpose(x, (0, 2, 3, 1)).astype(jnp.bfloat16)   # NCHW -> NHWC, bf16 activations
    x = conv_bn_act_spatial(x, params['conv1'], kh=7, kw=7, stride=2, pad=3, relu=True)
    x = maxpool_3x3_s2(x)
    for name, _, _, nblocks, lstride in RESNET50_CFG:
        for b in range(nblocks):
            x = bottleneck_fwd(x, params[name][b], lstride if b == 0 else 1)
    feat = global_avg_pool(x)                            # (B, 2048) f32
    h = params['head']
    y = matmul_bn_act(feat.astype(jnp.bfloat16), h['w1'], h['scale1'], h['bias1'],
                      relu=True)                         # Linear + BN1d + ReLU
    logits = matmul_bn_act(y, h['w2'], h['scale2'], h['bias2'], relu=False,
                           out_dtype=jnp.float32)        # final Linear (N padded to 128)
    return logits[:, :NUM_CLASSES]


if __name__ == "__main__":
    key = jax.random.PRNGKey(0)
    pkey, xkey = jax.random.split(key)
    raw = init_params(pkey)
    params = prepare_params(raw)          # fold BN / reshape / bf16-cast / pad: once, at init
    # (B, C, H, W) NCHW input, like the PyTorch module
    x = jax.random.normal(xkey, (2, 3, 32, 32), jnp.float32)
    logits = rgb_resnet_classifier_forward(params, x)
    logits = jax.block_until_ready(logits)
    assert logits.shape == (2, NUM_CLASSES), logits.shape
    assert bool(jnp.all(jnp.isfinite(logits)))
    print("KERNEL_OK")
</pallas_src>

<mosaic_0001>
module attributes {stable_mosaic.version = 11 : i64} {
  func.func @kernel(%arg0: i32, %arg1: i32, %arg2: i32, %arg3: memref<1x1x19x3xbf16, #tpu.memory_space<vmem>>, %arg4: memref<1x1x19x3xbf16, #tpu.memory_space<vmem>>, %arg5: memref<1x1x19x3xbf16, #tpu.memory_space<vmem>>, %arg6: memref<1x1x19x3xbf16, #tpu.memory_space<vmem>>, %arg7: memref<1x1x19x3xbf16, #tpu.memory_space<vmem>>, %arg8: memref<1x1x19x3xbf16, #tpu.memory_space<vmem>>, %arg9: memref<1x1x19x3xbf16, #tpu.memory_space<vmem>>, %arg10: memref<1x1x19x3xbf16, #tpu.memory_space<vmem>>, %arg11: memref<1x1x19x3xbf16, #tpu.memory_space<vmem>>, %arg12: memref<1x1x19x3xbf16, #tpu.memory_space<vmem>>, %arg13: memref<1x1x19x3xbf16, #tpu.memory_space<vmem>>, %arg14: memref<1x1x19x3xbf16, #tpu.memory_space<vmem>>, %arg15: memref<1x1x19x3xbf16, #tpu.memory_space<vmem>>, %arg16: memref<1x1x19x3xbf16, #tpu.memory_space<vmem>>, %arg17: memref<49x3x64xbf16, #tpu.memory_space<vmem>>, %arg18: memref<1x64xf32, #tpu.memory_space<vmem>>, %arg19: memref<1x64xf32, #tpu.memory_space<vmem>>, %arg20: memref<1x1x16x64xbf16, #tpu.memory_space<vmem>>) attributes {dimension_semantics = [#tpu.dimension_semantics<parallel>, #tpu.dimension_semantics<parallel>, #tpu.dimension_semantics<parallel>], iteration_bounds = array<i64: 1, 2, 16>, scalar_prefetch = 0 : i64, scratch_operands = 0 : i64, tpu.core_type = #tpu.core_type<tc>, window_params = [{transform_indices = @transform_0, window_bounds = array<i64: 1, 1, 19, 3>}, {transform_indices = @transform_1, window_bounds = array<i64: 1, 1, 19, 3>}, {transform_indices = @transform_2, window_bounds = array<i64: 1, 1, 19, 3>}, {transform_indices = @transform_3, window_bounds = array<i64: 1, 1, 19, 3>}, {transform_indices = @transform_4, window_bounds = array<i64: 1, 1, 19, 3>}, {transform_indices = @transform_5, window_bounds = array<i64: 1, 1, 19, 3>}, {transform_indices = @transform_6, window_bounds = array<i64: 1, 1, 19, 3>}, {transform_indices = @transform_7, window_bounds = array<i64: 1, 1, 19, 3>}, {transform_indices = @transform_8, window_bounds = array<i64: 1, 1, 19, 3>}, {transform_indices = @transform_9, window_bounds = array<i64: 1, 1, 19, 3>}, {transform_indices = @transform_10, window_bounds = array<i64: 1, 1, 19, 3>}, {transform_indices = @transform_11, window_bounds = array<i64: 1, 1, 19, 3>}, {transform_indices = @transform_12, window_bounds = array<i64: 1, 1, 19, 3>}, {transform_indices = @transform_13, window_bounds = array<i64: 1, 1, 19, 3>}, {transform_indices = @transform_14, window_bounds = array<i64: 49, 3, 64>}, {transform_indices = @transform_15, window_bounds = array<i64: 1, 64>}, {transform_indices = @transform_16, window_bounds = array<i64: 1, 64>}, {transform_indices = @transform_17, window_bounds = array<i64: 1, 1, 16, 64>}]} {
    %c0 = arith.constant 0 : index
    %c0_0 = arith.constant 0 : index
    %c0_1 = arith.constant 0 : index
    %c0_2 = arith.constant 0 : index
    %0 = vector.load %arg3[%c0, %c0_0, %c0_1, %c0_2] : memref<1x1x19x3xbf16, #tpu.memory_space<vmem>>, vector<1x1x19x3xbf16>
    %1 = vector.shape_cast %0 : vector<1x1x19x3xbf16> to vector<19x3xbf16>
    %2 = vector.extract_strided_slice %1 {offsets = [0, 0], sizes = [16, 3], strides = [1, 1]} : vector<19x3xbf16> to vector<16x3xbf16>
    %c0_3 = arith.constant 0 : index
    %c0_4 = arith.constant 0 : index
    %c0_5 = arith.constant 0 : index
    %3 = vector.load %arg17[%c0_3, %c0_4, %c0_5] : memref<49x3x64xbf16, #tpu.memory_space<vmem>>, vector<1x3x64xbf16>
    %4 = vector.shape_cast %3 : vector<1x3x64xbf16> to vector<3x64xbf16>
    %cst = arith.constant dense<0.000000e+00> : vector<16x64xf32>
    %5 = tpu.matmul %2, %4, %cst {dimension_numbers = #tpu.dot_dimension_numbers<[1], [0], [0], [1], [0, 0, 1, 1], [], []>} : vector<16x3xbf16>, vector<3x64xbf16>, vector<16x64xf32> -> vector<16x64xf32>
    %6 = vector.extract_strided_slice %1 {offsets = [1, 0], sizes = [16, 3], strides = [1, 1]} : vector<19x3xbf16> to vector<16x3xbf16>
    %c2 = arith.constant 2 : index
    %c0_6 = arith.constant 0 : index
    %c0_7 = arith.constant 0 : index
    %7 = vector.load %arg17[%c2, %c0_6, %c0_7] : memref<49x3x64xbf16, #tpu.memory_space<vmem>>, vector<1x3x64xbf16>
    %8 = vector.shape_cast %7 : vector<1x3x64xbf16> to vector<3x64xbf16>
    %cst_8 = arith.constant dense<0.000000e+00> : vector<16x64xf32>
    %9 = tpu.matmul %6, %8, %cst_8 {dimension_numbers = #tpu.dot_dimension_numbers<[1], [0], [0], [1], [0, 0, 1, 1], [], []>} : vector<16x3xbf16>, vector<3x64xbf16>, vector<16x64xf32> -> vector<16x64xf32>
    %10 = arith.addf %5, %9 : vector<16x64xf32>
    %11 = vector.extract_strided_slice %1 {offsets = [2, 0], sizes = [16, 3], strides = [1, 1]} : vector<19x3xbf16> to vector<16x3xbf16>
    %c4 = arith.constant 4 : index
    %c0_9 = arith.constant 0 : index
    %c0_10 = arith.constant 0 : index
    %12 = vector.load %arg17[%c4, %c0_9, %c0_10] : memref<49x3x64xbf16, #tpu.memory_space<vmem>>, vector<1x3x64xbf16>
    %13 = vector.shape_cast %12 : vector<1x3x64xbf16> to vector<3x64xbf16>
    %cst_11 = arith.constant dense<0.000000e+00> : vector<16x64xf32>
    %14 = tpu.matmul %11, %13, %cst_11 {dimension_numbers = #tpu.dot_dimension_numbers<[1], [0], [0], [1], [0, 0, 1, 1], [], []>} : vector<16x3xbf16>, vector<3x64xbf16>, vector<16x64xf32> -> vector<16x64xf32>
    %15 = arith.addf %10, %14 : vector<16x64xf32>
    %16 = vector.extract_strided_slice %1 {offsets = [3, 0], sizes = [16, 3], strides = [1, 1]} : vector<19x3xbf16> to vector<16x3xbf16>
    %c6 = arith.constant 6 : index
    %c0_12 = arith.constant 0 : index
    %c0_13 = arith.constant 0 : index
    %17 = vector.load %arg17[%c6, %c0_12, %c0_13] : memref<49x3x64xbf16, #tpu.memory_space<vmem>>, vector<1x3x64xbf16>
    %18 = vector.shape_cast %17 : vector<1x3x64xbf16> to vector<3x64xbf16>
    %cst_14 = arith.constant dense<0.000000e+00> : vector<16x64xf32>
    %19 = tpu.matmul %16, %18, %cst_14 {dimension_numbers = #tpu.dot_dimension_numbers<[1], [0], [0], [1], [0, 0, 1, 1], [], []>} : vector<16x3xbf16>, vector<3x64xbf16>, vector<16x64xf32> -> vector<16x64xf32>
    %20 = arith.addf %15, %19 : vector<16x64xf32>
    %c0_15 = arith.constant 0 : index
    %c0_16 = arith.constant 0 : index
    %c0_17 = arith.constant 0 : index
    %c0_18 = arith.constant 0 : index
    %21 = vector.load %arg4[%c0_15, %c0_16, %c0_17, %c0_18] : memref<1x1x19x3xbf16, #tpu.memory_space<vmem>>, vector<1x1x19x3xbf16>
    %22 = vector.shape_cast %21 : vector<1x1x19x3xbf16> to vector<19x3xbf16>
    %23 = vector.extract_strided_slice %22 {offsets = [0, 0], sizes = [16, 3], strides = [1, 1]} : vector<19x3xbf16> to vector<16x3xbf16>
    %c1 = arith.constant 1 : index
    %c0_19 = arith.constant 0 : index
    %c0_20 = arith.constant 0 : index
    %24 = vector.load %arg17[%c1, %c0_19, %c0_20] : memref<49x3x64xbf16, #tpu.memory_space<vmem>>, vector<1x3x64xbf16>
    %25 = vector.shape_cast %24 : vector<1x3x64xbf16> to vector<3x64xbf16>
    %cst_21 = arith.constant dense<0.000000e+00> : vector<16x64xf32>
    %26 = tpu.matmul %23, %25, %cst_21 {dimension_numbers = #tpu.dot_dimension_numbers<[1], [0], [0], [1], [0, 0, 1, 1], [], []>} : vector<16x3xbf16>, vector<3x64xbf16>, vector<16x64xf32> -> vector<16x64xf32>
    %27 = arith.addf %20, %26 : vector<16x64xf32>
    %28 = vector.extract_strided_slice %22 {offsets = [1, 0], sizes = [16, 3], strides = [1, 1]} : vector<19x3xbf16> to vector<16x3xbf16>
    %c3 = arith.constant 3 : index
    %c0_22 = arith.constant 0 : index
    %c0_23 = arith.constant 0 : index
    %29 = vector.load %arg17[%c3, %c0_22, %c0_23] : memref<49x3x64xbf16, #tpu.memory_space<vmem>>, vector<1x3x64xbf16>
    %30 = vector.shape_cast %29 : vector<1x3x64xbf16> to vector<3x64xbf16>
    %cst_24 = arith.constant dense<0.000000e+00> : vector<16x64xf32>
    %31 = tpu.matmul %28, %30, %cst_24 {dimension_numbers = #tpu.dot_dimension_numbers<[1], [0], [0], [1], [0, 0, 1, 1], [], []>} : vector<16x3xbf16>, vector<3x64xbf16>, vector<16x64xf32> -> vector<16x64xf32>
    %32 = arith.addf %27, %31 : vector<16x64xf32>
    %33 = vector.extract_strided_slice %22 {offsets = [2, 0], sizes = [16, 3], strides = [1, 1]} : vector<19x3xbf16> to vector<16x3xbf16>
    %c5 = arith.constant 5 : index
    %c0_25 = arith.constant 0 : index
    %c0_26 = arith.constant 0 : index
    %34 = vector.load %arg17[%c5, %c0_25, %c0_26] : memref<49x3x64xbf16, #tpu.memory_space<vmem>>, vector<1x3x64xbf16>
    %35 = vector.shape_cast %34 : vector<1x3x64xbf16> to vector<3x64xbf16>
    %cst_27 = arith.constant dense<0.000000e+00> : vector<16x64xf32>
    %36 = tpu.matmul %33, %35, %cst_27 {dimension_numbers = #tpu.dot_dimension_numbers<[1], [0], [0], [1], [0, 0, 1, 1], [], []>} : vector<16x3xbf16>, vector<3x64xbf16>, vector<16x64xf32> -> vector<16x64xf32>
    %37 = arith.addf %32, %36 : vector<16x64xf32>
    %c0_28 = arith.constant 0 : index
    %c0_29 = arith.constant 0 : index
    %c0_30 = arith.constant 0 : index
    %c0_31 = arith.constant 0 : index
    %38 = vector.load %arg5[%c0_28, %c0_29, %c0_30, %c0_31] : memref<1x1x19x3xbf16, #tpu.memory_space<vmem>>, vector<1x1x19x3xbf16>
    %39 = vector.shape_cast %38 : vector<1x1x19x3xbf16> to vector<19x3xbf16>
    %40 = vector.extract_strided_slice %39 {offsets = [0, 0], sizes = [16, 3], strides = [1, 1]} : vector<19x3xbf16> to vector<16x3xbf16>
    %c7 = arith.constant 7 : index
    %c0_32 = arith.constant 0 : index
    %c0_33 = arith.constant 0 : index
    %41 = vector.load %arg17[%c7, %c0_32, %c0_33] : memref<49x3x64xbf16, #tpu.memory_space<vmem>>, vector<1x3x64xbf16>
    %42 = vector.shape_cast %41 : vector<1x3x64xbf16> to vector<3x64xbf16>
    %cst_34 = arith.constant dense<0.000000e+00> : vector<16x64xf32>
    %43 = tpu.matmul %40, %42, %cst_34 {dimension_numbers = #tpu.dot_dimension_numbers<[1], [0], [0], [1], [0, 0, 1, 1], [], []>} : vector<16x3xbf16>, vector<3x64xbf16>, vector<16x64xf32> -> vector<16x64xf32>
    %44 = arith.addf %37, %43 : vector<16x64xf32>
    %45 = vector.extract_strided_slice %39 {offsets = [1, 0], sizes = [16, 3], strides = [1, 1]} : vector<19x3xbf16> to vector<16x3xbf16>
    %c9 = arith.constant 9 : index
    %c0_35 = arith.constant 0 : index
    %c0_36 = arith.constant 0 : index
    %46 = vector.load %arg17[%c9, %c0_35, %c0_36] : memref<49x3x64xbf16, #tpu.memory_space<vmem>>, vector<1x3x64xbf16>
    %47 = vector.shape_cast %46 : vector<1x3x64xbf16> to vector<3x64xbf16>
    %cst_37 = arith.constant dense<0.000000e+00> : vector<16x64xf32>
    %48 = tpu.matmul %45, %47, %cst_37 {dimension_numbers = #tpu.dot_dimension_numbers<[1], [0], [0], [1], [0, 0, 1, 1], [], []>} : vector<16x3xbf16>, vector<3x64xbf16>, vector<16x64xf32> -> vector<16x64xf32>
    %49 = arith.addf %44, %48 : vector<16x64xf32>
    %50 = vector.extract_strided_slice %39 {offsets = [2, 0], sizes = [16, 3], strides = [1, 1]} : vector<19x3xbf16> to vector<16x3xbf16>
    %c11 = arith.constant 11 : index
    %c0_38 = arith.constant 0 : index
    %c0_39 = arith.constant 0 : index
    %51 = vector.load %arg17[%c11, %c0_38, %c0_39] : memref<49x3x64xbf16, #tpu.memory_space<vmem>>, vector<1x3x64xbf16>
    %52 = vector.shape_cast %51 : vector<1x3x64xbf16> to vector<3x64xbf16>
    %cst_40 = arith.constant dense<0.000000e+00> : vector<16x64xf32>
    %53 = tpu.matmul %50, %52, %cst_40 {dimension_numbers = #tpu.dot_dimension_numbers<[1], [0], [0], [1], [0, 0, 1, 1], [], []>} : vector<16x3xbf16>, vector<3x64xbf16>, vector<16x64xf32> -> vector<16x64xf32>
    %54 = arith.addf %49, %53 : vector<16x64xf32>
    %55 = vector.extract_strided_slice %39 {offsets = [3, 0], sizes = [16, 3], strides = [1, 1]} : vector<19x3xbf16> to vector<16x3xbf16>
    %c13 = arith.constant 13 : index
    %c0_41 = arith.constant 0 : index
    %c0_42 = arith.constant 0 : index
    %56 = vector.load %arg17[%c13, %c0_41, %c0_42] : memref<49x3x64xbf16, #tpu.memory_space<vmem>>, vector<1x3x64xbf16>
    %57 = vector.shape_cast %56 : vector<1x3x64xbf16> to vector<3x64xbf16>
    %cst_43 = arith.constant dense<0.000000e+00> : vector<16x64xf32>
    %58 = tpu.matmul %55, %57, %cst_43 {dimension_numbers = #tpu.dot_dimension_numbers<[1], [0], [0], [1], [0, 0, 1, 1], [], []>} : vector<16x3xbf16>, vector<3x64xbf16>, vector<16x64xf32> -> vector<16x64xf32>
    %59 = arith.addf %54, %58 : vector<16x64xf32>
    %c0_44 = arith.constant 0 : index
    %c0_45 = arith.constant 0 : index
    %c0_46 = arith.constant 0 : index
    %c0_47 = arith.constant 0 : index
    %60 = vector.load %arg6[%c0_44, %c0_45, %c0_46, %c0_47] : memref<1x1x19x3xbf16, #tpu.memory_space<vmem>>, vector<1x1x19x3xbf16>
    %61 = vector.shape_cast %60 : vector<1x1x19x3xbf16> to vector<19x3xbf16>
    %62 = vector.extract_strided_slice %61 {offsets = [0, 0], sizes = [16, 3], strides = [1, 1]} : vector<19x3xbf16> to vector<16x3xbf16>
    %c8 = arith.constant 8 : index
    %c0_48 = arith.constant 0 : index
    %c0_49 = arith.constant 0 : index
    %63 = vector.load %arg17[%c8, %c0_48, %c0_49] : memref<49x3x64xbf16, #tpu.memory_space<vmem>>, vector<1x3x64xbf16>
    %64 = vector.shape_cast %63 : vector<1x3x64xbf16> to vector<3x64xbf16>
    %cst_50 = arith.constant dense<0.000000e+00> : vector<16x64xf32>
    %65 = tpu.matmul %62, %64, %cst_50 {dimension_numbers = #tpu.dot_dimension_numbers<[1], [0], [0], [1], [0, 0, 1, 1], [], []>} : vector<16x3xbf16>, vector<3x64xbf16>, vector<16x64xf32> -> vector<16x64xf32>
    %66 = arith.addf %59, %65 : vector<16x64xf32>
    %67 = vector.extract_strided_slice %61 {offsets = [1, 0], sizes = [16, 3], strides = [1, 1]} : vector<19x3xbf16> to vector<16x3xbf16>
    %c10 = arith.constant 10 : index
    %c0_51 = arith.constant 0 : index
    %c0_52 = arith.constant 0 : index
    %68 = vector.load %arg17[%c10, %c0_51, %c0_52] : memref<49x3x64xbf16, #tpu.memory_space<vmem>>, vector<1x3x64xbf16>
    %69 = vector.shape_cast %68 : vector<1x3x64xbf16> to vector<3x64xbf16>
    %cst_53 = arith.constant dense<0.000000e+00> : vector<16x64xf32>
    %70 = tpu.matmul %67, %69, %cst_53 {dimension_numbers = #tpu.dot_dimension_numbers<[1], [0], [0], [1], [0, 0, 1, 1], [], []>} : vector<16x3xbf16>, vector<3x64xbf16>, vector<16x64xf32> -> vector<16x64xf32>
    %71 = arith.addf %66, %70 : vector<16x64xf32>
    %72 = vector.extract_strided_slice %61 {offsets = [2, 0], sizes = [16, 3], strides = [1, 1]} : vector<19x3xbf16> to vector<16x3xbf16>
    %c12 = arith.constant 12 : index
    %c0_54 = arith.constant 0 : index
    %c0_55 = arith.constant 0 : index
    %73 = vector.load %arg17[%c12, %c0_54, %c0_55] : memref<49x3x64xbf16, #tpu.memory_space<vmem>>, vector<1x3x64xbf16>
    %74 = vector.shape_cast %73 : vector<1x3x64xbf16> to vector<3x64xbf16>
    %cst_56 = arith.constant dense<0.000000e+00> : vector<16x64xf32>
    %75 = tpu.matmul %72, %74, %cst_56 {dimension_numbers = #tpu.dot_dimension_numbers<[1], [0], [0], [1], [0, 0, 1, 1], [], []>} : vector<16x3xbf16>, vector<3x64xbf16>, vector<16x64xf32> -> vector<16x64xf32>
    %76 = arith.addf %71, %75 : vector<16x64xf32>
    %c0_57 = arith.constant 0 : index
    %c0_58 = arith.constant 0 : index
    %c0_59 = arith.constant 0 : index
    %c0_60 = arith.constant 0 : index
    %77 = vector.load %arg7[%c0_57, %c0_58, %c0_59, %c0_60] : memref<1x1x19x3xbf16, #tpu.memory_space<vmem>>, vector<1x1x19x3xbf16>
    %78 = vector.shape_cast %77 : vector<1x1x19x3xbf16> to vector<19x3xbf16>
    %79 = vector.extract_strided_slice %78 {offsets = [0, 0], sizes = [16, 3], strides = [1, 1]} : vector<19x3xbf16> to vector<16x3xbf16>
    %c14 = arith.constant 14 : index
    %c0_61 = arith.constant 0 : index
    %c0_62 = arith.constant 0 : index
    %80 = vector.load %arg17[%c14, %c0_61, %c0_62] : memref<49x3x64xbf16, #tpu.memory_space<vmem>>, vector<1x3x64xbf16>
    %81 = vector.shape_cast %80 : vector<1x3x64xbf16> to vector<3x64xbf16>
    %cst_63 = arith.constant dense<0.000000e+00> : vector<16x64xf32>
    %82 = tpu.matmul %79, %81, %cst_63 {dimension_numbers = #tpu.dot_dimension_numbers<[1], [0], [0], [1], [0, 0, 1, 1], [], []>} : vector<16x3xbf16>, vector<3x64xbf16>, vector<16x64xf32> -> vector<16x64xf32>
    %83 = arith.addf %76, %82 : vector<16x64xf32>
    %84 = vector.extract_strided_slice %78 {offsets = [1, 0], sizes = [16, 3], strides = [1, 1]} : vector<19x3xbf16> to vector<16x3xbf16>
    %c16 = arith.constant 16 : index
    %c0_64 = arith.constant 0 : index
    %c0_65 = arith.constant 0 : index
    %85 = vector.load %arg17[%c16, %c0_64, %c0_65] : memref<49x3x64xbf16, #tpu.memory_space<vmem>>, vector<1x3x64xbf16>
    %86 = vector.shape_cast %85 : vector<1x3x64xbf16> to vector<3x64xbf16>
    %cst_66 = arith.constant dense<0.000000e+00> : vector<16x64xf32>
    %87 = tpu.matmul %84, %86, %cst_66 {dimension_numbers = #tpu.dot_dimension_numbers<[1], [0], [0], [1], [0, 0, 1, 1], [], []>} : vector<16x3xbf16>, vector<3x64xbf16>, vector<16x64xf32> -> vector<16x64xf32>
    %88 = arith.addf %83, %87 : vector<16x64xf32>
    %89 = vector.extract_strided_slice %78 {offsets = [2, 0], sizes = [16, 3], strides = [1, 1]} : vector<19x3xbf16> to vector<16x3xbf16>
    %c18 = arith.constant 18 : index
    %c0_67 = arith.constant 0 : index
    %c0_68 = arith.constant 0 : index
    %90 = vector.load %arg17[%c18, %c0_67, %c0_68] : memref<49x3x64xbf16, #tpu.memory_space<vmem>>, vector<1x3x64xbf16>
    %91 = vector.shape_cast %90 : vector<1x3x64xbf16> to vector<3x64xbf16>
    %cst_69 = arith.constant dense<0.000000e+00> : vector<16x64xf32>
    %92 = tpu.matmul %89, %91, %cst_69 {dimension_numbers = #tpu.dot_dimension_numbers<[1], [0], [0], [1], [0, 0, 1, 1], [], []>} : vector<16x3xbf16>, vector<3x64xbf16>, vector<16x64xf32> -> vector<16x64xf32>
    %93 = arith.addf %88, %92 : vector<16x64xf32>
    %94 = vector.extract_strided_slice %78 {offsets = [3, 0], sizes = [16, 3], strides = [1, 1]} : vector<19x3xbf16> to vector<16x3xbf16>
    %c20 = arith.constant 20 : index
    %c0_70 = arith.constant 0 : index
    %c0_71 = arith.constant 0 : index
    %95 = vector.load %arg17[%c20, %c0_70, %c0_71] : memref<49x3x64xbf16, #tpu.memory_space<vmem>>, vector<1x3x64xbf16>
    %96 = vector.shape_cast %95 : vector<1x3x64xbf16> to vector<3x64xbf16>
    %cst_72 = arith.constant dense<0.000000e+00> : vector<16x64xf32>
    %97 = tpu.matmul %94, %96, %cst_72 {dimension_numbers = #tpu.dot_dimension_numbers<[1], [0], [0], [1], [0, 0, 1, 1], [], []>} : vector<16x3xbf16>, vector<3x64xbf16>, vector<16x64xf32> -> vector<16x64xf32>
    %98 = arith.addf %93, %97 : vector<16x64xf32>
    %c0_73 = arith.constant 0 : index
    %c0_74 = arith.constant 0 : index
    %c0_75 = arith.constant 0 : index
    %c0_76 = arith.constant 0 : index
    %99 = vector.load %arg8[%c0_73, %c0_74, %c0_75, %c0_76] : memref<1x1x19x3xbf16, #tpu.memory_space<vmem>>, vector<1x1x19x3xbf16>
    %100 = vector.shape_cast %99 : vector<1x1x19x3xbf16> to vector<19x3xbf16>
    %101 = vector.extract_strided_slice %100 {offsets = [0, 0], sizes = [16, 3], strides = [1, 1]} : vector<19x3xbf16> to vector<16x3xbf16>
    %c15 = arith.constant 15 : index
    %c0_77 = arith.constant 0 : index
    %c0_78 = arith.constant 0 : index
    %102 = vector.load %arg17[%c15, %c0_77, %c0_78] : memref<49x3x64xbf16, #tpu.memory_space<vmem>>, vector<1x3x64xbf16>
    %103 = vector.shape_cast %102 : vector<1x3x64xbf16> to vector<3x64xbf16>
    %cst_79 = arith.constant dense<0.000000e+00> : vector<16x64xf32>
    %104 = tpu.matmul %101, %103, %cst_79 {dimension_numbers = #tpu.dot_dimension_numbers<[1], [0], [0], [1], [0, 0, 1, 1], [], []>} : vector<16x3xbf16>, vector<3x64xbf16>, vector<16x64xf32> -> vector<16x64xf32>
    %105 = arith.addf %98, %104 : vector<16x64xf32>
    %106 = vector.extract_strided_slice %100 {offsets = [1, 0], sizes = [16, 3], strides = [1, 1]} : vector<19x3xbf16> to vector<16x3xbf16>
    %c17 = arith.constant 17 : index
    %c0_80 = arith.constant 0 : index
    %c0_81 = arith.constant 0 : index
    %107 = vector.load %arg17[%c17, %c0_80, %c0_81] : memref<49x3x64xbf16, #tpu.memory_space<vmem>>, vector<1x3x64xbf16>
    %108 = vector.shape_cast %107 : vector<1x3x64xbf16> to vector<3x64xbf16>
    %cst_82 = arith.constant dense<0.000000e+00> : vector<16x64xf32>
    %109 = tpu.matmul %106, %108, %cst_82 {dimension_numbers = #tpu.dot_dimension_numbers<[1], [0], [0], [1], [0, 0, 1, 1], [], []>} : vector<16x3xbf16>, vector<3x64xbf16>, vector<16x64xf32> -> vector<16x64xf32>
    %110 = arith.addf %105, %109 : vector<16x64xf32>
    %111 = vector.extract_strided_slice %100 {offsets = [2, 0], sizes = [16, 3], strides = [1, 1]} : vector<19x3xbf16> to vector<16x3xbf16>
    %c19 = arith.constant 19 : index
    %c0_83 = arith.constant 0 : index
    %c0_84 = arith.constant 0 : index
    %112 = vector.load %arg17[%c19, %c0_83, %c0_84] : memref<49x3x64xbf16, #tpu.memory_space<vmem>>, vector<1x3x64xbf16>
    %113 = vector.shape_cast %112 : vector<1x3x64xbf16> to vector<3x64xbf16>
    %cst_85 = arith.constant dense<0.000000e+00> : vector<16x64xf32>
    %114 = tpu.matmul %111, %113, %cst_85 {dimension_numbers = #tpu.dot_dimension_numbers<[1], [0], [0], [1], [0, 0, 1, 1], [], []>} : vector<16x3xbf16>, vector<3x64xbf16>, vector<16x64xf32> -> vector<16x64xf32>
    %115 = arith.addf %110, %114 : vector<16x64xf32>
    %c0_86 = arith.constant 0 : index
    %c0_87 = arith.constant 0 : index
    %c0_88 = arith.constant 0 : index
    %c0_89 = arith.constant 0 : index
    %116 = vector.load %arg9[%c0_86, %c0_87, %c0_88, %c0_89] : memref<1x1x19x3xbf16, #tpu.memory_space<vmem>>, vector<1x1x19x3xbf16>
    %117 = vector.shape_cast %116 : vector<1x1x19x3xbf16> to vector<19x3xbf16>
    %118 = vector.extract_strided_slice %117 {offsets = [0, 0], sizes = [16, 3], strides = [1, 1]} : vector<19x3xbf16> to vector<16x3xbf16>
    %c21 = arith.constant 21 : index
    %c0_90 = arith.constant 0 : index
    %c0_91 = arith.constant 0 : index
    %119 = vector.load %arg17[%c21, %c0_90, %c0_91] : memref<49x3x64xbf16, #tpu.memory_space<vmem>>, vector<1x3x64xbf16>
    %120 = vector.shape_cast %119 : vector<1x3x64xbf16> to vector<3x64xbf16>
    %cst_92 = arith.constant dense<0.000000e+00> : vector<16x64xf32>
    %121 = tpu.matmul %118, %120, %cst_92 {dimension_numbers = #tpu.dot_dimension_numbers<[1], [0], [0], [1], [0, 0, 1, 1], [], []>} : vector<16x3xbf16>, vector<3x64xbf16>, vector<16x64xf32> -> vector<16x64xf32>
    %122 = arith.addf %115, %121 : vector<16x64xf32>
    %123 = vector.extract_strided_slice %117 {offsets = [1, 0], sizes = [16, 3], strides = [1, 1]} : vector<19x3xbf16> to vector<16x3xbf16>
    %c23 = arith.constant 23 : index
    %c0_93 = arith.constant 0 : index
    %c0_94 = arith.constant 0 : index
    %124 = vector.load %arg17[%c23, %c0_93, %c0_94] : memref<49x3x64xbf16, #tpu.memory_space<vmem>>, vector<1x3x64xbf16>
    %125 = vector.shape_cast %124 : vector<1x3x64xbf16> to vector<3x64xbf16>
    %cst_95 = arith.constant dense<0.000000e+00> : vector<16x64xf32>
    %126 = tpu.matmul %123, %125, %cst_95 {dimension_numbers = #tpu.dot_dimension_numbers<[1], [0], [0], [1], [0, 0, 1, 1], [], []>} : vector<16x3xbf16>, vector<3x64xbf16>, vector<16x64xf32> -> vector<16x64xf32>
    %127 = arith.addf %122, %126 : vector<16x64xf32>
    %128 = vector.extract_strided_slice %117 {offsets = [2, 0], sizes = [16, 3], strides = [1, 1]} : vector<19x3xbf16> to vector<16x3xbf16>
    %c25 = arith.constant 25 : index
    %c0_96 = arith.constant 0 : index
    %c0_97 = arith.constant 0 : index
    %129 = vector.load %arg17[%c25, %c0_96, %c0_97] : memref<49x3x64xbf16, #tpu.memory_space<vmem>>, vector<1x3x64xbf16>
    %130 = vector.shape_cast %129 : vector<1x3x64xbf16> to vector<3x64xbf16>
    %cst_98 = arith.constant dense<0.000000e+00> : vector<16x64xf32>
    %131 = tpu.matmul %128, %130, %cst_98 {dimension_numbers = #tpu.dot_dimension_numbers<[1], [0], [0], [1], [0, 0, 1, 1], [], []>} : vector<16x3xbf16>, vector<3x64xbf16>, vector<16x64xf32> -> vector<16x64xf32>
    %132 = arith.addf %127, %131 : vector<16x64xf32>
    %133 = vector.extract_strided_slice %117 {offsets = [3, 0], sizes = [16, 3], strides = [1, 1]} : vector<19x3xbf16> to vector<16x3xbf16>
    %c27 = arith.constant 27 : index
    %c0_99 = arith.constant 0 : index
    %c0_100 = arith.constant 0 : index
    %134 = vector.load %arg17[%c27, %c0_99, %c0_100] : memref<49x3x64xbf16, #tpu.memory_space<vmem>>, vector<1x3x64xbf16>
    %135 = vector.shape_cast %134 : vector<1x3x64xbf16> to vector<3x64xbf16>
    %cst_101 = arith.constant dense<0.000000e+00> : vector<16x64xf32>
    %136 = tpu.matmul %133, %135, %cst_101 {dimension_numbers = #tpu.dot_dimension_numbers<[1], [0], [0], [1], [0, 0, 1, 1], [], []>} : vector<16x3xbf16>, vector<3x64xbf16>, vector<16x64xf32> -> vector<16x64xf32>
    %137 = arith.addf %132, %136 : vector<16x64xf32>
    %c0_102 = arith.constant 0 : index
    %c0_103 = arith.constant 0 : index
    %c0_104 = arith.constant 0 : index
    %c0_105 = arith.constant 0 : index
    %138 = vector.load %arg10[%c0_102, %c0_103, %c0_104, %c0_105] : memref<1x1x19x3xbf16, #tpu.memory_space<vmem>>, vector<1x1x19x3xbf16>
    %139 = vector.shape_cast %138 : vector<1x1x19x3xbf16> to vector<19x3xbf16>
    %140 = vector.extract_strided_slice %139 {offsets = [0, 0], sizes = [16, 3], strides = [1, 1]} : vector<19x3xbf16> to vector<16x3xbf16>
    %c22 = arith.constant 22 : index
    %c0_106 = arith.constant 0 : index
    %c0_107 = arith.constant 0 : index
    %141 = vector.load %arg17[%c22, %c0_106, %c0_107] : memref<49x3x64xbf16, #tpu.memory_space<vmem>>, vector<1x3x64xbf16>
    %142 = vector.shape_cast %141 : vector<1x3x64xbf16> to vector<3x64xbf16>
    %cst_108 = arith.constant dense<0.000000e+00> : vector<16x64xf32>
    %143 = tpu.matmul %140, %142, %cst_108 {dimension_numbers = #tpu.dot_dimension_numbers<[1], [0], [0], [1], [0, 0, 1, 1], [], []>} : vector<16x3xbf16>, vector<3x64xbf16>, vector<16x64xf32> -> vector<16x64xf32>
    %144 = arith.addf %137, %143 : vector<16x64xf32>
    %145 = vector.extract_strided_slice %139 {offsets = [1, 0], sizes = [16, 3], strides = [1, 1]} : vector<19x3xbf16> to vector<16x3xbf16>
    %c24 = arith.constant 24 : index
    %c0_109 = arith.constant 0 : index
    %c0_110 = arith.constant 0 : index
    %146 = vector.load %arg17[%c24, %c0_109, %c0_110] : memref<49x3x64xbf16, #tpu.memory_space<vmem>>, vector<1x3x64xbf16>
    %147 = vector.shape_cast %146 : vector<1x3x64xbf16> to vector<3x64xbf16>
    %cst_111 = arith.constant dense<0.000000e+00> : vector<16x64xf32>
    %148 = tpu.matmul %145, %147, %cst_111 {dimension_numbers = #tpu.dot_dimension_numbers<[1], [0], [0], [1], [0, 0, 1, 1], [], []>} : vector<16x3xbf16>, vector<3x64xbf16>, vector<16x64xf32> -> vector<16x64xf32>
    %149 = arith.addf %144, %148 : vector<16x64xf32>
    %150 = vector.extract_strided_slice %139 {offsets = [2, 0], sizes = [16, 3], strides = [1, 1]} : vector<19x3xbf16> to vector<16x3xbf16>
    %c26 = arith.constant 26 : index
    %c0_112 = arith.constant 0 : index
    %c0_113 = arith.constant 0 : index
    %151 = vector.load %arg17[%c26, %c0_112, %c0_113] : memref<49x3x64xbf16, #tpu.memory_space<vmem>>, vector<1x3x64xbf16>
    %152 = vector.shape_cast %151 : vector<1x3x64xbf16> to vector<3x64xbf16>
    %cst_114 = arith.constant dense<0.000000e+00> : vector<16x64xf32>
    %153 = tpu.matmul %150, %152, %cst_114 {dimension_numbers = #tpu.dot_dimension_numbers<[1], [0], [0], [1], [0, 0, 1, 1], [], []>} : vector<16x3xbf16>, vector<3x64xbf16>, vector<16x64xf32> -> vector<16x64xf32>
    %154 = arith.addf %149, %153 : vector<16x64xf32>
    %c0_115 = arith.constant 0 : index
    %c0_116 = arith.constant 0 : index
    %c0_117 = arith.constant 0 : index
    %c0_118 = arith.constant 0 : index
    %155 = vector.load %arg11[%c0_115, %c0_116, %c0_117, %c0_118] : memref<1x1x19x3xbf16, #tpu.memory_space<vmem>>, vector<1x1x19x3xbf16>
    %156 = vector.shape_cast %155 : vector<1x1x19x3xbf16> to vector<19x3xbf16>
    %157 = vector.extract_strided_slice %156 {offsets = [0, 0], sizes = [16, 3], strides = [1, 1]} : vector<19x3xbf16> to vector<16x3xbf16>
    %c28 = arith.constant 28 : index
    %c0_119 = arith.constant 0 : index
    %c0_120 = arith.constant 0 : index
    %158 = vector.load %arg17[%c28, %c0_119, %c0_120] : memref<49x3x64xbf16, #tpu.memory_space<vmem>>, vector<1x3x64xbf16>
    %159 = vector.shape_cast %158 : vector<1x3x64xbf16> to vector<3x64xbf16>
    %cst_121 = arith.constant dense<0.000000e+00> : vector<16x64xf32>
    %160 = tpu.matmul %157, %159, %cst_121 {dimension_numbers = #tpu.dot_dimension_numbers<[1], [0], [0], [1], [0, 0, 1, 1], [], []>} : vector<16x3xbf16>, vector<3x64xbf16>, vector<16x64xf32> -> vector<16x64xf32>
    %161 = arith.addf %154, %160 : vector<16x64xf32>
    %162 = vector.extract_strided_slice %156 {offsets = [1, 0], sizes = [16, 3], strides = [1, 1]} : vector<19x3xbf16> to vector<16x3xbf16>
    %c30 = arith.constant 30 : index
    %c0_122 = arith.constant 0 : index
    %c0_123 = arith.constant 0 : index
    %163 = vector.load %arg17[%c30, %c0_122, %c0_123] : memref<49x3x64xbf16, #tpu.memory_space<vmem>>, vector<1x3x64xbf16>
    %164 = vector.shape_cast %163 : vector<1x3x64xbf16> to vector<3x64xbf16>
    %cst_124 = arith.constant dense<0.000000e+00> : vector<16x64xf32>
    %165 = tpu.matmul %162, %164, %cst_124 {dimension_numbers = #tpu.dot_dimension_numbers<[1], [0], [0], [1], [0, 0, 1, 1], [], []>} : vector<16x3xbf16>, vector<3x64xbf16>, vector<16x64xf32> -> vector<16x64xf32>
    %166 = arith.addf %161, %165 : vector<16x64xf32>
    %167 = vector.extract_strided_slice %156 {offsets = [2, 0], sizes = [16, 3], strides = [1, 1]} : vector<19x3xbf16> to vector<16x3xbf16>
    %c32 = arith.constant 32 : index
    %c0_125 = arith.constant 0 : index
    %c0_126 = arith.constant 0 : index
    %168 = vector.load %arg17[%c32, %c0_125, %c0_126] : memref<49x3x64xbf16, #tpu.memory_space<vmem>>, vector<1x3x64xbf16>
    %169 = vector.shape_cast %168 : vector<1x3x64xbf16> to vector<3x64xbf16>
    %cst_127 = arith.constant dense<0.000000e+00> : vector<16x64xf32>
    %170 = tpu.matmul %167, %169, %cst_127 {dimension_numbers = #tpu.dot_dimension_numbers<[1], [0], [0], [1], [0, 0, 1, 1], [], []>} : vector<16x3xbf16>, vector<3x64xbf16>, vector<16x64xf32> -> vector<16x64xf32>
    %171 = arith.addf %166, %170 : vector<16x64xf32>
    %172 = vector.extract_strided_slice %156 {offsets = [3, 0], sizes = [16, 3], strides = [1, 1]} : vector<19x3xbf16> to vector<16x3xbf16>
    %c34 = arith.constant 34 : index
    %c0_128 = arith.constant 0 : index
    %c0_129 = arith.constant 0 : index
    %173 = vector.load %arg17[%c34, %c0_128, %c0_129] : memref<49x3x64xbf16, #tpu.memory_space<vmem>>, vector<1x3x64xbf16>
    %174 = vector.shape_cast %173 : vector<1x3x64xbf16> to vector<3x64xbf16>
    %cst_130 = arith.constant dense<0.000000e+00> : vector<16x64xf32>
    %175 = tpu.matmul %172, %174, %cst_130 {dimension_numbers = #tpu.dot_dimension_numbers<[1], [0], [0], [1], [0, 0, 1, 1], [], []>} : vector<16x3xbf16>, vector<3x64xbf16>, vector<16x64xf32> -> vector<16x64xf32>
    %176 = arith.addf %171, %175 : vector<16x64xf32>
    %c0_131 = arith.constant 0 : index
    %c0_132 = arith.constant 0 : index
    %c0_133 = arith.constant 0 : index
    %c0_134 = arith.constant 0 : index
    %177 = vector.load %arg12[%c0_131, %c0_132, %c0_133, %c0_134] : memref<1x1x19x3xbf16, #tpu.memory_space<vmem>>, vector<1x1x19x3xbf16>
    %178 = vector.shape_cast %177 : vector<1x1x19x3xbf16> to vector<19x3xbf16>
    %179 = vector.extract_strided_slice %178 {offsets = [0, 0], sizes = [16, 3], strides = [1, 1]} : vector<19x3xbf16> to vector<16x3xbf16>
    %c29 = arith.constant 29 : index
    %c0_135 = arith.constant 0 : index
    %c0_136 = arith.constant 0 : index
    %180 = vector.load %arg17[%c29, %c0_135, %c0_136] : memref<49x3x64xbf16, #tpu.memory_space<vmem>>, vector<1x3x64xbf16>
    %181 = vector.shape_cast %180 : vector<1x3x64xbf16> to vector<3x64xbf16>
    %cst_137 = arith.constant dense<0.000000e+00> : vector<16x64xf32>
    %182 = tpu.matmul %179, %181, %cst_137 {dimension_numbers = #tpu.dot_dimension_numbers<[1], [0], [0], [1], [0, 0, 1, 1], [], []>} : vector<16x3xbf16>, vector<3x64xbf16>, vector<16x64xf32> -> vector<16x64xf32>
    %183 = arith.addf %176, %182 : vector<16x64xf32>
    %184 = vector.extract_strided_slice %178 {offsets = [1, 0], sizes = [16, 3], strides = [1, 1]} : vector<19x3xbf16> to vector<16x3xbf16>
    %c31 = arith.constant 31 : index
    %c0_138 = arith.constant 0 : index
    %c0_139 = arith.constant 0 : index
    %185 = vector.load %arg17[%c31, %c0_138, %c0_139] : memref<49x3x64xbf16, #tpu.memory_space<vmem>>, vector<1x3x64xbf16>
    %186 = vector.shape_cast %185 : vector<1x3x64xbf16> to vector<3x64xbf16>
    %cst_140 = arith.constant dense<0.000000e+00> : vector<16x64xf32>
    %187 = tpu.matmul %184, %186, %cst_140 {dimension_numbers = #tpu.dot_dimension_numbers<[1], [0], [0], [1], [0, 0, 1, 1], [], []>} : vector<16x3xbf16>, vector<3x64xbf16>, vector<16x64xf32> -> vector<16x64xf32>
    %188 = arith.addf %183, %187 : vector<16x64xf32>
    %189 = vector.extract_strided_slice %178 {offsets = [2, 0], sizes = [16, 3], strides = [1, 1]} : vector<19x3xbf16> to vector<16x3xbf16>
    %c33 = arith.constant 33 : index
    %c0_141 = arith.constant 0 : index
    %c0_142 = arith.constant 0 : index
    %190 = vector.load %arg17[%c33, %c0_141, %c0_142] : memref<49x3x64xbf16, #tpu.memory_space<vmem>>, vector<1x3x64xbf16>
    %191 = vector.shape_cast %190 : vector<1x3x64xbf16> to vector<3x64xbf16>
    %cst_143 = arith.constant dense<0.000000e+00> : vector<16x64xf32>
    %192 = tpu.matmul %189, %191, %cst_143 {dimension_numbers = #tpu.dot_dimension_numbers<[1], [0], [0], [1], [0, 0, 1, 1], [], []>} : vector<16x3xbf16>, vector<3x64xbf16>, vector<16x64xf32> -> vector<16x64xf32>
    %193 = arith.addf %188, %192 : vector<16x64xf32>
    %c0_144 = arith.constant 0 : index
    %c0_145 = arith.constant 0 : index
    %c0_146 = arith.constant 0 : index
    %c0_147 = arith.constant 0 : index
    %194 = vector.load %arg13[%c0_144, %c0_145, %c0_146, %c0_147] : memref<1x1x19x3xbf16, #tpu.memory_space<vmem>>, vector<1x1x19x3xbf16>
    %195 = vector.shape_cast %194 : vector<1x1x19x3xbf16> to vector<19x3xbf16>
    %196 = vector.extract_strided_slice %195 {offsets = [0, 0], sizes = [16, 3], strides = [1, 1]} : vector<19x3xbf16> to vector<16x3xbf16>
    %c35 = arith.constant 35 : index
    %c0_148 = arith.constant 0 : index
    %c0_149 = arith.constant 0 : index
    %197 = vector.load %arg17[%c35, %c0_148, %c0_149] : memref<49x3x64xbf16, #tpu.memory_space<vmem>>, vector<1x3x64xbf16>
    %198 = vector.shape_cast %197 : vector<1x3x64xbf16> to vector<3x64xbf16>
    %cst_150 = arith.constant dense<0.000000e+00> : vector<16x64xf32>
    %199 = tpu.matmul %196, %198, %cst_150 {dimension_numbers = #tpu.dot_dimension_numbers<[1], [0], [0], [1], [0, 0, 1, 1], [], []>} : vector<16x3xbf16>, vector<3x64xbf16>, vector<16x64xf32> -> vector<16x64xf32>
    %200 = arith.addf %193, %199 : vector<16x64xf32>
    %201 = vector.extract_strided_slice %195 {offsets = [1, 0], sizes = [16, 3], strides = [1, 1]} : vector<19x3xbf16> to vector<16x3xbf16>
    %c37 = arith.constant 37 : index
    %c0_151 = arith.constant 0 : index
    %c0_152 = arith.constant 0 : index
    %202 = vector.load %arg17[%c37, %c0_151, %c0_152] : memref<49x3x64xbf16, #tpu.memory_space<vmem>>, vector<1x3x64xbf16>
    %203 = vector.shape_cast %202 : vector<1x3x64xbf16> to vector<3x64xbf16>
    %cst_153 = arith.constant dense<0.000000e+00> : vector<16x64xf32>
    %204 = tpu.matmul %201, %203, %cst_153 {dimension_numbers = #tpu.dot_dimension_numbers<[1], [0], [0], [1], [0, 0, 1, 1], [], []>} : vector<16x3xbf16>, vector<3x64xbf16>, vector<16x64xf32> -> vector<16x64xf32>
    %205 = arith.addf %200, %204 : vector<16x64xf32>
    %206 = vector.extract_strided_slice %195 {offsets = [2, 0], sizes = [16, 3], strides = [1, 1]} : vector<19x3xbf16> to vector<16x3xbf16>
    %c39 = arith.constant 39 : index
    %c0_154 = arith.constant 0 : index
    %c0_155 = arith.constant 0 : index
    %207 = vector.load %arg17[%c39, %c0_154, %c0_155] : memref<49x3x64xbf16, #tpu.memory_space<vmem>>, vector<1x3x64xbf16>
    %208 = vector.shape_cast %207 : vector<1x3x64xbf16> to vector<3x64xbf16>
    %cst_156 = arith.constant dense<0.000000e+00> : vector<16x64xf32>
    %209 = tpu.matmul %206, %208, %cst_156 {dimension_numbers = #tpu.dot_dimension_numbers<[1], [0], [0], [1], [0, 0, 1, 1], [], []>} : vector<16x3xbf16>, vector<3x64xbf16>, vector<16x64xf32> -> vector<16x64xf32>
    %210 = arith.addf %205, %209 : vector<16x64xf32>
    %211 = vector.extract_strided_slice %195 {offsets = [3, 0], sizes = [16, 3], strides = [1, 1]} : vector<19x3xbf16> to vector<16x3xbf16>
    %c41 = arith.constant 41 : index
    %c0_157 = arith.constant 0 : index
    %c0_158 = arith.constant 0 : index
    %212 = vector.load %arg17[%c41, %c0_157, %c0_158] : memref<49x3x64xbf16, #tpu.memory_space<vmem>>, vector<1x3x64xbf16>
    %213 = vector.shape_cast %212 : vector<1x3x64xbf16> to vector<3x64xbf16>
    %cst_159 = arith.constant dense<0.000000e+00> : vector<16x64xf32>
    %214 = tpu.matmul %211, %213, %cst_159 {dimension_numbers = #tpu.dot_dimension_numbers<[1], [0], [0], [1], [0, 0, 1, 1], [], []>} : vector<16x3xbf16>, vector<3x64xbf16>, vector<16x64xf32> -> vector<16x64xf32>
    %215 = arith.addf %210, %214 : vector<16x64xf32>
    %c0_160 = arith.constant 0 : index
    %c0_161 = arith.constant 0 : index
    %c0_162 = arith.constant 0 : index
    %c0_163 = arith.constant 0 : index
    %216 = vector.load %arg14[%c0_160, %c0_161, %c0_162, %c0_163] : memref<1x1x19x3xbf16, #tpu.memory_space<vmem>>, vector<1x1x19x3xbf16>
    %217 = vector.shape_cast %216 : vector<1x1x19x3xbf16> to vector<19x3xbf16>
    %218 = vector.extract_strided_slice %217 {offsets = [0, 0], sizes = [16, 3], strides = [1, 1]} : vector<19x3xbf16> to vector<16x3xbf16>
    %c36 = arith.constant 36 : index
    %c0_164 = arith.constant 0 : index
    %c0_165 = arith.constant 0 : index
    %219 = vector.load %arg17[%c36, %c0_164, %c0_165] : memref<49x3x64xbf16, #tpu.memory_space<vmem>>, vector<1x3x64xbf16>
    %220 = vector.shape_cast %219 : vector<1x3x64xbf16> to vector<3x64xbf16>
    %cst_166 = arith.constant dense<0.000000e+00> : vector<16x64xf32>
    %221 = tpu.matmul %218, %220, %cst_166 {dimension_numbers = #tpu.dot_dimension_numbers<[1], [0], [0], [1], [0, 0, 1, 1], [], []>} : vector<16x3xbf16>, vector<3x64xbf16>, vector<16x64xf32> -> vector<16x64xf32>
    %222 = arith.addf %215, %221 : vector<16x64xf32>
    %223 = vector.extract_strided_slice %217 {offsets = [1, 0], sizes = [16, 3], strides = [1, 1]} : vector<19x3xbf16> to vector<16x3xbf16>
    %c38 = arith.constant 38 : index
    %c0_167 = arith.constant 0 : index
    %c0_168 = arith.constant 0 : index
    %224 = vector.load %arg17[%c38, %c0_167, %c0_168] : memref<49x3x64xbf16, #tpu.memory_space<vmem>>, vector<1x3x64xbf16>
    %225 = vector.shape_cast %224 : vector<1x3x64xbf16> to vector<3x64xbf16>
    %cst_169 = arith.constant dense<0.000000e+00> : vector<16x64xf32>
    %226 = tpu.matmul %223, %225, %cst_169 {dimension_numbers = #tpu.dot_dimension_numbers<[1], [0], [0], [1], [0, 0, 1, 1], [], []>} : vector<16x3xbf16>, vector<3x64xbf16>, vector<16x64xf32> -> vector<16x64xf32>
    %227 = arith.addf %222, %226 : vector<16x64xf32>
    %228 = vector.extract_strided_slice %217 {offsets = [2, 0], sizes = [16, 3], strides = [1, 1]} : vector<19x3xbf16> to vector<16x3xbf16>
    %c40 = arith.constant 40 : index
    %c0_170 = arith.constant 0 : index
    %c0_171 = arith.constant 0 : index
    %229 = vector.load %arg17[%c40, %c0_170, %c0_171] : memref<49x3x64xbf16, #tpu.memory_space<vmem>>, vector<1x3x64xbf16>
    %230 = vector.shape_cast %229 : vector<1x3x64xbf16> to vector<3x64xbf16>
    %cst_172 = arith.constant dense<0.000000e+00> : vector<16x64xf32>
    %231 = tpu.matmul %228, %230, %cst_172 {dimension_numbers = #tpu.dot_dimension_numbers<[1], [0], [0], [1], [0, 0, 1, 1], [], []>} : vector<16x3xbf16>, vector<3x64xbf16>, vector<16x64xf32> -> vector<16x64xf32>
    %232 = arith.addf %227, %231 : vector<16x64xf32>
    %c0_173 = arith.constant 0 : index
    %c0_174 = arith.constant 0 : index
    %c0_175 = arith.constant 0 : index
    %c0_176 = arith.constant 0 : index
    %233 = vector.load %arg15[%c0_173, %c0_174, %c0_175, %c0_176] : memref<1x1x19x3xbf16, #tpu.memory_space<vmem>>, vector<1x1x19x3xbf16>
    %234 = vector.shape_cast %233 : vector<1x1x19x3xbf16> to vector<19x3xbf16>
    %235 = vector.extract_strided_slice %234 {offsets = [0, 0], sizes = [16, 3], strides = [1, 1]} : vector<19x3xbf16> to vector<16x3xbf16>
    %c42 = arith.constant 42 : index
    %c0_177 = arith.constant 0 : index
    %c0_178 = arith.constant 0 : index
    %236 = vector.load %arg17[%c42, %c0_177, %c0_178] : memref<49x3x64xbf16, #tpu.memory_space<vmem>>, vector<1x3x64xbf16>
    %237 = vector.shape_cast %236 : vector<1x3x64xbf16> to vector<3x64xbf16>
    %cst_179 = arith.constant dense<0.000000e+00> : vector<16x64xf32>
    %238 = tpu.matmul %235, %237, %cst_179 {dimension_numbers = #tpu.dot_dimension_numbers<[1], [0], [0], [1], [0, 0, 1, 1], [], []>} : vector<16x3xbf16>, vector<3x64xbf16>, vector<16x64xf32> -> vector<16x64xf32>
    %239 = arith.addf %232, %238 : vector<16x64xf32>
    %240 = vector.extract_strided_slice %234 {offsets = [1, 0], sizes = [16, 3], strides = [1, 1]} : vector<19x3xbf16> to vector<16x3xbf16>
    %c44 = arith.constant 44 : index
    %c0_180 = arith.constant 0 : index
    %c0_181 = arith.constant 0 : index
    %241 = vector.load %arg17[%c44, %c0_180, %c0_181] : memref<49x3x64xbf16, #tpu.memory_space<vmem>>, vector<1x3x64xbf16>
    %242 = vector.shape_cast %241 : vector<1x3x64xbf16> to vector<3x64xbf16>
    %cst_182 = arith.constant dense<0.000000e+00> : vector<16x64xf32>
    %243 = tpu.matmul %240, %242, %cst_182 {dimension_numbers = #tpu.dot_dimension_numbers<[1], [0], [0], [1], [0, 0, 1, 1], [], []>} : vector<16x3xbf16>, vector<3x64xbf16>, vector<16x64xf32> -> vector<16x64xf32>
    %244 = arith.addf %239, %243 : vector<16x64xf32>
    %245 = vector.extract_strided_slice %234 {offsets = [2, 0], sizes = [16, 3], strides = [1, 1]} : vector<19x3xbf16> to vector<16x3xbf16>
    %c46 = arith.constant 46 : index
    %c0_183 = arith.constant 0 : index
    %c0_184 = arith.constant 0 : index
    %246 = vector.load %arg17[%c46, %c0_183, %c0_184] : memref<49x3x64xbf16, #tpu.memory_space<vmem>>, vector<1x3x64xbf16>
    %247 = vector.shape_cast %246 : vector<1x3x64xbf16> to vector<3x64xbf16>
    %cst_185 = arith.constant dense<0.000000e+00> : vector<16x64xf32>
    %248 = tpu.matmul %245, %247, %cst_185 {dimension_numbers = #tpu.dot_dimension_numbers<[1], [0], [0], [1], [0, 0, 1, 1], [], []>} : vector<16x3xbf16>, vector<3x64xbf16>, vector<16x64xf32> -> vector<16x64xf32>
    %249 = arith.addf %244, %248 : vector<16x64xf32>
    %250 = vector.extract_strided_slice %234 {offsets = [3, 0], sizes = [16, 3], strides = [1, 1]} : vector<19x3xbf16> to vector<16x3xbf16>
    %c48 = arith.constant 48 : index
    %c0_186 = arith.constant 0 : index
    %c0_187 = arith.constant 0 : index
    %251 = vector.load %arg17[%c48, %c0_186, %c0_187] : memref<49x3x64xbf16, #tpu.memory_space<vmem>>, vector<1x3x64xbf16>
    %252 = vector.shape_cast %251 : vector<1x3x64xbf16> to vector<3x64xbf16>
    %cst_188 = arith.constant dense<0.000000e+00> : vector<16x64xf32>
    %253 = tpu.matmul %250, %252, %cst_188 {dimension_numbers = #tpu.dot_dimension_numbers<[1], [0], [0], [1], [0, 0, 1, 1], [], []>} : vector<16x3xbf16>, vector<3x64xbf16>, vector<16x64xf32> -> vector<16x64xf32>
    %254 = arith.addf %249, %253 : vector<16x64xf32>
    %c0_189 = arith.constant 0 : index
    %c0_190 = arith.constant 0 : index
    %c0_191 = arith.constant 0 : index
    %c0_192 = arith.constant 0 : index
    %255 = vector.load %arg16[%c0_189, %c0_190, %c0_191, %c0_192] : memref<1x1x19x3xbf16, #tpu.memory_space<vmem>>, vector<1x1x19x3xbf16>
    %256 = vector.shape_cast %255 : vector<1x1x19x3xbf16> to vector<19x3xbf16>
    %257 = vector.extract_strided_slice %256 {offsets = [0, 0], sizes = [16, 3], strides = [1, 1]} : vector<19x3xbf16> to vector<16x3xbf16>
    %c43 = arith.constant 43 : index
    %c0_193 = arith.constant 0 : index
    %c0_194 = arith.constant 0 : index
    %258 = vector.load %arg17[%c43, %c0_193, %c0_194] : memref<49x3x64xbf16, #tpu.memory_space<vmem>>, vector<1x3x64xbf16>
    %259 = vector.shape_cast %258 : vector<1x3x64xbf16> to vector<3x64xbf16>
    %cst_195 = arith.constant dense<0.000000e+00> : vector<16x64xf32>
    %260 = tpu.matmul %257, %259, %cst_195 {dimension_numbers = #tpu.dot_dimension_numbers<[1], [0], [0], [1], [0, 0, 1, 1], [], []>} : vector<16x3xbf16>, vector<3x64xbf16>, vector<16x64xf32> -> vector<16x64xf32>
    %261 = arith.addf %254, %260 : vector<16x64xf32>
    %262 = vector.extract_strided_slice %256 {offsets = [1, 0], sizes = [16, 3], strides = [1, 1]} : vector<19x3xbf16> to vector<16x3xbf16>
    %c45 = arith.constant 45 : index
    %c0_196 = arith.constant 0 : index
    %c0_197 = arith.constant 0 : index
    %263 = vector.load %arg17[%c45, %c0_196, %c0_197] : memref<49x3x64xbf16, #tpu.memory_space<vmem>>, vector<1x3x64xbf16>
    %264 = vector.shape_cast %263 : vector<1x3x64xbf16> to vector<3x64xbf16>
    %cst_198 = arith.constant dense<0.000000e+00> : vector<16x64xf32>
    %265 = tpu.matmul %262, %264, %cst_198 {dimension_numbers = #tpu.dot_dimension_numbers<[1], [0], [0], [1], [0, 0, 1, 1], [], []>} : vector<16x3xbf16>, vector<3x64xbf16>, vector<16x64xf32> -> vector<16x64xf32>
    %266 = arith.addf %261, %265 : vector<16x64xf32>
    %267 = vector.extract_strided_slice %256 {offsets = [2, 0], sizes = [16, 3], strides = [1, 1]} : vector<19x3xbf16> to vector<16x3xbf16>
    %c47 = arith.constant 47 : index
    %c0_199 = arith.constant 0 : index
    %c0_200 = arith.constant 0 : index
    %268 = vector.load %arg17[%c47, %c0_199, %c0_200] : memref<49x3x64xbf16, #tpu.memory_space<vmem>>, vector<1x3x64xbf16>
    %269 = vector.shape_cast %268 : vector<1x3x64xbf16> to vector<3x64xbf16>
    %cst_201 = arith.constant dense<0.000000e+00> : vector<16x64xf32>
    %270 = tpu.matmul %267, %269, %cst_201 {dimension_numbers = #tpu.dot_dimension_numbers<[1], [0], [0], [1], [0, 0, 1, 1], [], []>} : vector<16x3xbf16>, vector<3x64xbf16>, vector<16x64xf32> -> vector<16x64xf32>
    %271 = arith.addf %266, %270 : vector<16x64xf32>
    %c0_202 = arith.constant 0 : index
    %c0_203 = arith.constant 0 : index
    %272 = vector.load %arg18[%c0_202, %c0_203] : memref<1x64xf32, #tpu.memory_space<vmem>>, vector<1x64xf32>
    %273 = vector.broadcast %272 : vector<1x64xf32> to vector<16x64xf32>
    %274 = arith.mulf %271, %273 : vector<16x64xf32>
    %c0_204 = arith.constant 0 : index
    %c0_205 = arith.constant 0 : index
    %275 = vector.load %arg19[%c0_204, %c0_205] : memref<1x64xf32, #tpu.memory_space<vmem>>, vector<1x64xf32>
    %276 = vector.broadcast %275 : vector<1x64xf32> to vector<16x64xf32>
    %277 = arith.addf %274, %276 : vector<16x64xf32>
    %cst_206 = arith.constant 0.000000e+00 : f32
    %278 = vector.broadcast %cst_206 : f32 to vector<16x64xf32>
    %279 = arith.maximumf %277, %278 : vector<16x64xf32>
    %280 = arith.truncf %279 : vector<16x64xf32> to vector<16x64xbf16>
    %c0_207 = arith.constant 0 : index
    %c0_208 = arith.constant 0 : index
    %c0_209 = arith.constant 0 : index
    %c0_210 = arith.constant 0 : index
    %281 = vector.load %arg20[%c0_207, %c0_208, %c0_209, %c0_210] : memref<1x1x16x64xbf16, #tpu.memory_space<vmem>>, vector<1x1x16x64xbf16>
    %282 = vector.shape_cast %281 : vector<1x1x16x64xbf16> to vector<16x64xbf16>
    %283 = vector.shape_cast %280 : vector<16x64xbf16> to vector<1x1x16x64xbf16>
    tpu.vector_store %arg20[%c0_207, %c0_208, %c0_209, %c0_210], %283 {strides = array<i32>} : memref<1x1x16x64xbf16, #tpu.memory_space<vmem>>, vector<1x1x16x64xbf16>,
    return
  }
  func.func @transform_0(%arg0: i32, %arg1: i32, %arg2: i32) -> (i32, i32, i32, i32) {
    %c2_i32 = arith.constant 2 : i32
    %0 = arith.muli %arg2, %c2_i32 : i32
    %c0_i32 = arith.constant 0 : i32
    %1 = arith.addi %0, %c0_i32 : i32
    %c0_i32_0 = arith.constant 0 : i32
    %c0_i32_1 = arith.constant 0 : i32
    %c0_i32_2 = arith.constant 0 : i32
    return %arg1, %1, %c0_i32_0, %c0_i32_1 : i32, i32, i32, i32
  }
  func.func @transform_1(%arg0: i32, %arg1: i32, %arg2: i32) -> (i32, i32, i32, i32) {
    %c2_i32 = arith.constant 2 : i32
    %0 = arith.muli %arg2, %c2_i32 : i32
    %c0_i32 = arith.constant 0 : i32
    %1 = arith.addi %0, %c0_i32 : i32
    %c0_i32_0 = arith.constant 0 : i32
    %c0_i32_1 = arith.constant 0 : i32
    %c0_i32_2 = arith.constant 0 : i32
    return %arg1, %1, %c0_i32_0, %c0_i32_1 : i32, i32, i32, i32
  }
  func.func @transform_2(%arg0: i32, %arg1: i32, %arg2: i32) -> (i32, i32, i32, i32) {
    %c2_i32 = arith.constant 2 : i32
    %0 = arith.muli %arg2, %c2_i32 : i32
    %c1_i32 = arith.constant 1 : i32
    %1 = arith.addi %0, %c1_i32 : i32
    %c0_i32 = arith.constant 0 : i32
    %c0_i32_0 = arith.constant 0 : i32
    %c0_i32_1 = arith.constant 0 : i32
    return %arg1, %1, %c0_i32, %c0_i32_0 : i32, i32, i32, i32
  }
  func.func @transform_3(%arg0: i32, %arg1: i32, %arg2: i32) -> (i32, i32, i32, i32) {
    %c2_i32 = arith.constant 2 : i32
    %0 = arith.muli %arg2, %c2_i32 : i32
    %c1_i32 = arith.constant 1 : i32
    %1 = arith.addi %0, %c1_i32 : i32
    %c0_i32 = arith.constant 0 : i32
    %c0_i32_0 = arith.constant 0 : i32
    %c0_i32_1 = arith.constant 0 : i32
    return %arg1, %1, %c0_i32, %c0_i32_0 : i32, i32, i32, i32
  }
  func.func @transform_4(%arg0: i32, %arg1: i32, %arg2: i32) -> (i32, i32, i32, i32) {
    %c2_i32 = arith.constant 2 : i32
    %0 = arith.muli %arg2, %c2_i32 : i32
    %c2_i32_0 = arith.constant 2 : i32
    %1 = arith.addi %0, %c2_i32_0 : i32
    %c0_i32 = arith.constant 0 : i32
    %c0_i32_1 = arith.constant 0 : i32
    %c0_i32_2 = arith.constant 0 : i32
    return %arg1, %1, %c0_i32, %c0_i32_1 : i32, i32, i32, i32
  }
  func.func @transform_5(%arg0: i32, %arg1: i32, %arg2: i32) -> (i32, i32, i32, i32) {
    %c2_i32 = arith.constant 2 : i32
    %0 = arith.muli %arg2, %c2_i32 : i32
    %c2_i32_0 = arith.constant 2 : i32
    %1 = arith.addi %0, %c2_i32_0 : i32
    %c0_i32 = arith.constant 0 : i32
    %c0_i32_1 = arith.constant 0 : i32
    %c0_i32_2 = arith.constant 0 : i32
    return %arg1, %1, %c0_i32, %c0_i32_1 : i32, i32, i32, i32
  }
  func.func @transform_6(%arg0: i32, %arg1: i32, %arg2: i32) -> (i32, i32, i32, i32) {
    %c2_i32 = arith.constant 2 : i32
    %0 = arith.muli %arg2, %c2_i32 : i32
    %c3_i32 = arith.constant 3 : i32
    %1 = arith.addi %0, %c3_i32 : i32
    %c0_i32 = arith.constant 0 : i32
    %c0_i32_0 = arith.constant 0 : i32
    %c0_i32_1 = arith.constant 0 : i32
    return %arg1, %1, %c0_i32, %c0_i32_0 : i32, i32, i32, i32
  }
  func.func @transform_7(%arg0: i32, %arg1: i32, %arg2: i32) -> (i32, i32, i32, i32) {
    %c2_i32 = arith.constant 2 : i32
    %0 = arith.muli %arg2, %c2_i32 : i32
    %c3_i32 = arith.constant 3 : i32
    %1 = arith.addi %0, %c3_i32 : i32
    %c0_i32 = arith.constant 0 : i32
    %c0_i32_0 = arith.constant 0 : i32
    %c0_i32_1 = arith.constant 0 : i32
    return %arg1, %1, %c0_i32, %c0_i32_0 : i32, i32, i32, i32
  }
  func.func @transform_8(%arg0: i32, %arg1: i32, %arg2: i32) -> (i32, i32, i32, i32) {
    %c2_i32 = arith.constant 2 : i32
    %0 = arith.muli %arg2, %c2_i32 : i32
    %c4_i32 = arith.constant 4 : i32
    %1 = arith.addi %0, %c4_i32 : i32
    %c0_i32 = arith.constant 0 : i32
    %c0_i32_0 = arith.constant 0 : i32
    %c0_i32_1 = arith.constant 0 : i32
    return %arg1, %1, %c0_i32, %c0_i32_0 : i32, i32, i32, i32
  }
  func.func @transform_9(%arg0: i32, %arg1: i32, %arg2: i32) -> (i32, i32, i32, i32) {
    %c2_i32 = arith.constant 2 : i32
    %0 = arith.muli %arg2, %c2_i32 : i32
    %c4_i32 = arith.constant 4 : i32
    %1 = arith.addi %0, %c4_i32 : i32
    %c0_i32 = arith.constant 0 : i32
    %c0_i32_0 = arith.constant 0 : i32
    %c0_i32_1 = arith.constant 0 : i32
    return %arg1, %1, %c0_i32, %c0_i32_0 : i32, i32, i32, i32
  }
  func.func @transform_10(%arg0: i32, %arg1: i32, %arg2: i32) -> (i32, i32, i32, i32) {
    %c2_i32 = arith.constant 2 : i32
    %0 = arith.muli %arg2, %c2_i32 : i32
    %c5_i32 = arith.constant 5 : i32
    %1 = arith.addi %0, %c5_i32 : i32
    %c0_i32 = arith.constant 0 : i32
    %c0_i32_0 = arith.constant 0 : i32
    %c0_i32_1 = arith.constant 0 : i32
    return %arg1, %1, %c0_i32, %c0_i32_0 : i32, i32, i32, i32
  }
  func.func @transform_11(%arg0: i32, %arg1: i32, %arg2: i32) -> (i32, i32, i32, i32) {
    %c2_i32 = arith.constant 2 : i32
    %0 = arith.muli %arg2, %c2_i32 : i32
    %c5_i32 = arith.constant 5 : i32
    %1 = arith.addi %0, %c5_i32 : i32
    %c0_i32 = arith.constant 0 : i32
    %c0_i32_0 = arith.constant 0 : i32
    %c0_i32_1 = arith.constant 0 : i32
    return %arg1, %1, %c0_i32, %c0_i32_0 : i32, i32, i32, i32
  }
  func.func @transform_12(%arg0: i32, %arg1: i32, %arg2: i32) -> (i32, i32, i32, i32) {
    %c2_i32 = arith.constant 2 : i32
    %0 = arith.muli %arg2, %c2_i32 : i32
    %c6_i32 = arith.constant 6 : i32
    %1 = arith.addi %0, %c6_i32 : i32
    %c0_i32 = arith.constant 0 : i32
    %c0_i32_0 = arith.constant 0 : i32
    %c0_i32_1 = arith.constant 0 : i32
    return %arg1, %1, %c0_i32, %c0_i32_0 : i32, i32, i32, i32
  }
  func.func @transform_13(%arg0: i32, %arg1: i32, %arg2: i32) -> (i32, i32, i32, i32) {
    %c2_i32 = arith.constant 2 : i32
    %0 = arith.muli %arg2, %c2_i32 : i32
    %c6_i32 = arith.constant 6 : i32
    %1 = arith.addi %0, %c6_i32 : i32
    %c0_i32 = arith.constant 0 : i32
    %c0_i32_0 = arith.constant 0 : i32
    %c0_i32_1 = arith.constant 0 : i32
    return %arg1, %1, %c0_i32, %c0_i32_0 : i32, i32, i32, i32
  }
  func.func @transform_14(%arg0: i32, %arg1: i32, %arg2: i32) -> (i32, i32, i32) {
    %c0_i32 = arith.constant 0 : i32
    %c0_i32_0 = arith.constant 0 : i32
    %c0_i32_1 = arith.constant 0 : i32
    return %c0_i32, %c0_i32_0, %arg0 : i32, i32, i32
  }
  func.func @transform_15(%arg0: i32, %arg1: i32, %arg2: i32) -> (i32, i32) {
    %c0_i32 = arith.constant 0 : i32
    %c0_i32_0 = arith.constant 0 : i32
    return %c0_i32, %arg0 : i32, i32
  }
  func.func @transform_16(%arg0: i32, %arg1: i32, %arg2: i32) -> (i32, i32) {
    %c0_i32 = arith.constant 0 : i32
    %c0_i32_0 = arith.constant 0 : i32
    return %c0_i32, %arg0 : i32, i32
  }
  func.func @transform_17(%arg0: i32, %arg1: i32, %arg2: i32) -> (i32, i32, i32, i32) {
    %c0_i32 = arith.constant 0 : i32
    %c0_i32_0 = arith.constant 0 : i32
    return %arg1, %arg2, %c0_i32, %arg0 : i32, i32, i32, i32
  }
}

</mosaic_0001>

<llo_original>
// kernel: conv_bn_act_spatial.1
$region0: #{conv_bn_act_spatial.1}
  #allocation0 [shape = 'u32[]', space=smem, size = 0x4, offset = 0x4, fixed_abs, tag = 'smem constant byte address 0x4 - core index']
  #allocation1 [shape = 'u32[144,128]{1,0:T(1,128)}', space=vmem, size = 0x12000, scoped, tag = 'internal scratch']
  %s0 = inlined_call_operand.vmem [shape: bf16[2,38,19,3], index: 0, kind: input, shape index: {}, may-alias: {0,2,4,6,8,10,12}]
  %s1 = inlined_call_operand.vmem [shape: bf16[2,38,19,3], index: 1, kind: input, shape index: {}, may-alias: {1,3,5,7,9,11,13}]
  %s2 = inlined_call_operand.vmem [shape: bf16[2,38,19,3], index: 2, kind: input, shape index: {}, may-alias: {0,2,4,6,8,10,12}]
  %s3 = inlined_call_operand.vmem [shape: bf16[2,38,19,3], index: 3, kind: input, shape index: {}, may-alias: {1,3,5,7,9,11,13}]
  %s4 = inlined_call_operand.vmem [shape: bf16[2,38,19,3], index: 4, kind: input, shape index: {}, may-alias: {0,2,4,6,8,10,12}]
  %s5 = inlined_call_operand.vmem [shape: bf16[2,38,19,3], index: 5, kind: input, shape index: {}, may-alias: {1,3,5,7,9,11,13}]
  %s6 = inlined_call_operand.vmem [shape: bf16[2,38,19,3], index: 6, kind: input, shape index: {}, may-alias: {0,2,4,6,8,10,12}]
  %s7 = inlined_call_operand.vmem [shape: bf16[2,38,19,3], index: 7, kind: input, shape index: {}, may-alias: {1,3,5,7,9,11,13}]
  %s8 = inlined_call_operand.vmem [shape: bf16[2,38,19,3], index: 8, kind: input, shape index: {}, may-alias: {0,2,4,6,8,10,12}]
  %s9 = inlined_call_operand.vmem [shape: bf16[2,38,19,3], index: 9, kind: input, shape index: {}, may-alias: {1,3,5,7,9,11,13}]
  %s10 = inlined_call_operand.vmem [shape: bf16[2,38,19,3], index: 10, kind: input, shape index: {}, may-alias: {0,2,4,6,8,10,12}]
  %s11 = inlined_call_operand.vmem [shape: bf16[2,38,19,3], index: 11, kind: input, shape index: {}, may-alias: {1,3,5,7,9,11,13}]
  %s12 = inlined_call_operand.vmem [shape: bf16[2,38,19,3], index: 12, kind: input, shape index: {}, may-alias: {0,2,4,6,8,10,12}]
  %s13 = inlined_call_operand.vmem [shape: bf16[2,38,19,3], index: 13, kind: input, shape index: {}, may-alias: {1,3,5,7,9,11,13}]
  %s14 = inlined_call_operand.vmem [shape: bf16[49,3,64], index: 14, kind: input, shape index: {}]
  %s15 = inlined_call_operand.vmem [shape: f32[1,64], index: 15, kind: input, shape index: {}]
  %s16 = inlined_call_operand.vmem [shape: f32[1,64], index: 16, kind: input, shape index: {}]
  %s17 = inlined_call_operand.hbm [shape: bf16[2,16,16,64], index: 17, kind: output, shape index: {}]
  %s18 = sld [smem:[#allocation0]]
  $region101: #{conv_bn_act_spatial.1} parent=0
    _
  %s20 = ssub.s32 1, %s18
  %s21 = scalar_select 0, %s20, %s18
  $region1: #{conv_bn_act_spatial.1} parent=0
    #allocation2 [shape = 'u8[8192]{0}', space=vmem, size = 0x2000, scoped, tag = 'output window, operand 0']
    #allocation3 [shape = 's32[2]{0}', space=sflag, size = 0x8, scoped, tag = 'scoped memory for conv_bn_act_spatial.1']
    %22 = vsyncpa [#allocation3], 0
    %s23 = scalar_lea.sflag [#allocation3], 1
    %24 = vsyncpa %s23, 0
    loop: start=0, step=1, limit=34
    $region2: #{conv_bn_act_spatial.1} parent=1 // loop_pre_header
      _
    $region3: #{conv_bn_act_spatial.1} parent=1 // loop_header
      %s26 = sphi 0, %s30
      %p27 = scmp.ge.s32.totalorder %s26, 34
      %s33 = sphi 0, %s52
      %s34 = sphi 0, %s48
      %s35 = sphi 0, %s44
      %s36 = sphi 0, %s33
      %s37 = sphi 0, %s34
      %s38 = sphi 0, %s35
      %s39 = sphi 0, %s36
      %s40 = sphi 0, %s37
      %s41 = sphi 0, %s38
      %s59 = sphi 0, %s61
      %s62 = sphi 0, %s59
      %s63 = sphi 0, %s62
      %s79 = sphi 0, %s63
      %s89 = sphi 0, %s91
      %s92 = sphi 0, %s89
      %s93 = sphi 0, %s92
      %s109 = sphi 0, %s93
      %s121 = sphi 0, %s123
      %s124 = sphi 0, %s121
      %s125 = sphi 0, %s124
      %s141 = sphi 0, %s125
      %s153 = sphi 0, %s155
      %s156 = sphi 0, %s153
      %s157 = sphi 0, %s156
      %s173 = sphi 0, %s157
      %s185 = sphi 0, %s187
      %s188 = sphi 0, %s185
      %s189 = sphi 0, %s188
      %s205 = sphi 0, %s189
      %s217 = sphi 0, %s219
      %s220 = sphi 0, %s217
      %s221 = sphi 0, %s220
      %s237 = sphi 0, %s221
      %s249 = sphi 0, %s251
      %s252 = sphi 0, %s249
      %s253 = sphi 0, %s252
      %s269 = sphi 0, %s253
      %s281 = sphi 0, %s283
      %s284 = sphi 0, %s281
      %s285 = sphi 0, %s284
      %s301 = sphi 0, %s285
      %s313 = sphi 0, %s315
      %s316 = sphi 0, %s313
      %s317 = sphi 0, %s316
      %s333 = sphi 0, %s317
      %s345 = sphi 0, %s347
      %s348 = sphi 0, %s345
      %s349 = sphi 0, %s348
      %s365 = sphi 0, %s349
      %s377 = sphi 0, %s379
      %s380 = sphi 0, %s377
      %s381 = sphi 0, %s380
      %s397 = sphi 0, %s381
      %s409 = sphi 0, %s411
      %s412 = sphi 0, %s409
      %s413 = sphi 0, %s412
      %s429 = sphi 0, %s413
      %s441 = sphi 0, %s443
      %s444 = sphi 0, %s441
      %s445 = sphi 0, %s444
      %s461 = sphi 0, %s445
      %s473 = sphi 0, %s475
      %s476 = sphi 0, %s473
      %s477 = sphi 0, %s476
      %s493 = sphi 0, %s477
      %s499 = sphi 0, %s501
      %s502 = sphi 0, %s499
      %s503 = sphi 0, %s502
      %s519 = sphi 0, %s503
      %s525 = sphi 0, %s527
      %s528 = sphi 0, %s525
      %s529 = sphi 0, %s528
      %s545 = sphi 0, %s529
      %s551 = sphi 0, %s553
      %s554 = sphi 0, %s551
      %s555 = sphi 0, %s554
      %s571 = sphi 0, %s555
      %s581 = sphi 0, %s583
      %s584 = sphi 0, %s581
      %s585 = sphi 0, %s584
      %s601 = sphi 0, %s585
    $region4: #{conv_bn_act_spatial.1} parent=1 // loop_header_branch
      %29 = sbr.rel (%p27) target = $region8
    $region5: #{conv_bn_act_spatial.1} parent=1 // loop_body
      %s31 = ssub.s32 %s26, 1
      %s32 = ssub.s32 %s26, 2
      %s42 = sadd.s32 1, %s35
      %p43 = scmp.ge.s32.totalorder %s42, 16
      %s44 = scalar_select %p43, 0, %s42
      %s45 = sadd.s32 1, %s34
      %s46 = scalar_select %p43, %s45, %s34
      %p47 = scmp.ge.s32.totalorder %s46, 2
      %s48 = scalar_select %p47, 0, %s46
      %s49 = sadd.s32 1, %s33
      %s50 = scalar_select %p47, %s49, %s33
      %p51 = scmp.ge.s32.totalorder %s50, 1
      %s52 = scalar_select %p51, 0, %s50
      %s53 = smul.u32 %s35, 2
      %s54 = smul.u32 %s44, 2
      %s55 = ssub.s32 %s34, %s48
      %s56 = ssub.s32 %s53, %s54
      %s57 = sor.u32 %s55, %s56
      %p58 = scmp.eq.s32.totalorder %s57, 0
      %s60 = sadd.s32 %s59, 1
      %s61 = scalar_select %p58, %s59, %s60
      %p64 = pneg %p58
      %p65 = scmp.eq.s32.totalorder %s26, 31
      %p66 = por %p64, %p65
      %p67 = scmp.ne.s32.totalorder %s59, %s62
      %p68 = scmp.eq.s32.totalorder %s26, 0
      %p69 = por %p67, %p68
      %p70 = scmp.ne.s32.totalorder %s59, %s62
      %p71 = scmp.eq.s32.totalorder %s31, 31
      %p72 = por %p70, %p71
      %p73 = scmp.ne.s32.totalorder %s62, %s63
      %p74 = scmp.eq.s32.totalorder %s31, 0
      %p75 = por %p73, %p74
      %p76 = scmp.ne.s32.totalorder %s62, %s63
      %p77 = scmp.eq.s32.totalorder %s32, 31
      %p78 = por %p76, %p77
      %p80 = scmp.ne.s32.totalorder %s63, %s79
      %p81 = scmp.eq.s32.totalorder %s32, 0
      %p82 = por %p80, %p81
      %s83 = smul.u32 %s35, 2
      %s84 = smul.u32 %s44, 2
      %s85 = ssub.s32 %s34, %s48
      %s86 = ssub.s32 %s83, %s84
      %s87 = sor.u32 %s85, %s86
      %p88 = scmp.eq.s32.totalorder %s87, 0
      %s90 = sadd.s32 %s89, 1
      %s91 = scalar_select %p88, %s89, %s90
      %p94 = pneg %p88
      %p95 = scmp.eq.s32.totalorder %s26, 31
      %p96 = por %p94, %p95
      %p97 = scmp.ne.s32.totalorder %s89, %s92
      %p98 = scmp.eq.s32.totalorder %s26, 0
      %p99 = por %p97, %p98
      %p100 = scmp.ne.s32.totalorder %s89, %s92
      %p101 = scmp.eq.s32.totalorder %s31, 31
      %p102 = por %p100, %p101
      %p103 = scmp.ne.s32.totalorder %s92, %s93
      %p104 = scmp.eq.s32.totalorder %s31, 0
      %p105 = por %p103, %p104
      %p106 = scmp.ne.s32.totalorder %s92, %s93
      %p107 = scmp.eq.s32.totalorder %s32, 31
      %p108 = por %p106, %p107
      %p110 = scmp.ne.s32.totalorder %s93, %s109
      %p111 = scmp.eq.s32.totalorder %s32, 0
      %p112 = por %p110, %p111
      %s113 = smul.u32 %s35, 2
      %s114 = sadd.s32 %s113, 1
      %s115 = smul.u32 %s44, 2
      %s116 = sadd.s32 %s115, 1
      %s117 = ssub.s32 %s34, %s48
      %s118 = ssub.s32 %s114, %s116
      %s119 = sor.u32 %s117, %s118
      %p120 = scmp.eq.s32.totalorder %s119, 0
      %s122 = sadd.s32 %s121, 1
      %s123 = scalar_select %p120, %s121, %s122
      %p126 = pneg %p120
      %p127 = scmp.eq.s32.totalorder %s26, 31
      %p128 = por %p126, %p127
      %p129 = scmp.ne.s32.totalorder %s121, %s124
      %p130 = scmp.eq.s32.totalorder %s26, 0
      %p131 = por %p129, %p130
      %p132 = scmp.ne.s32.totalorder %s121, %s124
      %p133 = scmp.eq.s32.totalorder %s31, 31
      %p134 = por %p132, %p133
      %p135 = scmp.ne.s32.totalorder %s124, %s125
      %p136 = scmp.eq.s32.totalorder %s31, 0
      %p137 = por %p135, %p136
      %p138 = scmp.ne.s32.totalorder %s124, %s125
      %p139 = scmp.eq.s32.totalorder %s32, 31
      %p140 = por %p138, %p139
      %p142 = scmp.ne.s32.totalorder %s125, %s141
      %p143 = scmp.eq.s32.totalorder %s32, 0
      %p144 = por %p142, %p143
      %s145 = smul.u32 %s35, 2
      %s146 = sadd.s32 %s145, 1
      %s147 = smul.u32 %s44, 2
      %s148 = sadd.s32 %s147, 1
      %s149 = ssub.s32 %s34, %s48
      %s150 = ssub.s32 %s146, %s148
      %s151 = sor.u32 %s149, %s150
      %p152 = scmp.eq.s32.totalorder %s151, 0
      %s154 = sadd.s32 %s153, 1
      %s155 = scalar_select %p152, %s153, %s154
      %p158 = pneg %p152
      %p159 = scmp.eq.s32.totalorder %s26, 31
      %p160 = por %p158, %p159
      %p161 = scmp.ne.s32.totalorder %s153, %s156
      %p162 = scmp.eq.s32.totalorder %s26, 0
      %p163 = por %p161, %p162
      %p164 = scmp.ne.s32.totalorder %s153, %s156
      %p165 = scmp.eq.s32.totalorder %s31, 31
      %p166 = por %p164, %p165
      %p167 = scmp.ne.s32.totalorder %s156, %s157
      %p168 = scmp.eq.s32.totalorder %s31, 0
      %p169 = por %p167, %p168
      %p170 = scmp.ne.s32.totalorder %s156, %s157
      %p171 = scmp.eq.s32.totalorder %s32, 31
      %p172 = por %p170, %p171
      %p174 = scmp.ne.s32.totalorder %s157, %s173
      %p175 = scmp.eq.s32.totalorder %s32, 0
      %p176 = por %p174, %p175
      %s177 = smul.u32 %s35, 2
      %s178 = sadd.s32 %s177, 2
      %s179 = smul.u32 %s44, 2
      %s180 = sadd.s32 %s179, 2
      %s181 = ssub.s32 %s34, %s48
      %s182 = ssub.s32 %s178, %s180
      %s183 = sor.u32 %s181, %s182
      %p184 = scmp.eq.s32.totalorder %s183, 0
      %s186 = sadd.s32 %s185, 1
      %s187 = scalar_select %p184, %s185, %s186
      %p190 = pneg %p184
      %p191 = scmp.eq.s32.totalorder %s26, 31
      %p192 = por %p190, %p191
      %p193 = scmp.ne.s32.totalorder %s185, %s188
      %p194 = scmp.eq.s32.totalorder %s26, 0
      %p195 = por %p193, %p194
      %p196 = scmp.ne.s32.totalorder %s185, %s188
      %p197 = scmp.eq.s32.totalorder %s31, 31
      %p198 = por %p196, %p197
      %p199 = scmp.ne.s32.totalorder %s188, %s189
      %p200 = scmp.eq.s32.totalorder %s31, 0
      %p201 = por %p199, %p200
      %p202 = scmp.ne.s32.totalorder %s188, %s189
      %p203 = scmp.eq.s32.totalorder %s32, 31
      %p204 = por %p202, %p203
      %p206 = scmp.ne.s32.totalorder %s189, %s205
      %p207 = scmp.eq.s32.totalorder %s32, 0
      %p208 = por %p206, %p207
      %s209 = smul.u32 %s35, 2
      %s210 = sadd.s32 %s209, 2
      %s211 = smul.u32 %s44, 2
      %s212 = sadd.s32 %s211, 2
      %s213 = ssub.s32 %s34, %s48
      %s214 = ssub.s32 %s210, %s212
      %s215 = sor.u32 %s213, %s214
      %p216 = scmp.eq.s32.totalorder %s215, 0
      %s218 = sadd.s32 %s217, 1
      %s219 = scalar_select %p216, %s217, %s218
      %p222 = pneg %p216
      %p223 = scmp.eq.s32.totalorder %s26, 31
      %p224 = por %p222, %p223
      %p225 = scmp.ne.s32.totalorder %s217, %s220
      %p226 = scmp.eq.s32.totalorder %s26, 0
      %p227 = por %p225, %p226
      %p228 = scmp.ne.s32.totalorder %s217, %s220
      %p229 = scmp.eq.s32.totalorder %s31, 31
      %p230 = por %p228, %p229
      %p231 = scmp.ne.s32.totalorder %s220, %s221
      %p232 = scmp.eq.s32.totalorder %s31, 0
      %p233 = por %p231, %p232
      %p234 = scmp.ne.s32.totalorder %s220, %s221
      %p235 = scmp.eq.s32.totalorder %s32, 31
      %p236 = por %p234, %p235
      %p238 = scmp.ne.s32.totalorder %s221, %s237
      %p239 = scmp.eq.s32.totalorder %s32, 0
      %p240 = por %p238, %p239
      %s241 = smul.u32 %s35, 2
      %s242 = sadd.s32 %s241, 3
      %s243 = smul.u32 %s44, 2
      %s244 = sadd.s32 %s243, 3
      %s245 = ssub.s32 %s34, %s48
      %s246 = ssub.s32 %s242, %s244
      %s247 = sor.u32 %s245, %s246
      %p248 = scmp.eq.s32.totalorder %s247, 0
      %s250 = sadd.s32 %s249, 1
      %s251 = scalar_select %p248, %s249, %s250
      %p254 = pneg %p248
      %p255 = scmp.eq.s32.totalorder %s26, 31
      %p256 = por %p254, %p255
      %p257 = scmp.ne.s32.totalorder %s249, %s252
      %p258 = scmp.eq.s32.totalorder %s26, 0
      %p259 = por %p257, %p258
      %p260 = scmp.ne.s32.totalorder %s249, %s252
      %p261 = scmp.eq.s32.totalorder %s31, 31
      %p262 = por %p260, %p261
      %p263 = scmp.ne.s32.totalorder %s252, %s253
      %p264 = scmp.eq.s32.totalorder %s31, 0
      %p265 = por %p263, %p264
      %p266 = scmp.ne.s32.totalorder %s252, %s253
      %p267 = scmp.eq.s32.totalorder %s32, 31
      %p268 = por %p266, %p267
      %p270 = scmp.ne.s32.totalorder %s253, %s269
      %p271 = scmp.eq.s32.totalorder %s32, 0
      %p272 = por %p270, %p271
      %s273 = smul.u32 %s35, 2
      %s274 = sadd.s32 %s273, 3
      %s275 = smul.u32 %s44, 2
      %s276 = sadd.s32 %s275, 3
      %s277 = ssub.s32 %s34, %s48
      %s278 = ssub.s32 %s274, %s276
      %s279 = sor.u32 %s277, %s278
      %p280 = scmp.eq.s32.totalorder %s279, 0
      %s282 = sadd.s32 %s281, 1
      %s283 = scalar_select %p280, %s281, %s282
      %p286 = pneg %p280
      %p287 = scmp.eq.s32.totalorder %s26, 31
      %p288 = por %p286, %p287
      %p289 = scmp.ne.s32.totalorder %s281, %s284
      %p290 = scmp.eq.s32.totalorder %s26, 0
      %p291 = por %p289, %p290
      %p292 = scmp.ne.s32.totalorder %s281, %s284
      %p293 = scmp.eq.s32.totalorder %s31, 31
      %p294 = por %p292, %p293
      %p295 = scmp.ne.s32.totalorder %s284, %s285
      %p296 = scmp.eq.s32.totalorder %s31, 0
      %p297 = por %p295, %p296
      %p298 = scmp.ne.s32.totalorder %s284, %s285
      %p299 = scmp.eq.s32.totalorder %s32, 31
      %p300 = por %p298, %p299
      %p302 = scmp.ne.s32.totalorder %s285, %s301
      %p303 = scmp.eq.s32.totalorder %s32, 0
      %p304 = por %p302, %p303
      %s305 = smul.u32 %s35, 2
      %s306 = sadd.s32 %s305, 4
      %s307 = smul.u32 %s44, 2
      %s308 = sadd.s32 %s307, 4
      %s309 = ssub.s32 %s34, %s48
      %s310 = ssub.s32 %s306, %s308
      %s311 = sor.u32 %s309, %s310
      %p312 = scmp.eq.s32.totalorder %s311, 0
      %s314 = sadd.s32 %s313, 1
      %s315 = scalar_select %p312, %s313, %s314
      %p318 = pneg %p312
      %p319 = scmp.eq.s32.totalorder %s26, 31
      %p320 = por %p318, %p319
      %p321 = scmp.ne.s32.totalorder %s313, %s316
      %p322 = scmp.eq.s32.totalorder %s26, 0
      %p323 = por %p321, %p322
      %p324 = scmp.ne.s32.totalorder %s313, %s316
      %p325 = scmp.eq.s32.totalorder %s31, 31
      %p326 = por %p324, %p325
      %p327 = scmp.ne.s32.totalorder %s316, %s317
      %p328 = scmp.eq.s32.totalorder %s31, 0
      %p329 = por %p327, %p328
      %p330 = scmp.ne.s32.totalorder %s316, %s317
      %p331 = scmp.eq.s32.totalorder %s32, 31
      %p332 = por %p330, %p331
      %p334 = scmp.ne.s32.totalorder %s317, %s333
      %p335 = scmp.eq.s32.totalorder %s32, 0
      %p336 = por %p334, %p335
      %s337 = smul.u32 %s35, 2
      %s338 = sadd.s32 %s337, 4
      %s339 = smul.u32 %s44, 2
      %s340 = sadd.s32 %s339, 4
      %s341 = ssub.s32 %s34, %s48
      %s342 = ssub.s32 %s338, %s340
      %s343 = sor.u32 %s341, %s342
      %p344 = scmp.eq.s32.totalorder %s343, 0
      %s346 = sadd.s32 %s345, 1
      %s347 = scalar_select %p344, %s345, %s346
      %p350 = pneg %p344
      %p351 = scmp.eq.s32.totalorder %s26, 31
      %p352 = por %p350, %p351
      %p353 = scmp.ne.s32.totalorder %s345, %s348
      %p354 = scmp.eq.s32.totalorder %s26, 0
      %p355 = por %p353, %p354
      %p356 = scmp.ne.s32.totalorder %s345, %s348
      %p357 = scmp.eq.s32.totalorder %s31, 31
      %p358 = por %p356, %p357
      %p359 = scmp.ne.s32.totalorder %s348, %s349
      %p360 = scmp.eq.s32.totalorder %s31, 0
      %p361 = por %p359, %p360
      %p362 = scmp.ne.s32.totalorder %s348, %s349
      %p363 = scmp.eq.s32.totalorder %s32, 31
      %p364 = por %p362, %p363
      %p366 = scmp.ne.s32.totalorder %s349, %s365
      %p367 = scmp.eq.s32.totalorder %s32, 0
      %p368 = por %p366, %p367
      %s369 = smul.u32 %s35, 2
      %s370 = sadd.s32 %s369, 5
      %s371 = smul.u32 %s44, 2
      %s372 = sadd.s32 %s371, 5
      %s373 = ssub.s32 %s34, %s48
      %s374 = ssub.s32 %s370, %s372
      %s375 = sor.u32 %s373, %s374
      %p376 = scmp.eq.s32.totalorder %s375, 0
      %s378 = sadd.s32 %s377, 1
      %s379 = scalar_select %p376, %s377, %s378
      %p382 = pneg %p376
      %p383 = scmp.eq.s32.totalorder %s26, 31
      %p384 = por %p382, %p383
      %p385 = scmp.ne.s32.totalorder %s377, %s380
      %p386 = scmp.eq.s32.totalorder %s26, 0
      %p387 = por %p385, %p386
      %p388 = scmp.ne.s32.totalorder %s377, %s380
      %p389 = scmp.eq.s32.totalorder %s31, 31
      %p390 = por %p388, %p389
      %p391 = scmp.ne.s32.totalorder %s380, %s381
      %p392 = scmp.eq.s32.totalorder %s31, 0
      %p393 = por %p391, %p392
      %p394 = scmp.ne.s32.totalorder %s380, %s381
      %p395 = scmp.eq.s32.totalorder %s32, 31
      %p396 = por %p394, %p395
      %p398 = scmp.ne.s32.totalorder %s381, %s397
      %p399 = scmp.eq.s32.totalorder %s32, 0
      %p400 = por %p398, %p399
      %s401 = smul.u32 %s35, 2
      %s402 = sadd.s32 %s401, 5
      %s403 = smul.u32 %s44, 2
      %s404 = sadd.s32 %s403, 5
      %s405 = ssub.s32 %s34, %s48
      %s406 = ssub.s32 %s402, %s404
      %s407 = sor.u32 %s405, %s406
      %p408 = scmp.eq.s32.totalorder %s407, 0
      %s410 = sadd.s32 %s409, 1
      %s411 = scalar_select %p408, %s409, %s410
      %p414 = pneg %p408
      %p415 = scmp.eq.s32.totalorder %s26, 31
      %p416 = por %p414, %p415
      %p417 = scmp.ne.s32.totalorder %s409, %s412
      %p418 = scmp.eq.s32.totalorder %s26, 0
      %p419 = por %p417, %p418
      %p420 = scmp.ne.s32.totalorder %s409, %s412
      %p421 = scmp.eq.s32.totalorder %s31, 31
      %p422 = por %p420, %p421
      %p423 = scmp.ne.s32.totalorder %s412, %s413
      %p424 = scmp.eq.s32.totalorder %s31, 0
      %p425 = por %p423, %p424
      %p426 = scmp.ne.s32.totalorder %s412, %s413
      %p427 = scmp.eq.s32.totalorder %s32, 31
      %p428 = por %p426, %p427
      %p430 = scmp.ne.s32.totalorder %s413, %s429
      %p431 = scmp.eq.s32.totalorder %s32, 0
      %p432 = por %p430, %p431
      %s433 = smul.u32 %s35, 2
      %s434 = sadd.s32 %s433, 6
      %s435 = smul.u32 %s44, 2
      %s436 = sadd.s32 %s435, 6
      %s437 = ssub.s32 %s34, %s48
      %s438 = ssub.s32 %s434, %s436
      %s439 = sor.u32 %s437, %s438
      %p440 = scmp.eq.s32.totalorder %s439, 0
      %s442 = sadd.s32 %s441, 1
      %s443 = scalar_select %p440, %s441, %s442
      %p446 = pneg %p440
      %p447 = scmp.eq.s32.totalorder %s26, 31
      %p448 = por %p446, %p447
      %p449 = scmp.ne.s32.totalorder %s441, %s444
      %p450 = scmp.eq.s32.totalorder %s26, 0
      %p451 = por %p449, %p450
      %p452 = scmp.ne.s32.totalorder %s441, %s444
      %p453 = scmp.eq.s32.totalorder %s31, 31
      %p454 = por %p452, %p453
      %p455 = scmp.ne.s32.totalorder %s444, %s445
      %p456 = scmp.eq.s32.totalorder %s31, 0
      %p457 = por %p455, %p456
      %p458 = scmp.ne.s32.totalorder %s444, %s445
      %p459 = scmp.eq.s32.totalorder %s32, 31
      %p460 = por %p458, %p459
      %p462 = scmp.ne.s32.totalorder %s445, %s461
      %p463 = scmp.eq.s32.totalorder %s32, 0
      %p464 = por %p462, %p463
      %s465 = smul.u32 %s35, 2
      %s466 = sadd.s32 %s465, 6
      %s467 = smul.u32 %s44, 2
      %s468 = sadd.s32 %s467, 6
      %s469 = ssub.s32 %s34, %s48
      %s470 = ssub.s32 %s466, %s468
      %s471 = sor.u32 %s469, %s470
      %p472 = scmp.eq.s32.totalorder %s471, 0
      %s474 = sadd.s32 %s473, 1
      %s475 = scalar_select %p472, %s473, %s474
      %p478 = pneg %p472
      %p479 = scmp.eq.s32.totalorder %s26, 31
      %p480 = por %p478, %p479
      %p481 = scmp.ne.s32.totalorder %s473, %s476
      %p482 = scmp.eq.s32.totalorder %s26, 0
      %p483 = por %p481, %p482
      %p484 = scmp.ne.s32.totalorder %s473, %s476
      %p485 = scmp.eq.s32.totalorder %s31, 31
      %p486 = por %p484, %p485
      %p487 = scmp.ne.s32.totalorder %s476, %s477
      %p488 = scmp.eq.s32.totalorder %s31, 0
      %p489 = por %p487, %p488
      %p490 = scmp.ne.s32.totalorder %s476, %s477
      %p491 = scmp.eq.s32.totalorder %s32, 31
      %p492 = por %p490, %p491
      %p494 = scmp.ne.s32.totalorder %s477, %s493
      %p495 = scmp.eq.s32.totalorder %s32, 0
      %p496 = por %p494, %p495
      %s497 = ssub.s32 %s33, %s52
      %p498 = scmp.eq.s32.totalorder %s497, 0
      %s500 = sadd.s32 %s499, 1
      %s501 = scalar_select %p498, %s499, %s500
      %p504 = pneg %p498
      %p505 = scmp.eq.s32.totalorder %s26, 31
      %p506 = por %p504, %p505
      %p507 = scmp.ne.s32.totalorder %s499, %s502
      %p508 = scmp.eq.s32.totalorder %s26, 0
      %p509 = por %p507, %p508
      %p510 = scmp.ne.s32.totalorder %s499, %s502
      %p511 = scmp.eq.s32.totalorder %s31, 31
      %p512 = por %p510, %p511
      %p513 = scmp.ne.s32.totalorder %s502, %s503
      %p514 = scmp.eq.s32.totalorder %s31, 0
      %p515 = por %p513, %p514
      %p516 = scmp.ne.s32.totalorder %s502, %s503
      %p517 = scmp.eq.s32.totalorder %s32, 31
      %p518 = por %p516, %p517
      %p520 = scmp.ne.s32.totalorder %s503, %s519
      %p521 = scmp.eq.s32.totalorder %s32, 0
      %p522 = por %p520, %p521
      %s523 = ssub.s32 %s33, %s52
      %p524 = scmp.eq.s32.totalorder %s523, 0
      %s526 = sadd.s32 %s525, 1
      %s527 = scalar_select %p524, %s525, %s526
      %p530 = pneg %p524
      %p531 = scmp.eq.s32.totalorder %s26, 31
      %p532 = por %p530, %p531
      %p533 = scmp.ne.s32.totalorder %s525, %s528
      %p534 = scmp.eq.s32.totalorder %s26, 0
      %p535 = por %p533, %p534
      %p536 = scmp.ne.s32.totalorder %s525, %s528
      %p537 = scmp.eq.s32.totalorder %s31, 31
      %p538 = por %p536, %p537
      %p539 = scmp.ne.s32.totalorder %s528, %s529
      %p540 = scmp.eq.s32.totalorder %s31, 0
      %p541 = por %p539, %p540
      %p542 = scmp.ne.s32.totalorder %s528, %s529
      %p543 = scmp.eq.s32.totalorder %s32, 31
      %p544 = por %p542, %p543
      %p546 = scmp.ne.s32.totalorder %s529, %s545
      %p547 = scmp.eq.s32.totalorder %s32, 0
      %p548 = por %p546, %p547
      %s549 = ssub.s32 %s33, %s52
      %p550 = scmp.eq.s32.totalorder %s549, 0
      %s552 = sadd.s32 %s551, 1
      %s553 = scalar_select %p550, %s551, %s552
      %p556 = pneg %p550
      %p557 = scmp.eq.s32.totalorder %s26, 31
      %p558 = por %p556, %p557
      %p559 = scmp.ne.s32.totalorder %s551, %s554
      %p560 = scmp.eq.s32.totalorder %s26, 0
      %p561 = por %p559, %p560
      %p562 = scmp.ne.s32.totalorder %s551, %s554
      %p563 = scmp.eq.s32.totalorder %s31, 31
      %p564 = por %p562, %p563
      %p565 = scmp.ne.s32.totalorder %s554, %s555
      %p566 = scmp.eq.s32.totalorder %s31, 0
      %p567 = por %p565, %p566
      %p568 = scmp.ne.s32.totalorder %s554, %s555
      %p569 = scmp.eq.s32.totalorder %s32, 31
      %p570 = por %p568, %p569
      %p572 = scmp.ne.s32.totalorder %s555, %s571
      %p573 = scmp.eq.s32.totalorder %s32, 0
      %p574 = por %p572, %p573
      %s575 = ssub.s32 %s34, %s48
      %s576 = ssub.s32 %s35, %s44
      %s577 = sor.u32 %s575, %s576
      %s578 = ssub.s32 %s33, %s52
      %s579 = sor.u32 %s577, %s578
      %p580 = scmp.eq.s32.totalorder %s579, 0
      %s582 = sadd.s32 %s581, 1
      %s583 = scalar_select %p580, %s581, %s582
      %p586 = pneg %p580
      %p587 = scmp.eq.s32.totalorder %s26, 31
      %p588 = por %p586, %p587
      %p589 = scmp.ne.s32.totalorder %s581, %s584
      %p590 = scmp.eq.s32.totalorder %s26, 0
      %p591 = por %p589, %p590
      %p592 = scmp.ne.s32.totalorder %s581, %s584
      %p593 = scmp.eq.s32.totalorder %s31, 31
      %p594 = por %p592, %p593
      %p595 = scmp.ne.s32.totalorder %s584, %s585
      %p596 = scmp.eq.s32.totalorder %s31, 0
      %p597 = por %p595, %p596
      %p598 = scmp.ne.s32.totalorder %s584, %s585
      %p599 = scmp.eq.s32.totalorder %s32, 31
      %p600 = por %p598, %p599
      %p602 = scmp.ne.s32.totalorder %s585, %s601
      %p603 = scmp.eq.s32.totalorder %s32, 0
      %p604 = por %p602, %p603
      %p605 = scmp.le.s32.totalorder 1, %s26
      %p606 = scmp.lt.s32.totalorder %s26, 33
      %p607 = pnand %p605, %p606
      %p608 = pneg %p607
      // Predicated region
      $region9: #{conv_bn_act_spatial.1} parent=5 // pred_check
        _
      $region10: #{conv_bn_act_spatial.1} parent=5 // pred_check_branch
        %610 = sbr.rel (%p607) target = $region12
      $region11: #{conv_bn_act_spatial.1} parent=5 // pred_region
        %s611 = ssub.s32 %s26, 1
        // Predicated region
        $region13: #{conv_bn_act_spatial.1} parent=11 // pred_check
          %p612 = pneg %p515
        $region14: #{conv_bn_act_spatial.1} parent=11 // pred_check_branch
          %614 = sbr.rel (%p612) target = $region16
        $region15: #{conv_bn_act_spatial.1} parent=11 // pred_region
          %p615 = scmp.lt.s32.totalorder %s36, 0
          %s616 = scalar_select %p615, %s36, 0
          %s617 = smul.addr %s616, 2
          %s618 = scalar_lea.vmem %s14, %s617
        $region16: #{conv_bn_act_spatial.1} parent=11 // pred_fallthru
          _
        // Predicated region
        $region17: #{conv_bn_act_spatial.1} parent=11 // pred_check
          %p619 = pneg %p541
        $region18: #{conv_bn_act_spatial.1} parent=11 // pred_check_branch
          %621 = sbr.rel (%p619) target = $region20
        $region19: #{conv_bn_act_spatial.1} parent=11 // pred_region
          %p622 = scmp.lt.s32.totalorder %s36, 0
          %s623 = scalar_select %p622, %s36, 0
          %s624 = scalar_lea.vmem %s15, %s623
        $region20: #{conv_bn_act_spatial.1} parent=11 // pred_fallthru
          _
        // Predicated region
        $region21: #{conv_bn_act_spatial.1} parent=11 // pred_check
          %p625 = pneg %p567
        $region22: #{conv_bn_act_spatial.1} parent=11 // pred_check_branch
          %627 = sbr.rel (%p625) target = $region24
        $region23: #{conv_bn_act_spatial.1} parent=11 // pred_region
          %p628 = scmp.lt.s32.totalorder %s36, 0
          %s629 = scalar_select %p628, %s36, 0
          %s630 = scalar_lea.vmem %s16, %s629
        $region24: #{conv_bn_act_spatial.1} parent=11 // pred_fallthru
          _
      $region12: #{conv_bn_act_spatial.1} parent=5 // pred_fallthru
        _
      %p631 = scmp.lt.s32.totalorder %s26, 32
      // Predicated region
      $region25: #{conv_bn_act_spatial.1} parent=5 // pred_check
        %p632 = pneg %p631
      $region26: #{conv_bn_act_spatial.1} parent=5 // pred_check_branch
        %634 = sbr.rel (%p632) target = $region28
      $region27: #{conv_bn_act_spatial.1} parent=5 // pred_region
        // Predicated region
        $region29: #{conv_bn_act_spatial.1} parent=27 // pred_check
          %p635 = pneg %p69
        $region30: #{conv_bn_act_spatial.1} parent=27 // pred_check_branch
          %637 = sbr.rel (%p635) target = $region32
        $region31: #{conv_bn_act_spatial.1} parent=27 // pred_region
          %s638 = smul.u32 %s35, 2
          %p639 = scmp.lt.s32.totalorder %s34, 1
          %s640 = scalar_select %p639, %s34, 1
          %p641 = scmp.lt.s32.totalorder %s638, 37
          %s642 = scalar_select %p641, %s638, 37
          %s643 = smul.addr %s642, 3
          %s644 = smul.addr %s640, 114
          %s645 = sadd.s32 %s643, %s644
          %s646 = smul.addr %s645, 4
          %s647 = scalar_lea.vmem %s0, %s646
          %s648 = smul.u32 %s35, 2
        $region32: #{conv_bn_act_spatial.1} parent=27 // pred_fallthru
          _
        // Predicated region
        $region33: #{conv_bn_act_spatial.1} parent=27 // pred_check
          %p649 = pneg %p99
        $region34: #{conv_bn_act_spatial.1} parent=27 // pred_check_branch
          %651 = sbr.rel (%p649) target = $region36
        $region35: #{conv_bn_act_spatial.1} parent=27 // pred_region
          %s652 = smul.u32 %s35, 2
          %p653 = scmp.lt.s32.totalorder %s34, 1
          %s654 = scalar_select %p653, %s34, 1
          %p655 = scmp.lt.s32.totalorder %s652, 37
          %s656 = scalar_select %p655, %s652, 37
          %s657 = smul.addr %s656, 3
          %s658 = smul.addr %s654, 114
          %s659 = sadd.s32 %s657, %s658
          %s660 = smul.addr %s659, 4
          %s661 = scalar_lea.vmem %s1, %s660
          %s662 = smul.u32 %s35, 2
        $region36: #{conv_bn_act_spatial.1} parent=27 // pred_fallthru
          _
        // Predicated region
        $region37: #{conv_bn_act_spatial.1} parent=27 // pred_check
          %p663 = pneg %p131
        $region38: #{conv_bn_act_spatial.1} parent=27 // pred_check_branch
          %665 = sbr.rel (%p663) target = $region40
        $region39: #{conv_bn_act_spatial.1} parent=27 // pred_region
          %s666 = smul.u32 %s35, 2
          %s667 = sadd.s32 %s666, 1
          %p668 = scmp.lt.s32.totalorder %s34, 1
          %s669 = scalar_select %p668, %s34, 1
          %p670 = scmp.lt.s32.totalorder %s667, 37
          %s671 = scalar_select %p670, %s667, 37
          %s672 = smul.addr %s671, 3
          %s673 = smul.addr %s669, 114
          %s674 = sadd.s32 %s672, %s673
          %s675 = smul.addr %s674, 4
          %s676 = scalar_lea.vmem %s2, %s675
          %s677 = smul.u32 %s35, 2
          %s678 = sadd.s32 %s677, 1
        $region40: #{conv_bn_act_spatial.1} parent=27 // pred_fallthru
          _
        // Predicated region
        $region41: #{conv_bn_act_spatial.1} parent=27 // pred_check
          %p679 = pneg %p163
        $region42: #{conv_bn_act_spatial.1} parent=27 // pred_check_branch
          %681 = sbr.rel (%p679) target = $region44
        $region43: #{conv_bn_act_spatial.1} parent=27 // pred_region
          %s682 = smul.u32 %s35, 2
          %s683 = sadd.s32 %s682, 1
          %p684 = scmp.lt.s32.totalorder %s34, 1
          %s685 = scalar_select %p684, %s34, 1
          %p686 = scmp.lt.s32.totalorder %s683, 37
          %s687 = scalar_select %p686, %s683, 37
          %s688 = smul.addr %s687, 3
          %s689 = smul.addr %s685, 114
          %s690 = sadd.s32 %s688, %s689
          %s691 = smul.addr %s690, 4
          %s692 = scalar_lea.vmem %s3, %s691
          %s693 = smul.u32 %s35, 2
          %s694 = sadd.s32 %s693, 1
        $region44: #{conv_bn_act_spatial.1} parent=27 // pred_fallthru
          _
        // Predicated region
        $region45: #{conv_bn_act_spatial.1} parent=27 // pred_check
          %p695 = pneg %p195
        $region46: #{conv_bn_act_spatial.1} parent=27 // pred_check_branch
          %697 = sbr.rel (%p695) target = $region48
        $region47: #{conv_bn_act_spatial.1} parent=27 // pred_region
          %s698 = smul.u32 %s35, 2
          %s699 = sadd.s32 %s698, 2
          %p700 = scmp.lt.s32.totalorder %s34, 1
          %s701 = scalar_select %p700, %s34, 1
          %p702 = scmp.lt.s32.totalorder %s699, 37
          %s703 = scalar_select %p702, %s699, 37
          %s704 = smul.addr %s703, 3
          %s705 = smul.addr %s701, 114
          %s706 = sadd.s32 %s704, %s705
          %s707 = smul.addr %s706, 4
          %s708 = scalar_lea.vmem %s4, %s707
          %s709 = smul.u32 %s35, 2
          %s710 = sadd.s32 %s709, 2
        $region48: #{conv_bn_act_spatial.1} parent=27 // pred_fallthru
          _
        // Predicated region
        $region49: #{conv_bn_act_spatial.1} parent=27 // pred_check
          %p711 = pneg %p227
        $region50: #{conv_bn_act_spatial.1} parent=27 // pred_check_branch
          %713 = sbr.rel (%p711) target = $region52
        $region51: #{conv_bn_act_spatial.1} parent=27 // pred_region
          %s714 = smul.u32 %s35, 2
          %s715 = sadd.s32 %s714, 2
          %p716 = scmp.lt.s32.totalorder %s34, 1
          %s717 = scalar_select %p716, %s34, 1
          %p718 = scmp.lt.s32.totalorder %s715, 37
          %s719 = scalar_select %p718, %s715, 37
          %s720 = smul.addr %s719, 3
          %s721 = smul.addr %s717, 114
          %s722 = sadd.s32 %s720, %s721
          %s723 = smul.addr %s722, 4
          %s724 = scalar_lea.vmem %s5, %s723
          %s725 = smul.u32 %s35, 2
          %s726 = sadd.s32 %s725, 2
        $region52: #{conv_bn_act_spatial.1} parent=27 // pred_fallthru
          _
        // Predicated region
        $region53: #{conv_bn_act_spatial.1} parent=27 // pred_check
          %p727 = pneg %p259
        $region54: #{conv_bn_act_spatial.1} parent=27 // pred_check_branch
          %729 = sbr.rel (%p727) target = $region56
        $region55: #{conv_bn_act_spatial.1} parent=27 // pred_region
          %s730 = smul.u32 %s35, 2
          %s731 = sadd.s32 %s730, 3
          %p732 = scmp.lt.s32.totalorder %s34, 1
          %s733 = scalar_select %p732, %s34, 1
          %p734 = scmp.lt.s32.totalorder %s731, 37
          %s735 = scalar_select %p734, %s731, 37
          %s736 = smul.addr %s735, 3
          %s737 = smul.addr %s733, 114
          %s738 = sadd.s32 %s736, %s737
          %s739 = smul.addr %s738, 4
          %s740 = scalar_lea.vmem %s6, %s739
          %s741 = smul.u32 %s35, 2
          %s742 = sadd.s32 %s741, 3
        $region56: #{conv_bn_act_spatial.1} parent=27 // pred_fallthru
          _
        // Predicated region
        $region57: #{conv_bn_act_spatial.1} parent=27 // pred_check
          %p743 = pneg %p291
        $region58: #{conv_bn_act_spatial.1} parent=27 // pred_check_branch
          %745 = sbr.rel (%p743) target = $region60
        $region59: #{conv_bn_act_spatial.1} parent=27 // pred_region
          %s746 = smul.u32 %s35, 2
          %s747 = sadd.s32 %s746, 3
          %p748 = scmp.lt.s32.totalorder %s34, 1
          %s749 = scalar_select %p748, %s34, 1
          %p750 = scmp.lt.s32.totalorder %s747, 37
          %s751 = scalar_select %p750, %s747, 37
          %s752 = smul.addr %s751, 3
          %s753 = smul.addr %s749, 114
          %s754 = sadd.s32 %s752, %s753
          %s755 = smul.addr %s754, 4
          %s756 = scalar_lea.vmem %s7, %s755
          %s757 = smul.u32 %s35, 2
          %s758 = sadd.s32 %s757, 3
        $region60: #{conv_bn_act_spatial.1} parent=27 // pred_fallthru
          _
        // Predicated region
        $region61: #{conv_bn_act_spatial.1} parent=27 // pred_check
          %p759 = pneg %p323
        $region62: #{conv_bn_act_spatial.1} parent=27 // pred_check_branch
          %761 = sbr.rel (%p759) target = $region64
        $region63: #{conv_bn_act_spatial.1} parent=27 // pred_region
          %s762 = smul.u32 %s35, 2
          %s763 = sadd.s32 %s762, 4
          %p764 = scmp.lt.s32.totalorder %s34, 1
          %s765 = scalar_select %p764, %s34, 1
          %p766 = scmp.lt.s32.totalorder %s763, 37
          %s767 = scalar_select %p766, %s763, 37
          %s768 = smul.addr %s767, 3
          %s769 = smul.addr %s765, 114
          %s770 = sadd.s32 %s768, %s769
          %s771 = smul.addr %s770, 4
          %s772 = scalar_lea.vmem %s8, %s771
          %s773 = smul.u32 %s35, 2
          %s774 = sadd.s32 %s773, 4
        $region64: #{conv_bn_act_spatial.1} parent=27 // pred_fallthru
          _
        // Predicated region
        $region65: #{conv_bn_act_spatial.1} parent=27 // pred_check
          %p775 = pneg %p355
        $region66: #{conv_bn_act_spatial.1} parent=27 // pred_check_branch
          %777 = sbr.rel (%p775) target = $region68
        $region67: #{conv_bn_act_spatial.1} parent=27 // pred_region
          %s778 = smul.u32 %s35, 2
          %s779 = sadd.s32 %s778, 4
          %p780 = scmp.lt.s32.totalorder %s34, 1
          %s781 = scalar_select %p780, %s34, 1
          %p782 = scmp.lt.s32.totalorder %s779, 37
          %s783 = scalar_select %p782, %s779, 37
          %s784 = smul.addr %s783, 3
          %s785 = smul.addr %s781, 114
          %s786 = sadd.s32 %s784, %s785
          %s787 = smul.addr %s786, 4
          %s788 = scalar_lea.vmem %s9, %s787
          %s789 = smul.u32 %s35, 2
          %s790 = sadd.s32 %s789, 4
        $region68: #{conv_bn_act_spatial.1} parent=27 // pred_fallthru
          _
        // Predicated region
        $region69: #{conv_bn_act_spatial.1} parent=27 // pred_check
          %p791 = pneg %p387
        $region70: #{conv_bn_act_spatial.1} parent=27 // pred_check_branch
          %793 = sbr.rel (%p791) target = $region72
        $region71: #{conv_bn_act_spatial.1} parent=27 // pred_region
          %s794 = smul.u32 %s35, 2
          %s795 = sadd.s32 %s794, 5
          %p796 = scmp.lt.s32.totalorder %s34, 1
          %s797 = scalar_select %p796, %s34, 1
          %p798 = scmp.lt.s32.totalorder %s795, 37
          %s799 = scalar_select %p798, %s795, 37
          %s800 = smul.addr %s799, 3
          %s801 = smul.addr %s797, 114
          %s802 = sadd.s32 %s800, %s801
          %s803 = smul.addr %s802, 4
          %s804 = scalar_lea.vmem %s10, %s803
          %s805 = smul.u32 %s35, 2
          %s806 = sadd.s32 %s805, 5
        $region72: #{conv_bn_act_spatial.1} parent=27 // pred_fallthru
          _
        // Predicated region
        $region73: #{conv_bn_act_spatial.1} parent=27 // pred_check
          %p807 = pneg %p419
        $region74: #{conv_bn_act_spatial.1} parent=27 // pred_check_branch
          %809 = sbr.rel (%p807) target = $region76
        $region75: #{conv_bn_act_spatial.1} parent=27 // pred_region
          %s810 = smul.u32 %s35, 2
          %s811 = sadd.s32 %s810, 5
          %p812 = scmp.lt.s32.totalorder %s34, 1
          %s813 = scalar_select %p812, %s34, 1
          %p814 = scmp.lt.s32.totalorder %s811, 37
          %s815 = scalar_select %p814, %s811, 37
          %s816 = smul.addr %s815, 3
          %s817 = smul.addr %s813, 114
          %s818 = sadd.s32 %s816, %s817
          %s819 = smul.addr %s818, 4
          %s820 = scalar_lea.vmem %s11, %s819
          %s821 = smul.u32 %s35, 2
          %s822 = sadd.s32 %s821, 5
        $region76: #{conv_bn_act_spatial.1} parent=27 // pred_fallthru
          _
        // Predicated region
        $region77: #{conv_bn_act_spatial.1} parent=27 // pred_check
          %p823 = pneg %p451
        $region78: #{conv_bn_act_spatial.1} parent=27 // pred_check_branch
          %825 = sbr.rel (%p823) target = $region80
        $region79: #{conv_bn_act_spatial.1} parent=27 // pred_region
          %s826 = smul.u32 %s35, 2
          %s827 = sadd.s32 %s826, 6
          %p828 = scmp.lt.s32.totalorder %s34, 1
          %s829 = scalar_select %p828, %s34, 1
          %p830 = scmp.lt.s32.totalorder %s827, 37
          %s831 = scalar_select %p830, %s827, 37
          %s832 = smul.addr %s831, 3
          %s833 = smul.addr %s829, 114
          %s834 = sadd.s32 %s832, %s833
          %s835 = smul.addr %s834, 4
          %s836 = scalar_lea.vmem %s12, %s835
          %s837 = smul.u32 %s35, 2
          %s838 = sadd.s32 %s837, 6
        $region80: #{conv_bn_act_spatial.1} parent=27 // pred_fallthru
          _
        // Predicated region
        $region81: #{conv_bn_act_spatial.1} parent=27 // pred_check
          %p839 = pneg %p483
        $region82: #{conv_bn_act_spatial.1} parent=27 // pred_check_branch
          %841 = sbr.rel (%p839) target = $region84
        $region83: #{conv_bn_act_spatial.1} parent=27 // pred_region
          %s842 = smul.u32 %s35, 2
          %s843 = sadd.s32 %s842, 6
          %p844 = scmp.lt.s32.totalorder %s34, 1
          %s845 = scalar_select %p844, %s34, 1
          %p846 = scmp.lt.s32.totalorder %s843, 37
          %s847 = scalar_select %p846, %s843, 37
          %s848 = smul.addr %s847, 3
          %s849 = smul.addr %s845, 114
          %s850 = sadd.s32 %s848, %s849
          %s851 = smul.addr %s850, 4
          %s852 = scalar_lea.vmem %s13, %s851
          %s853 = smul.u32 %s35, 2
          %s854 = sadd.s32 %s853, 6
        $region84: #{conv_bn_act_spatial.1} parent=27 // pred_fallthru
          _
      $region28: #{conv_bn_act_spatial.1} parent=5 // pred_fallthru
        _
      %p855 = scmp.le.s32.totalorder 1, %s26
      %p856 = scmp.lt.s32.totalorder %s26, 33
      %p857 = pnand %p855, %p856
      %p858 = pneg %p857
      // Predicated region
      $region85: #{conv_bn_act_spatial.1} parent=5 // pred_check
        _
      $region86: #{conv_bn_act_spatial.1} parent=5 // pred_check_branch
        %860 = sbr.rel (%p857) target = $region88
      $region87: #{conv_bn_act_spatial.1} parent=5 // pred_region
        %s861 = ssub.s32 %s26, 1
        %s862 = smul.u32 %s38, 2
        %p863 = scmp.lt.s32.totalorder %s37, 1
        %s864 = scalar_select %p863, %s37, 1
        %p865 = scmp.lt.s32.totalorder %s862, 37
        %s866 = scalar_select %p865, %s862, 37
        %s867 = smul.addr %s866, 3
        %s868 = smul.addr %s864, 114
        %s869 = sadd.s32 %s867, %s868
        %s870 = smul.addr %s869, 4
        %s871 = scalar_lea.vmem %s0, %s870
        %p872 = pneg %p75
        %p873 = pneg %p72
        %s874 = smul.u32 %s38, 2
        %p875 = scmp.lt.s32.totalorder %s37, 1
        %s876 = scalar_select %p875, %s37, 1
        %p877 = scmp.lt.s32.totalorder %s874, 37
        %s878 = scalar_select %p877, %s874, 37
        %s879 = smul.addr %s878, 3
        %s880 = smul.addr %s876, 114
        %s881 = sadd.s32 %s879, %s880
        %s882 = smul.addr %s881, 4
        %s883 = scalar_lea.vmem %s1, %s882
        %p884 = pneg %p105
        %p885 = pneg %p102
        %s886 = smul.u32 %s38, 2
        %s887 = sadd.s32 %s886, 1
        %p888 = scmp.lt.s32.totalorder %s37, 1
        %s889 = scalar_select %p888, %s37, 1
        %p890 = scmp.lt.s32.totalorder %s887, 37
        %s891 = scalar_select %p890, %s887, 37
        %s892 = smul.addr %s891, 3
        %s893 = smul.addr %s889, 114
        %s894 = sadd.s32 %s892, %s893
        %s895 = smul.addr %s894, 4
        %s896 = scalar_lea.vmem %s2, %s895
        %p897 = pneg %p137
        %p898 = pneg %p134
        %s899 = smul.u32 %s38, 2
        %s900 = sadd.s32 %s899, 1
        %p901 = scmp.lt.s32.totalorder %s37, 1
        %s902 = scalar_select %p901, %s37, 1
        %p903 = scmp.lt.s32.totalorder %s900, 37
        %s904 = scalar_select %p903, %s900, 37
        %s905 = smul.addr %s904, 3
        %s906 = smul.addr %s902, 114
        %s907 = sadd.s32 %s905, %s906
        %s908 = smul.addr %s907, 4
        %s909 = scalar_lea.vmem %s3, %s908
        %p910 = pneg %p169
        %p911 = pneg %p166
        %s912 = smul.u32 %s38, 2
        %s913 = sadd.s32 %s912, 2
        %p914 = scmp.lt.s32.totalorder %s37, 1
        %s915 = scalar_select %p914, %s37, 1
        %p916 = scmp.lt.s32.totalorder %s913, 37
        %s917 = scalar_select %p916, %s913, 37
        %s918 = smul.addr %s917, 3
        %s919 = smul.addr %s915, 114
        %s920 = sadd.s32 %s918, %s919
        %s921 = smul.addr %s920, 4
        %s922 = scalar_lea.vmem %s4, %s921
        %p923 = pneg %p201
        %p924 = pneg %p198
        %s925 = smul.u32 %s38, 2
        %s926 = sadd.s32 %s925, 2
        %p927 = scmp.lt.s32.totalorder %s37, 1
        %s928 = scalar_select %p927, %s37, 1
        %p929 = scmp.lt.s32.totalorder %s926, 37
        %s930 = scalar_select %p929, %s926, 37
        %s931 = smul.addr %s930, 3
        %s932 = smul.addr %s928, 114
        %s933 = sadd.s32 %s931, %s932
        %s934 = smul.addr %s933, 4
        %s935 = scalar_lea.vmem %s5, %s934
        %p936 = pneg %p233
        %p937 = pneg %p230
        %s938 = smul.u32 %s38, 2
        %s939 = sadd.s32 %s938, 3
        %p940 = scmp.lt.s32.totalorder %s37, 1
        %s941 = scalar_select %p940, %s37, 1
        %p942 = scmp.lt.s32.totalorder %s939, 37
        %s943 = scalar_select %p942, %s939, 37
        %s944 = smul.addr %s943, 3
        %s945 = smul.addr %s941, 114
        %s946 = sadd.s32 %s944, %s945
        %s947 = smul.addr %s946, 4
        %s948 = scalar_lea.vmem %s6, %s947
        %p949 = pneg %p265
        %p950 = pneg %p262
        %s951 = smul.u32 %s38, 2
        %s952 = sadd.s32 %s951, 3
        %p953 = scmp.lt.s32.totalorder %s37, 1
        %s954 = scalar_select %p953, %s37, 1
        %p955 = scmp.lt.s32.totalorder %s952, 37
        %s956 = scalar_select %p955, %s952, 37
        %s957 = smul.addr %s956, 3
        %s958 = smul.addr %s954, 114
        %s959 = sadd.s32 %s957, %s958
        %s960 = smul.addr %s959, 4
        %s961 = scalar_lea.vmem %s7, %s960
        %p962 = pneg %p297
        %p963 = pneg %p294
        %s964 = smul.u32 %s38, 2
        %s965 = sadd.s32 %s964, 4
        %p966 = scmp.lt.s32.totalorder %s37, 1
        %s967 = scalar_select %p966, %s37, 1
        %p968 = scmp.lt.s32.totalorder %s965, 37
        %s969 = scalar_select %p968, %s965, 37
        %s970 = smul.addr %s969, 3
        %s971 = smul.addr %s967, 114
        %s972 = sadd.s32 %s970, %s971
        %s973 = smul.addr %s972, 4
        %s974 = scalar_lea.vmem %s8, %s973
        %p975 = pneg %p329
        %p976 = pneg %p326
        %s977 = smul.u32 %s38, 2
        %s978 = sadd.s32 %s977, 4
        %p979 = scmp.lt.s32.totalorder %s37, 1
        %s980 = scalar_select %p979, %s37, 1
        %p981 = scmp.lt.s32.totalorder %s978, 37
        %s982 = scalar_select %p981, %s978, 37
        %s983 = smul.addr %s982, 3
        %s984 = smul.addr %s980, 114
        %s985 = sadd.s32 %s983, %s984
        %s986 = smul.addr %s985, 4
        %s987 = scalar_lea.vmem %s9, %s986
        %p988 = pneg %p361
        %p989 = pneg %p358
        %s990 = smul.u32 %s38, 2
        %s991 = sadd.s32 %s990, 5
        %p992 = scmp.lt.s32.totalorder %s37, 1
        %s993 = scalar_select %p992, %s37, 1
        %p994 = scmp.lt.s32.totalorder %s991, 37
        %s995 = scalar_select %p994, %s991, 37
        %s996 = smul.addr %s995, 3
        %s997 = smul.addr %s993, 114
        %s998 = sadd.s32 %s996, %s997
        %s999 = smul.addr %s998, 4
        %s1000 = scalar_lea.vmem %s10, %s999
        %p1001 = pneg %p393
        %p1002 = pneg %p390
        %s1003 = smul.u32 %s38, 2
        %s1004 = sadd.s32 %s1003, 5
        %p1005 = scmp.lt.s32.totalorder %s37, 1
        %s1006 = scalar_select %p1005, %s37, 1
        %p1007 = scmp.lt.s32.totalorder %s1004, 37
        %s1008 = scalar_select %p1007, %s1004, 37
        %s1009 = smul.addr %s1008, 3
        %s1010 = smul.addr %s1006, 114
        %s1011 = sadd.s32 %s1009, %s1010
        %s1012 = smul.addr %s1011, 4
        %s1013 = scalar_lea.vmem %s11, %s1012
        %p1014 = pneg %p425
        %p1015 = pneg %p422
        %s1016 = smul.u32 %s38, 2
        %s1017 = sadd.s32 %s1016, 6
        %p1018 = scmp.lt.s32.totalorder %s37, 1
        %s1019 = scalar_select %p1018, %s37, 1
        %p1020 = scmp.lt.s32.totalorder %s1017, 37
        %s1021 = scalar_select %p1020, %s1017, 37
        %s1022 = smul.addr %s1021, 3
        %s1023 = smul.addr %s1019, 114
        %s1024 = sadd.s32 %s1022, %s1023
        %s1025 = smul.addr %s1024, 4
        %s1026 = scalar_lea.vmem %s12, %s1025
        %p1027 = pneg %p457
        %p1028 = pneg %p454
        %s1029 = smul.u32 %s38, 2
        %s1030 = sadd.s32 %s1029, 6
        %p1031 = scmp.lt.s32.totalorder %s37, 1
        %s1032 = scalar_select %p1031, %s37, 1
        %p1033 = scmp.lt.s32.totalorder %s1030, 37
        %s1034 = scalar_select %p1033, %s1030, 37
        %s1035 = smul.addr %s1034, 3
        %s1036 = smul.addr %s1032, 114
        %s1037 = sadd.s32 %s1035, %s1036
        %s1038 = smul.addr %s1037, 4
        %s1039 = scalar_lea.vmem %s13, %s1038
        %p1040 = pneg %p489
        %p1041 = pneg %p486
        %p1042 = scmp.lt.s32.totalorder %s36, 0
        %s1043 = scalar_select %p1042, %s36, 0
        %s1044 = smul.addr %s1043, 2
        %s1045 = scalar_lea.vmem %s14, %s1044
        %p1046 = pneg %p515
        %p1047 = pneg %p512
        %p1048 = scmp.lt.s32.totalorder %s36, 0
        %s1049 = scalar_select %p1048, %s36, 0
        %s1050 = scalar_lea.vmem %s15, %s1049
        %p1051 = pneg %p541
        %p1052 = pneg %p538
        %p1053 = scmp.lt.s32.totalorder %s36, 0
        %s1054 = scalar_select %p1053, %s36, 0
        %s1055 = scalar_lea.vmem %s16, %s1054
        %p1056 = pneg %p567
        %p1057 = pneg %p564
        %p1058 = pneg %p597
        %p1059 = pneg %p594
        %s1060 = sand.u32 %s584, 1
        %s1061 = scalar_lea.sflag [#allocation3], %s1060
        %s1062 = sand.u32 %s584, 1
        %s1063 = smul.addr %s1062, 8
        %s1064 = scalar_lea.vmem [#allocation2], %s1063
        %s1065 = smul.u32 %s38, 2
        %p1066 = scmp.lt.s32.totalorder %s37, 1
        %s1067 = scalar_select %p1066, %s37, 1
        %p1068 = scmp.lt.s32.totalorder %s1065, 37
        %s1069 = scalar_select %p1068, %s1065, 37
        %s1070 = smul.addr %s1069, 3
        %s1071 = smul.addr %s1067, 114
        %s1072 = sadd.s32 %s1070, %s1071
        %s1073 = smul.addr %s1072, 4
        %s1074 = scalar_lea.vmem %s0, %s1073
        %s1075 = smul.u32 %s38, 2
        %s1076 = smul.u32 %s38, 2
        %p1077 = scmp.lt.s32.totalorder %s37, 1
        %s1078 = scalar_select %p1077, %s37, 1
        %p1079 = scmp.lt.s32.totalorder %s1076, 37
        %s1080 = scalar_select %p1079, %s1076, 37
        %s1081 = smul.addr %s1080, 3
        %s1082 = smul.addr %s1078, 114
        %s1083 = sadd.s32 %s1081, %s1082
        %s1084 = smul.addr %s1083, 4
        %s1085 = scalar_lea.vmem %s1, %s1084
        %s1086 = smul.u32 %s38, 2
        %s1087 = smul.u32 %s38, 2
        %s1088 = sadd.s32 %s1087, 1
        %p1089 = scmp.lt.s32.totalorder %s37, 1
        %s1090 = scalar_select %p1089, %s37, 1
        %p1091 = scmp.lt.s32.totalorder %s1088, 37
        %s1092 = scalar_select %p1091, %s1088, 37
        %s1093 = smul.addr %s1092, 3
        %s1094 = smul.addr %s1090, 114
        %s1095 = sadd.s32 %s1093, %s1094
        %s1096 = smul.addr %s1095, 4
        %s1097 = scalar_lea.vmem %s2, %s1096
        %s1098 = smul.u32 %s38, 2
        %s1099 = sadd.s32 %s1098, 1
        %s1100 = smul.u32 %s38, 2
        %s1101 = sadd.s32 %s1100, 1
        %p1102 = scmp.lt.s32.totalorder %s37, 1
        %s1103 = scalar_select %p1102, %s37, 1
        %p1104 = scmp.lt.s32.totalorder %s1101, 37
        %s1105 = scalar_select %p1104, %s1101, 37
        %s1106 = smul.addr %s1105, 3
        %s1107 = smul.addr %s1103, 114
        %s1108 = sadd.s32 %s1106, %s1107
        %s1109 = smul.addr %s1108, 4
        %s1110 = scalar_lea.vmem %s3, %s1109
        %s1111 = smul.u32 %s38, 2
        %s1112 = sadd.s32 %s1111, 1
        %s1113 = smul.u32 %s38, 2
        %s1114 = sadd.s32 %s1113, 2
        %p1115 = scmp.lt.s32.totalorder %s37, 1
        %s1116 = scalar_select %p1115, %s37, 1
        %p1117 = scmp.lt.s32.totalorder %s1114, 37
        %s1118 = scalar_select %p1117, %s1114, 37
        %s1119 = smul.addr %s1118, 3
        %s1120 = smul.addr %s1116, 114
        %s1121 = sadd.s32 %s1119, %s1120
        %s1122 = smul.addr %s1121, 4
        %s1123 = scalar_lea.vmem %s4, %s1122
        %s1124 = smul.u32 %s38, 2
        %s1125 = sadd.s32 %s1124, 2
        %s1126 = smul.u32 %s38, 2
        %s1127 = sadd.s32 %s1126, 2
        %p1128 = scmp.lt.s32.totalorder %s37, 1
        %s1129 = scalar_select %p1128, %s37, 1
        %p1130 = scmp.lt.s32.totalorder %s1127, 37
        %s1131 = scalar_select %p1130, %s1127, 37
        %s1132 = smul.addr %s1131, 3
        %s1133 = smul.addr %s1129, 114
        %s1134 = sadd.s32 %s1132, %s1133
        %s1135 = smul.addr %s1134, 4
        %s1136 = scalar_lea.vmem %s5, %s1135
        %s1137 = smul.u32 %s38, 2
        %s1138 = sadd.s32 %s1137, 2
        %s1139 = smul.u32 %s38, 2
        %s1140 = sadd.s32 %s1139, 3
        %p1141 = scmp.lt.s32.totalorder %s37, 1
        %s1142 = scalar_select %p1141, %s37, 1
        %p1143 = scmp.lt.s32.totalorder %s1140, 37
        %s1144 = scalar_select %p1143, %s1140, 37
        %s1145 = smul.addr %s1144, 3
        %s1146 = smul.addr %s1142, 114
        %s1147 = sadd.s32 %s1145, %s1146
        %s1148 = smul.addr %s1147, 4
        %s1149 = scalar_lea.vmem %s6, %s1148
        %s1150 = smul.u32 %s38, 2
        %s1151 = sadd.s32 %s1150, 3
        %s1152 = smul.u32 %s38, 2
        %s1153 = sadd.s32 %s1152, 3
        %p1154 = scmp.lt.s32.totalorder %s37, 1
        %s1155 = scalar_select %p1154, %s37, 1
        %p1156 = scmp.lt.s32.totalorder %s1153, 37
        %s1157 = scalar_select %p1156, %s1153, 37
        %s1158 = smul.addr %s1157, 3
        %s1159 = smul.addr %s1155, 114
        %s1160 = sadd.s32 %s1158, %s1159
        %s1161 = smul.addr %s1160, 4
        %s1162 = scalar_lea.vmem %s7, %s1161
        %s1163 = smul.u32 %s38, 2
        %s1164 = sadd.s32 %s1163, 3
        %s1165 = smul.u32 %s38, 2
        %s1166 = sadd.s32 %s1165, 4
        %p1167 = scmp.lt.s32.totalorder %s37, 1
        %s1168 = scalar_select %p1167, %s37, 1
        %p1169 = scmp.lt.s32.totalorder %s1166, 37
        %s1170 = scalar_select %p1169, %s1166, 37
        %s1171 = smul.addr %s1170, 3
        %s1172 = smul.addr %s1168, 114
        %s1173 = sadd.s32 %s1171, %s1172
        %s1174 = smul.addr %s1173, 4
        %s1175 = scalar_lea.vmem %s8, %s1174
        %s1176 = smul.u32 %s38, 2
        %s1177 = sadd.s32 %s1176, 4
        %s1178 = smul.u32 %s38, 2
        %s1179 = sadd.s32 %s1178, 4
        %p1180 = scmp.lt.s32.totalorder %s37, 1
        %s1181 = scalar_select %p1180, %s37, 1
        %p1182 = scmp.lt.s32.totalorder %s1179, 37
        %s1183 = scalar_select %p1182, %s1179, 37
        %s1184 = smul.addr %s1183, 3
        %s1185 = smul.addr %s1181, 114
        %s1186 = sadd.s32 %s1184, %s1185
        %s1187 = smul.addr %s1186, 4
        %s1188 = scalar_lea.vmem %s9, %s1187
        %s1189 = smul.u32 %s38, 2
        %s1190 = sadd.s32 %s1189, 4
        %s1191 = smul.u32 %s38, 2
        %s1192 = sadd.s32 %s1191, 5
        %p1193 = scmp.lt.s32.totalorder %s37, 1
        %s1194 = scalar_select %p1193, %s37, 1
        %p1195 = scmp.lt.s32.totalorder %s1192, 37
        %s1196 = scalar_select %p1195, %s1192, 37
        %s1197 = smul.addr %s1196, 3
        %s1198 = smul.addr %s1194, 114
        %s1199 = sadd.s32 %s1197, %s1198
        %s1200 = smul.addr %s1199, 4
        %s1201 = scalar_lea.vmem %s10, %s1200
        %s1202 = smul.u32 %s38, 2
        %s1203 = sadd.s32 %s1202, 5
        %s1204 = smul.u32 %s38, 2
        %s1205 = sadd.s32 %s1204, 5
        %p1206 = scmp.lt.s32.totalorder %s37, 1
        %s1207 = scalar_select %p1206, %s37, 1
        %p1208 = scmp.lt.s32.totalorder %s1205, 37
        %s1209 = scalar_select %p1208, %s1205, 37
        %s1210 = smul.addr %s1209, 3
        %s1211 = smul.addr %s1207, 114
        %s1212 = sadd.s32 %s1210, %s1211
        %s1213 = smul.addr %s1212, 4
        %s1214 = scalar_lea.vmem %s11, %s1213
        %s1215 = smul.u32 %s38, 2
        %s1216 = sadd.s32 %s1215, 5
        %s1217 = smul.u32 %s38, 2
        %s1218 = sadd.s32 %s1217, 6
        %p1219 = scmp.lt.s32.totalorder %s37, 1
        %s1220 = scalar_select %p1219, %s37, 1
        %p1221 = scmp.lt.s32.totalorder %s1218, 37
        %s1222 = scalar_select %p1221, %s1218, 37
        %s1223 = smul.addr %s1222, 3
        %s1224 = smul.addr %s1220, 114
        %s1225 = sadd.s32 %s1223, %s1224
        %s1226 = smul.addr %s1225, 4
        %s1227 = scalar_lea.vmem %s12, %s1226
        %s1228 = smul.u32 %s38, 2
        %s1229 = sadd.s32 %s1228, 6
        %s1230 = smul.u32 %s38, 2
        %s1231 = sadd.s32 %s1230, 6
        %p1232 = scmp.lt.s32.totalorder %s37, 1
        %s1233 = scalar_select %p1232, %s37, 1
        %p1234 = scmp.lt.s32.totalorder %s1231, 37
        %s1235 = scalar_select %p1234, %s1231, 37
        %s1236 = smul.addr %s1235, 3
        %s1237 = smul.addr %s1233, 114
        %s1238 = sadd.s32 %s1236, %s1237
        %s1239 = smul.addr %s1238, 4
        %s1240 = scalar_lea.vmem %s13, %s1239
        %s1241 = smul.u32 %s38, 2
        %s1242 = sadd.s32 %s1241, 6
        %p1243 = scmp.lt.s32.totalorder %s36, 0
        %s1244 = scalar_select %p1243, %s36, 0
        %s1245 = smul.addr %s1244, 2
        %s1246 = scalar_lea.vmem %s14, %s1245
        %p1247 = scmp.lt.s32.totalorder %s36, 0
        %s1248 = scalar_select %p1247, %s36, 0
        %s1249 = scalar_lea.vmem %s15, %s1248
        %p1250 = scmp.lt.s32.totalorder %s36, 0
        %s1251 = scalar_select %p1250, %s36, 0
        %s1252 = scalar_lea.vmem %s16, %s1251
        %v1254 = vld [vmem:[%s1074] sm:$0xf]
        %v1255 = vld [vmem:[%s1074 + $0x4] sm:$0xf]
        %v1256 = vld [vmem:[%s1074 + $0x8] sm:$0x3]
        %v1257 = vld [vmem:[%s1246] sm:$0x3]
        %s1258 = scalar_lea.vmem %s1246, 4
        %v1259 = vld [vmem:[%s1258] sm:$0x3]
        %v1263 = vunpack.c.l.b16 %v1254
        %v1264 = vunpack.c.l.b16 %v1255
        %v1265 = vunpack.c.l.b16 %v1256
        %v1266 = vpack.c.b16 %v1264, %v1263
        %v1267 = vpack.c.b16 %v1265, %v1265
        %vm1268 = vsmask.f32 7424
        %v1270 = vshrl.u32 %v1266, 16
        %v1272 = vshll.u32 %v1266, 16
        %v1274 = vrot.slane %v1272, 1
        %v1275 = vor.u32 %v1270, %v1274
        %v1277 = vshll.u32 %v1267, 16
        %v1279 = vrot.slane %v1277, 1
        %v1280 = vsel %vm1268, %v1275, %v1279
        %vm1281 = vcmask 23552
        %v1283 = vsel %vm1281, %v1280, 0
        %vm1285 = vcmask 1040384
        %vm1286 = vcmask 1041408
        %v1287 = vsel %vm1285, 4294967295, 65535
        %v1288 = vsel %vm1286, %v1287, 0
        %v1290 = vand.u32 %v1259, %v1288
        %1292 = vmatprep.subr.bf16.mxu0 0
        %1293 = vmatpush1.bf16.msra.mxu0 0
        %1294 = vmatprep.subr.bf16.mxu0 0
        %1295 = vmatpush1.bf16.msra.mxu0 0
        %1296 = vmatprep.subr.bf16.mxu0 0
        %1297 = vmatpush1.bf16.msra.mxu0 0
        %1298 = vmatprep.subr.bf16.mxu0 0
        %1299 = vmatpush1.bf16.msra.mxu0 0
        %1300 = vmatprep.subr.bf16.mxu0 0
        %1301 = vmatpush1.bf16.msra.mxu0 0
        %1302 = vmatprep.subr.bf16.mxu0 0
        %1303 = vmatpush1.bf16.msra.mxu0 0
        %1304 = vmatprep.subr.bf16.mxu0 0
        %1305 = vmatpush1.bf16.msra.mxu0 0
        %1306 = vmatprep.subr.bf16.mxu0 0
        %1307 = vmatpush1.bf16.msra.mxu0 %v1290
        %1308 = vmatprep.subr.bf16.mxu0 0
        %1309 = vmatpush2.bf16.msra.mxu0 0
        %1310 = vmatprep.subr.bf16.mxu0 0
        %1311 = vmatpush2.bf16.msra.mxu0 0
        %1312 = vmatprep.subr.bf16.mxu0 0
        %1313 = vmatpush2.bf16.msra.mxu0 0
        %1314 = vmatprep.subr.bf16.mxu0 0
        %1315 = vmatpush2.bf16.msra.mxu0 0
        %1316 = vmatprep.subr.bf16.mxu0 0
        %1317 = vmatpush2.bf16.msra.mxu0 0
        %1318 = vmatprep.subr.bf16.mxu0 0
        %1319 = vmatpush2.bf16.msra.mxu0 0
        %1320 = vmatprep.subr.bf16.mxu0 0
        %1321 = vmatpush2.bf16.msra.mxu0 0
        %1322 = vmatprep.subr.bf16.mxu0 0
        %1323 = vmatpush2.bf16.msra.mxu0 0
        %1324 = vmatprep.mubr.bf16.mxu0 0
        %1325 = vmatmul.mubr.bf16.gmra.mxu0 %v1283
        %v1326 = vpop.f32.mrf.mxu0
        %v1327 = vadd.f32 0.0, %v1326
        %v1328 = vpop.f32.mrf.mxu0
        %v1329 = vpop.f32.mrf.mxu0
        %v1330 = vadd.f32 0.0, %v1329
        %v1331 = vpop.f32.mrf.mxu0
        %1332 = vdwg.mxu0
        %v1333 = vsel %vm1281, %v1266, 0
        %v1336 = vand.u32 %v1257, %v1288
        %1338 = vmatprep.subr.bf16.mxu0 0
        %1339 = vmatpush1.bf16.msra.mxu0 0
        %1340 = vmatprep.subr.bf16.mxu0 0
        %1341 = vmatpush1.bf16.msra.mxu0 0
        %1342 = vmatprep.subr.bf16.mxu0 0
        %1343 = vmatpush1.bf16.msra.mxu0 0
        %1344 = vmatprep.subr.bf16.mxu0 0
        %1345 = vmatpush1.bf16.msra.mxu0 0
        %1346 = vmatprep.subr.bf16.mxu0 0
        %1347 = vmatpush1.bf16.msra.mxu0 0
        %1348 = vmatprep.subr.bf16.mxu0 0
        %1349 = vmatpush1.bf16.msra.mxu0 0
        %1350 = vmatprep.subr.bf16.mxu0 0
        %1351 = vmatpush1.bf16.msra.mxu0 0
        %1352 = vmatprep.subr.bf16.mxu0 0
        %1353 = vmatpush1.bf16.msra.mxu0 %v1336
        %1354 = vmatprep.subr.bf16.mxu0 0
        %1355 = vmatpush2.bf16.msra.mxu0 0
        %1356 = vmatprep.subr.bf16.mxu0 0
        %1357 = vmatpush2.bf16.msra.mxu0 0
        %1358 = vmatprep.subr.bf16.mxu0 0
        %1359 = vmatpush2.bf16.msra.mxu0 0
        %1360 = vmatprep.subr.bf16.mxu0 0
        %1361 = vmatpush2.bf16.msra.mxu0 0
        %1362 = vmatprep.subr.bf16.mxu0 0
        %1363 = vmatpush2.bf16.msra.mxu0 0
        %1364 = vmatprep.subr.bf16.mxu0 0
        %1365 = vmatpush2.bf16.msra.mxu0 0
        %1366 = vmatprep.subr.bf16.mxu0 0
        %1367 = vmatpush2.bf16.msra.mxu0 0
        %1368 = vmatprep.subr.bf16.mxu0 0
        %1369 = vmatpush2.bf16.msra.mxu0 0
        %1370 = vmatprep.mubr.bf16.mxu0 0
        %1371 = vmatmul.mubr.bf16.gmra.mxu0 %v1333
        %v1372 = vpop.f32.mrf.mxu0
        %v1373 = vadd.f32 %v1327, %v1372
        %v1374 = vpop.f32.mrf.mxu0
        %v1375 = vpop.f32.mrf.mxu0
        %v1376 = vadd.f32 %v1330, %v1375
        %v1377 = vpop.f32.mrf.mxu0
        %1378 = vdwg.mxu0
        %s1379 = scalar_lea.vmem %s1246, 8
        %v1380 = vld [vmem:[%s1379] sm:$0x3]
        %vm1381 = vcmask 1046528
        %v1382 = vrot.slane %v1266, 1
        %v1383 = vrot.slane %v1267, 1
        %v1384 = vsel %vm1381, %v1382, %v1383
        %v1386 = vsel %vm1281, %v1384, 0
        %v1389 = vand.u32 %v1380, %v1288
        %1391 = vmatprep.subr.bf16.mxu0 0
        %1392 = vmatpush1.bf16.msra.mxu0 0
        %1393 = vmatprep.subr.bf16.mxu0 0
        %1394 = vmatpush1.bf16.msra.mxu0 0
        %1395 = vmatprep.subr.bf16.mxu0 0
        %1396 = vmatpush1.bf16.msra.mxu0 0
        %1397 = vmatprep.subr.bf16.mxu0 0
        %1398 = vmatpush1.bf16.msra.mxu0 0
        %1399 = vmatprep.subr.bf16.mxu0 0
        %1400 = vmatpush1.bf16.msra.mxu0 0
        %1401 = vmatprep.subr.bf16.mxu0 0
        %1402 = vmatpush1.bf16.msra.mxu0 0
        %1403 = vmatprep.subr.bf16.mxu0 0
        %1404 = vmatpush1.bf16.msra.mxu0 0
        %1405 = vmatprep.subr.bf16.mxu0 0
        %1406 = vmatpush1.bf16.msra.mxu0 %v1389
        %1407 = vmatprep.subr.bf16.mxu0 0
        %1408 = vmatpush2.bf16.msra.mxu0 0
        %1409 = vmatprep.subr.bf16.mxu0 0
        %1410 = vmatpush2.bf16.msra.mxu0 0
        %1411 = vmatprep.subr.bf16.mxu0 0
        %1412 = vmatpush2.bf16.msra.mxu0 0
        %1413 = vmatprep.subr.bf16.mxu0 0
        %1414 = vmatpush2.bf16.msra.mxu0 0
        %1415 = vmatprep.subr.bf16.mxu0 0
        %1416 = vmatpush2.bf16.msra.mxu0 0
        %1417 = vmatprep.subr.bf16.mxu0 0
        %1418 = vmatpush2.bf16.msra.mxu0 0
        %1419 = vmatprep.subr.bf16.mxu0 0
        %1420 = vmatpush2.bf16.msra.mxu0 0
        %1421 = vmatprep.subr.bf16.mxu0 0
        %1422 = vmatpush2.bf16.msra.mxu0 0
        %1423 = vmatprep.mubr.bf16.mxu0 0
        %1424 = vmatmul.mubr.bf16.gmra.mxu0 %v1386
        %v1425 = vpop.f32.mrf.mxu0
        %v1426 = vadd.f32 0.0, %v1425
        %v1427 = vpop.f32.mrf.mxu0
        %v1428 = vpop.f32.mrf.mxu0
        %v1429 = vadd.f32 0.0, %v1428
        %v1430 = vpop.f32.mrf.mxu0
        %1431 = vdwg.mxu0
        %v1432 = vadd.f32 %v1373, %v1426
        %v1433 = vadd.f32 %v1376, %v1429
        %s1434 = scalar_lea.vmem %s1246, 12
        %v1435 = vld [vmem:[%s1434] sm:$0x3]
        %vm1436 = vsmask.f32 6400
        %v1437 = vrot.slane %v1270, 1
        %v1438 = vrot.slane %v1272, 2
        %v1439 = vor.u32 %v1437, %v1438
        %v1440 = vshrl.u32 %v1267, 16
        %v1442 = vrot.slane %v1440, 1
        %v1443 = vrot.slane %v1277, 2
        %v1444 = vor.u32 %v1442, %v1443
        %v1445 = vsel %vm1436, %v1439, %v1444
        %v1447 = vsel %vm1281, %v1445, 0
        %v1450 = vand.u32 %v1435, %v1288
        %1452 = vmatprep.subr.bf16.mxu0 0
        %1453 = vmatpush1.bf16.msra.mxu0 0
        %1454 = vmatprep.subr.bf16.mxu0 0
        %1455 = vmatpush1.bf16.msra.mxu0 0
        %1456 = vmatprep.subr.bf16.mxu0 0
        %1457 = vmatpush1.bf16.msra.mxu0 0
        %1458 = vmatprep.subr.bf16.mxu0 0
        %1459 = vmatpush1.bf16.msra.mxu0 0
        %1460 = vmatprep.subr.bf16.mxu0 0
        %1461 = vmatpush1.bf16.msra.mxu0 0
        %1462 = vmatprep.subr.bf16.mxu0 0
        %1463 = vmatpush1.bf16.msra.mxu0 0
        %1464 = vmatprep.subr.bf16.mxu0 0
        %1465 = vmatpush1.bf16.msra.mxu0 0
        %1466 = vmatprep.subr.bf16.mxu0 0
        %1467 = vmatpush1.bf16.msra.mxu0 %v1450
        %1468 = vmatprep.subr.bf16.mxu0 0
        %1469 = vmatpush2.bf16.msra.mxu0 0
        %1470 = vmatprep.subr.bf16.mxu0 0
        %1471 = vmatpush2.bf16.msra.mxu0 0
        %1472 = vmatprep.subr.bf16.mxu0 0
        %1473 = vmatpush2.bf16.msra.mxu0 0
        %1474 = vmatprep.subr.bf16.mxu0 0
        %1475 = vmatpush2.bf16.msra.mxu0 0
        %1476 = vmatprep.subr.bf16.mxu0 0
        %1477 = vmatpush2.bf16.msra.mxu0 0
        %1478 = vmatprep.subr.bf16.mxu0 0
        %1479 = vmatpush2.bf16.msra.mxu0 0
        %1480 = vmatprep.subr.bf16.mxu0 0
        %1481 = vmatpush2.bf16.msra.mxu0 0
        %1482 = vmatprep.subr.bf16.mxu0 0
        %1483 = vmatpush2.bf16.msra.mxu0 0
        %1484 = vmatprep.mubr.bf16.mxu0 0
        %1485 = vmatmul.mubr.bf16.gmra.mxu0 %v1447
        %v1486 = vpop.f32.mrf.mxu0
        %v1487 = vadd.f32 0.0, %v1486
        %v1488 = vpop.f32.mrf.mxu0
        %v1489 = vpop.f32.mrf.mxu0
        %v1490 = vadd.f32 0.0, %v1489
        %v1491 = vpop.f32.mrf.mxu0
        %1492 = vdwg.mxu0
        %v1493 = vadd.f32 %v1432, %v1487
        %v1494 = vadd.f32 %v1433, %v1490
        %v1495 = vld [vmem:[%s1085] sm:$0xf]
        %v1496 = vld [vmem:[%s1085 + $0x4] sm:$0xf]
        %v1497 = vld [vmem:[%s1085 + $0x8] sm:$0x3]
        %s1498 = scalar_lea.vmem %s1246, 2
        %v1499 = vld [vmem:[%s1498] sm:$0x3]
        %v1502 = vunpack.c.l.b16 %v1495
        %v1503 = vunpack.c.l.b16 %v1496
        %v1504 = vpack.c.b16 %v1503, %v1502
        %v1506 = vsel %vm1281, %v1504, 0
        %v1509 = vand.u32 %v1499, %v1288
        %1511 = vmatprep.subr.bf16.mxu0 0
        %1512 = vmatpush1.bf16.msra.mxu0 0
        %1513 = vmatprep.subr.bf16.mxu0 0
        %1514 = vmatpush1.bf16.msra.mxu0 0
        %1515 = vmatprep.subr.bf16.mxu0 0
        %1516 = vmatpush1.bf16.msra.mxu0 0
        %1517 = vmatprep.subr.bf16.mxu0 0
        %1518 = vmatpush1.bf16.msra.mxu0 0
        %1519 = vmatprep.subr.bf16.mxu0 0
        %1520 = vmatpush1.bf16.msra.mxu0 0
        %1521 = vmatprep.subr.bf16.mxu0 0
        %1522 = vmatpush1.bf16.msra.mxu0 0
        %1523 = vmatprep.subr.bf16.mxu0 0
        %1524 = vmatpush1.bf16.msra.mxu0 0
        %1525 = vmatprep.subr.bf16.mxu0 0
        %1526 = vmatpush1.bf16.msra.mxu0 %v1509
        %1527 = vmatprep.subr.bf16.mxu0 0
        %1528 = vmatpush2.bf16.msra.mxu0 0
        %1529 = vmatprep.subr.bf16.mxu0 0
        %1530 = vmatpush2.bf16.msra.mxu0 0
        %1531 = vmatprep.subr.bf16.mxu0 0
        %1532 = vmatpush2.bf16.msra.mxu0 0
        %1533 = vmatprep.subr.bf16.mxu0 0
        %1534 = vmatpush2.bf16.msra.mxu0 0
        %1535 = vmatprep.subr.bf16.mxu0 0
        %1536 = vmatpush2.bf16.msra.mxu0 0
        %1537 = vmatprep.subr.bf16.mxu0 0
        %1538 = vmatpush2.bf16.msra.mxu0 0
        %1539 = vmatprep.subr.bf16.mxu0 0
        %1540 = vmatpush2.bf16.msra.mxu0 0
        %1541 = vmatprep.subr.bf16.mxu0 0
        %1542 = vmatpush2.bf16.msra.mxu0 0
        %1543 = vmatprep.mubr.bf16.mxu0 0
        %1544 = vmatmul.mubr.bf16.gmra.mxu0 %v1506
        %v1545 = vpop.f32.mrf.mxu0
        %v1546 = vadd.f32 0.0, %v1545
        %v1547 = vpop.f32.mrf.mxu0
        %v1548 = vpop.f32.mrf.mxu0
        %v1549 = vadd.f32 0.0, %v1548
        %v1550 = vpop.f32.mrf.mxu0
        %1551 = vdwg.mxu0
        %v1552 = vadd.f32 %v1493, %v1546
        %v1553 = vadd.f32 %v1494, %v1549
        %s1554 = scalar_lea.vmem %s1246, 6
        %v1555 = vld [vmem:[%s1554] sm:$0x3]
        %v1557 = vunpack.c.l.b16 %v1497
        %v1558 = vpack.c.b16 %v1557, %v1557
        %v1559 = vshrl.u32 %v1504, 16
        %v1561 = vshll.u32 %v1504, 16
        %v1563 = vrot.slane %v1561, 1
        %v1564 = vor.u32 %v1559, %v1563
        %v1566 = vshll.u32 %v1558, 16
        %v1568 = vrot.slane %v1566, 1
        %v1569 = vsel %vm1268, %v1564, %v1568
        %v1571 = vsel %vm1281, %v1569, 0
        %v1574 = vand.u32 %v1555, %v1288
        %1576 = vmatprep.subr.bf16.mxu0 0
        %1577 = vmatpush1.bf16.msra.mxu0 0
        %1578 = vmatprep.subr.bf16.mxu0 0
        %1579 = vmatpush1.bf16.msra.mxu0 0
        %1580 = vmatprep.subr.bf16.mxu0 0
        %1581 = vmatpush1.bf16.msra.mxu0 0
        %1582 = vmatprep.subr.bf16.mxu0 0
        %1583 = vmatpush1.bf16.msra.mxu0 0
        %1584 = vmatprep.subr.bf16.mxu0 0
        %1585 = vmatpush1.bf16.msra.mxu0 0
        %1586 = vmatprep.subr.bf16.mxu0 0
        %1587 = vmatpush1.bf16.msra.mxu0 0
        %1588 = vmatprep.subr.bf16.mxu0 0
        %1589 = vmatpush1.bf16.msra.mxu0 0
        %1590 = vmatprep.subr.bf16.mxu0 0
        %1591 = vmatpush1.bf16.msra.mxu0 %v1574
        %1592 = vmatprep.subr.bf16.mxu0 0
        %1593 = vmatpush2.bf16.msra.mxu0 0
        %1594 = vmatprep.subr.bf16.mxu0 0
        %1595 = vmatpush2.bf16.msra.mxu0 0
        %1596 = vmatprep.subr.bf16.mxu0 0
        %1597 = vmatpush2.bf16.msra.mxu0 0
        %1598 = vmatprep.subr.bf16.mxu0 0
        %1599 = vmatpush2.bf16.msra.mxu0 0
        %1600 = vmatprep.subr.bf16.mxu0 0
        %1601 = vmatpush2.bf16.msra.mxu0 0
        %1602 = vmatprep.subr.bf16.mxu0 0
        %1603 = vmatpush2.bf16.msra.mxu0 0
        %1604 = vmatprep.subr.bf16.mxu0 0
        %1605 = vmatpush2.bf16.msra.mxu0 0
        %1606 = vmatprep.subr.bf16.mxu0 0
        %1607 = vmatpush2.bf16.msra.mxu0 0
        %1608 = vmatprep.mubr.bf16.mxu0 0
        %1609 = vmatmul.mubr.bf16.gmra.mxu0 %v1571
        %v1610 = vpop.f32.mrf.mxu0
        %v1611 = vadd.f32 0.0, %v1610
        %v1612 = vpop.f32.mrf.mxu0
        %v1613 = vpop.f32.mrf.mxu0
        %v1614 = vadd.f32 0.0, %v1613
        %v1615 = vpop.f32.mrf.mxu0
        %1616 = vdwg.mxu0
        %v1617 = vadd.f32 %v1552, %v1611
        %v1618 = vadd.f32 %v1553, %v1614
        %s1619 = scalar_lea.vmem %s1246, 10
        %v1620 = vld [vmem:[%s1619] sm:$0x3]
        %v1621 = vrot.slane %v1504, 1
        %v1622 = vrot.slane %v1558, 1
        %v1623 = vsel %vm1381, %v1621, %v1622
        %v1625 = vsel %vm1281, %v1623, 0
        %v1628 = vand.u32 %v1620, %v1288
        %1630 = vmatprep.subr.bf16.mxu0 0
        %1631 = vmatpush1.bf16.msra.mxu0 0
        %1632 = vmatprep.subr.bf16.mxu0 0
        %1633 = vmatpush1.bf16.msra.mxu0 0
        %1634 = vmatprep.subr.bf16.mxu0 0
        %1635 = vmatpush1.bf16.msra.mxu0 0
        %1636 = vmatprep.subr.bf16.mxu0 0
        %1637 = vmatpush1.bf16.msra.mxu0 0
        %1638 = vmatprep.subr.bf16.mxu0 0
        %1639 = vmatpush1.bf16.msra.mxu0 0
        %1640 = vmatprep.subr.bf16.mxu0 0
        %1641 = vmatpush1.bf16.msra.mxu0 0
        %1642 = vmatprep.subr.bf16.mxu0 0
        %1643 = vmatpush1.bf16.msra.mxu0 0
        %1644 = vmatprep.subr.bf16.mxu0 0
        %1645 = vmatpush1.bf16.msra.mxu0 %v1628
        %1646 = vmatprep.subr.bf16.mxu0 0
        %1647 = vmatpush2.bf16.msra.mxu0 0
        %1648 = vmatprep.subr.bf16.mxu0 0
        %1649 = vmatpush2.bf16.msra.mxu0 0
        %1650 = vmatprep.subr.bf16.mxu0 0
        %1651 = vmatpush2.bf16.msra.mxu0 0
        %1652 = vmatprep.subr.bf16.mxu0 0
        %1653 = vmatpush2.bf16.msra.mxu0 0
        %1654 = vmatprep.subr.bf16.mxu0 0
        %1655 = vmatpush2.bf16.msra.mxu0 0
        %1656 = vmatprep.subr.bf16.mxu0 0
        %1657 = vmatpush2.bf16.msra.mxu0 0
        %1658 = vmatprep.subr.bf16.mxu0 0
        %1659 = vmatpush2.bf16.msra.mxu0 0
        %1660 = vmatprep.subr.bf16.mxu0 0
        %1661 = vmatpush2.bf16.msra.mxu0 0
        %1662 = vmatprep.mubr.bf16.mxu0 0
        %1663 = vmatmul.mubr.bf16.gmra.mxu0 %v1625
        %v1664 = vpop.f32.mrf.mxu0
        %v1665 = vadd.f32 0.0, %v1664
        %v1666 = vpop.f32.mrf.mxu0
        %v1667 = vpop.f32.mrf.mxu0
        %v1668 = vadd.f32 0.0, %v1667
        %v1669 = vpop.f32.mrf.mxu0
        %1670 = vdwg.mxu0
        %v1671 = vadd.f32 %v1617, %v1665
        %v1672 = vadd.f32 %v1618, %v1668
        %v1673 = vld [vmem:[%s1097] sm:$0xf]
        %v1674 = vld [vmem:[%s1097 + $0x4] sm:$0xf]
        %v1675 = vld [vmem:[%s1097 + $0x8] sm:$0x3]
        %s1676 = scalar_lea.vmem %s1246, 14
        %v1677 = vld [vmem:[%s1676] sm:$0x3]
        %v1680 = vunpack.c.l.b16 %v1673
        %v1681 = vunpack.c.l.b16 %v1674
        %v1682 = vpack.c.b16 %v1681, %v1680
        %v1684 = vsel %vm1281, %v1682, 0
        %v1687 = vand.u32 %v1677, %v1288
        %1689 = vmatprep.subr.bf16.mxu0 0
        %1690 = vmatpush1.bf16.msra.mxu0 0
        %1691 = vmatprep.subr.bf16.mxu0 0
        %1692 = vmatpush1.bf16.msra.mxu0 0
        %1693 = vmatprep.subr.bf16.mxu0 0
        %1694 = vmatpush1.bf16.msra.mxu0 0
        %1695 = vmatprep.subr.bf16.mxu0 0
        %1696 = vmatpush1.bf16.msra.mxu0 0
        %1697 = vmatprep.subr.bf16.mxu0 0
        %1698 = vmatpush1.bf16.msra.mxu0 0
        %1699 = vmatprep.subr.bf16.mxu0 0
        %1700 = vmatpush1.bf16.msra.mxu0 0
        %1701 = vmatprep.subr.bf16.mxu0 0
        %1702 = vmatpush1.bf16.msra.mxu0 0
        %1703 = vmatprep.subr.bf16.mxu0 0
        %1704 = vmatpush1.bf16.msra.mxu0 %v1687
        %1705 = vmatprep.subr.bf16.mxu0 0
        %1706 = vmatpush2.bf16.msra.mxu0 0
        %1707 = vmatprep.subr.bf16.mxu0 0
        %1708 = vmatpush2.bf16.msra.mxu0 0
        %1709 = vmatprep.subr.bf16.mxu0 0
        %1710 = vmatpush2.bf16.msra.mxu0 0
        %1711 = vmatprep.subr.bf16.mxu0 0
        %1712 = vmatpush2.bf16.msra.mxu0 0
        %1713 = vmatprep.subr.bf16.mxu0 0
        %1714 = vmatpush2.bf16.msra.mxu0 0
        %1715 = vmatprep.subr.bf16.mxu0 0
        %1716 = vmatpush2.bf16.msra.mxu0 0
        %1717 = vmatprep.subr.bf16.mxu0 0
        %1718 = vmatpush2.bf16.msra.mxu0 0
        %1719 = vmatprep.subr.bf16.mxu0 0
        %1720 = vmatpush2.bf16.msra.mxu0 0
        %1721 = vmatprep.mubr.bf16.mxu0 0
        %1722 = vmatmul.mubr.bf16.gmra.mxu0 %v1684
        %v1723 = vpop.f32.mrf.mxu0
        %v1724 = vadd.f32 0.0, %v1723
        %v1725 = vpop.f32.mrf.mxu0
        %v1726 = vpop.f32.mrf.mxu0
        %v1727 = vadd.f32 0.0, %v1726
        %v1728 = vpop.f32.mrf.mxu0
        %1729 = vdwg.mxu0
        %v1730 = vadd.f32 %v1671, %v1724
        %v1731 = vadd.f32 %v1672, %v1727
        %s1732 = scalar_lea.vmem %s1246, 18
        %v1733 = vld [vmem:[%s1732] sm:$0x3]
        %v1735 = vunpack.c.l.b16 %v1675
        %v1736 = vpack.c.b16 %v1735, %v1735
        %v1737 = vshrl.u32 %v1682, 16
        %v1739 = vshll.u32 %v1682, 16
        %v1741 = vrot.slane %v1739, 1
        %v1742 = vor.u32 %v1737, %v1741
        %v1744 = vshll.u32 %v1736, 16
        %v1746 = vrot.slane %v1744, 1
        %v1747 = vsel %vm1268, %v1742, %v1746
        %v1749 = vsel %vm1281, %v1747, 0
        %v1752 = vand.u32 %v1733, %v1288
        %1754 = vmatprep.subr.bf16.mxu0 0
        %1755 = vmatpush1.bf16.msra.mxu0 0
        %1756 = vmatprep.subr.bf16.mxu0 0
        %1757 = vmatpush1.bf16.msra.mxu0 0
        %1758 = vmatprep.subr.bf16.mxu0 0
        %1759 = vmatpush1.bf16.msra.mxu0 0
        %1760 = vmatprep.subr.bf16.mxu0 0
        %1761 = vmatpush1.bf16.msra.mxu0 0
        %1762 = vmatprep.subr.bf16.mxu0 0
        %1763 = vmatpush1.bf16.msra.mxu0 0
        %1764 = vmatprep.subr.bf16.mxu0 0
        %1765 = vmatpush1.bf16.msra.mxu0 0
        %1766 = vmatprep.subr.bf16.mxu0 0
        %1767 = vmatpush1.bf16.msra.mxu0 0
        %1768 = vmatprep.subr.bf16.mxu0 0
        %1769 = vmatpush1.bf16.msra.mxu0 %v1752
        %1770 = vmatprep.subr.bf16.mxu0 0
        %1771 = vmatpush2.bf16.msra.mxu0 0
        %1772 = vmatprep.subr.bf16.mxu0 0
        %1773 = vmatpush2.bf16.msra.mxu0 0
        %1774 = vmatprep.subr.bf16.mxu0 0
        %1775 = vmatpush2.bf16.msra.mxu0 0
        %1776 = vmatprep.subr.bf16.mxu0 0
        %1777 = vmatpush2.bf16.msra.mxu0 0
        %1778 = vmatprep.subr.bf16.mxu0 0
        %1779 = vmatpush2.bf16.msra.mxu0 0
        %1780 = vmatprep.subr.bf16.mxu0 0
        %1781 = vmatpush2.bf16.msra.mxu0 0
        %1782 = vmatprep.subr.bf16.mxu0 0
        %1783 = vmatpush2.bf16.msra.mxu0 0
        %1784 = vmatprep.subr.bf16.mxu0 0
        %1785 = vmatpush2.bf16.msra.mxu0 0
        %1786 = vmatprep.mubr.bf16.mxu0 0
        %1787 = vmatmul.mubr.bf16.gmra.mxu0 %v1749
        %v1788 = vpop.f32.mrf.mxu0
        %v1789 = vadd.f32 0.0, %v1788
        %v1790 = vpop.f32.mrf.mxu0
        %v1791 = vpop.f32.mrf.mxu0
        %v1792 = vadd.f32 0.0, %v1791
        %v1793 = vpop.f32.mrf.mxu0
        %1794 = vdwg.mxu0
        %v1795 = vadd.f32 %v1730, %v1789
        %v1796 = vadd.f32 %v1731, %v1792
        %s1797 = scalar_lea.vmem %s1246, 22
        %v1798 = vld [vmem:[%s1797] sm:$0x3]
        %v1799 = vrot.slane %v1682, 1
        %v1800 = vrot.slane %v1736, 1
        %v1801 = vsel %vm1381, %v1799, %v1800
        %v1803 = vsel %vm1281, %v1801, 0
        %v1806 = vand.u32 %v1798, %v1288
        %1808 = vmatprep.subr.bf16.mxu0 0
        %1809 = vmatpush1.bf16.msra.mxu0 0
        %1810 = vmatprep.subr.bf16.mxu0 0
        %1811 = vmatpush1.bf16.msra.mxu0 0
        %1812 = vmatprep.subr.bf16.mxu0 0
        %1813 = vmatpush1.bf16.msra.mxu0 0
        %1814 = vmatprep.subr.bf16.mxu0 0
        %1815 = vmatpush1.bf16.msra.mxu0 0
        %1816 = vmatprep.subr.bf16.mxu0 0
        %1817 = vmatpush1.bf16.msra.mxu0 0
        %1818 = vmatprep.subr.bf16.mxu0 0
        %1819 = vmatpush1.bf16.msra.mxu0 0
        %1820 = vmatprep.subr.bf16.mxu0 0
        %1821 = vmatpush1.bf16.msra.mxu0 0
        %1822 = vmatprep.subr.bf16.mxu0 0
        %1823 = vmatpush1.bf16.msra.mxu0 %v1806
        %1824 = vmatprep.subr.bf16.mxu0 0
        %1825 = vmatpush2.bf16.msra.mxu0 0
        %1826 = vmatprep.subr.bf16.mxu0 0
        %1827 = vmatpush2.bf16.msra.mxu0 0
        %1828 = vmatprep.subr.bf16.mxu0 0
        %1829 = vmatpush2.bf16.msra.mxu0 0
        %1830 = vmatprep.subr.bf16.mxu0 0
        %1831 = vmatpush2.bf16.msra.mxu0 0
        %1832 = vmatprep.subr.bf16.mxu0 0
        %1833 = vmatpush2.bf16.msra.mxu0 0
        %1834 = vmatprep.subr.bf16.mxu0 0
        %1835 = vmatpush2.bf16.msra.mxu0 0
        %1836 = vmatprep.subr.bf16.mxu0 0
        %1837 = vmatpush2.bf16.msra.mxu0 0
        %1838 = vmatprep.subr.bf16.mxu0 0
        %1839 = vmatpush2.bf16.msra.mxu0 0
        %1840 = vmatprep.mubr.bf16.mxu0 0
        %1841 = vmatmul.mubr.bf16.gmra.mxu0 %v1803
        %v1842 = vpop.f32.mrf.mxu0
        %v1843 = vadd.f32 0.0, %v1842
        %v1844 = vpop.f32.mrf.mxu0
        %v1845 = vpop.f32.mrf.mxu0
        %v1846 = vadd.f32 0.0, %v1845
        %v1847 = vpop.f32.mrf.mxu0
        %1848 = vdwg.mxu0
        %v1849 = vadd.f32 %v1795, %v1843
        %v1850 = vadd.f32 %v1796, %v1846
        %s1851 = scalar_lea.vmem %s1246, 26
        %v1852 = vld [vmem:[%s1851] sm:$0x3]
        %v1853 = vrot.slane %v1737, 1
        %v1854 = vrot.slane %v1739, 2
        %v1855 = vor.u32 %v1853, %v1854
        %v1856 = vshrl.u32 %v1736, 16
        %v1858 = vrot.slane %v1856, 1
        %v1859 = vrot.slane %v1744, 2
        %v1860 = vor.u32 %v1858, %v1859
        %v1861 = vsel %vm1436, %v1855, %v1860
        %v1863 = vsel %vm1281, %v1861, 0
        %v1866 = vand.u32 %v1852, %v1288
        %1868 = vmatprep.subr.bf16.mxu0 0
        %1869 = vmatpush1.bf16.msra.mxu0 0
        %1870 = vmatprep.subr.bf16.mxu0 0
        %1871 = vmatpush1.bf16.msra.mxu0 0
        %1872 = vmatprep.subr.bf16.mxu0 0
        %1873 = vmatpush1.bf16.msra.mxu0 0
        %1874 = vmatprep.subr.bf16.mxu0 0
        %1875 = vmatpush1.bf16.msra.mxu0 0
        %1876 = vmatprep.subr.bf16.mxu0 0
        %1877 = vmatpush1.bf16.msra.mxu0 0
        %1878 = vmatprep.subr.bf16.mxu0 0
        %1879 = vmatpush1.bf16.msra.mxu0 0
        %1880 = vmatprep.subr.bf16.mxu0 0
        %1881 = vmatpush1.bf16.msra.mxu0 0
        %1882 = vmatprep.subr.bf16.mxu0 0
        %1883 = vmatpush1.bf16.msra.mxu0 %v1866
        %1884 = vmatprep.subr.bf16.mxu0 0
        %1885 = vmatpush2.bf16.msra.mxu0 0
        %1886 = vmatprep.subr.bf16.mxu0 0
        %1887 = vmatpush2.bf16.msra.mxu0 0
        %1888 = vmatprep.subr.bf16.mxu0 0
        %1889 = vmatpush2.bf16.msra.mxu0 0
        %1890 = vmatprep.subr.bf16.mxu0 0
        %1891 = vmatpush2.bf16.msra.mxu0 0
        %1892 = vmatprep.subr.bf16.mxu0 0
        %1893 = vmatpush2.bf16.msra.mxu0 0
        %1894 = vmatprep.subr.bf16.mxu0 0
        %1895 = vmatpush2.bf16.msra.mxu0 0
        %1896 = vmatprep.subr.bf16.mxu0 0
        %1897 = vmatpush2.bf16.msra.mxu0 0
        %1898 = vmatprep.subr.bf16.mxu0 0
        %1899 = vmatpush2.bf16.msra.mxu0 0
        %1900 = vmatprep.mubr.bf16.mxu0 0
        %1901 = vmatmul.mubr.bf16.gmra.mxu0 %v1863
        %v1902 = vpop.f32.mrf.mxu0
        %v1903 = vadd.f32 0.0, %v1902
        %v1904 = vpop.f32.mrf.mxu0
        %v1905 = vpop.f32.mrf.mxu0
        %v1906 = vadd.f32 0.0, %v1905
        %v1907 = vpop.f32.mrf.mxu0
        %1908 = vdwg.mxu0
        %v1909 = vadd.f32 %v1849, %v1903
        %v1910 = vadd.f32 %v1850, %v1906
        %v1911 = vld [vmem:[%s1110] sm:$0xf]
        %v1912 = vld [vmem:[%s1110 + $0x4] sm:$0xf]
        %v1913 = vld [vmem:[%s1110 + $0x8] sm:$0x3]
        %s1914 = scalar_lea.vmem %s1246, 16
        %v1915 = vld [vmem:[%s1914] sm:$0x3]
        %v1918 = vunpack.c.l.b16 %v1911
        %v1919 = vunpack.c.l.b16 %v1912
        %v1920 = vpack.c.b16 %v1919, %v1918
        %v1922 = vsel %vm1281, %v1920, 0
        %v1925 = vand.u32 %v1915, %v1288
        %1927 = vmatprep.subr.bf16.mxu0 0
        %1928 = vmatpush1.bf16.msra.mxu0 0
        %1929 = vmatprep.subr.bf16.mxu0 0
        %1930 = vmatpush1.bf16.msra.mxu0 0
        %1931 = vmatprep.subr.bf16.mxu0 0
        %1932 = vmatpush1.bf16.msra.mxu0 0
        %1933 = vmatprep.subr.bf16.mxu0 0
        %1934 = vmatpush1.bf16.msra.mxu0 0
        %1935 = vmatprep.subr.bf16.mxu0 0
        %1936 = vmatpush1.bf16.msra.mxu0 0
        %1937 = vmatprep.subr.bf16.mxu0 0
        %1938 = vmatpush1.bf16.msra.mxu0 0
        %1939 = vmatprep.subr.bf16.mxu0 0
        %1940 = vmatpush1.bf16.msra.mxu0 0
        %1941 = vmatprep.subr.bf16.mxu0 0
        %1942 = vmatpush1.bf16.msra.mxu0 %v1925
        %1943 = vmatprep.subr.bf16.mxu0 0
        %1944 = vmatpush2.bf16.msra.mxu0 0
        %1945 = vmatprep.subr.bf16.mxu0 0
        %1946 = vmatpush2.bf16.msra.mxu0 0
        %1947 = vmatprep.subr.bf16.mxu0 0
        %1948 = vmatpush2.bf16.msra.mxu0 0
        %1949 = vmatprep.subr.bf16.mxu0 0
        %1950 = vmatpush2.bf16.msra.mxu0 0
        %1951 = vmatprep.subr.bf16.mxu0 0
        %1952 = vmatpush2.bf16.msra.mxu0 0
        %1953 = vmatprep.subr.bf16.mxu0 0
        %1954 = vmatpush2.bf16.msra.mxu0 0
        %1955 = vmatprep.subr.bf16.mxu0 0
        %1956 = vmatpush2.bf16.msra.mxu0 0
        %1957 = vmatprep.subr.bf16.mxu0 0
        %1958 = vmatpush2.bf16.msra.mxu0 0
        %1959 = vmatprep.mubr.bf16.mxu0 0
        %1960 = vmatmul.mubr.bf16.gmra.mxu0 %v1922
        %v1961 = vpop.f32.mrf.mxu0
        %v1962 = vadd.f32 0.0, %v1961
        %v1963 = vpop.f32.mrf.mxu0
        %v1964 = vpop.f32.mrf.mxu0
        %v1965 = vadd.f32 0.0, %v1964
        %v1966 = vpop.f32.mrf.mxu0
        %1967 = vdwg.mxu0
        %v1968 = vadd.f32 %v1909, %v1962
        %v1969 = vadd.f32 %v1910, %v1965
        %s1970 = scalar_lea.vmem %s1246, 20
        %v1971 = vld [vmem:[%s1970] sm:$0x3]
        %v1973 = vunpack.c.l.b16 %v1913
        %v1974 = vpack.c.b16 %v1973, %v1973
        %v1975 = vshrl.u32 %v1920, 16
        %v1977 = vshll.u32 %v1920, 16
        %v1979 = vrot.slane %v1977, 1
        %v1980 = vor.u32 %v1975, %v1979
        %v1982 = vshll.u32 %v1974, 16
        %v1984 = vrot.slane %v1982, 1
        %v1985 = vsel %vm1268, %v1980, %v1984
        %v1987 = vsel %vm1281, %v1985, 0
        %v1990 = vand.u32 %v1971, %v1288
        %1992 = vmatprep.subr.bf16.mxu0 0
        %1993 = vmatpush1.bf16.msra.mxu0 0
        %1994 = vmatprep.subr.bf16.mxu0 0
        %1995 = vmatpush1.bf16.msra.mxu0 0
        %1996 = vmatprep.subr.bf16.mxu0 0
        %1997 = vmatpush1.bf16.msra.mxu0 0
        %1998 = vmatprep.subr.bf16.mxu0 0
        %1999 = vmatpush1.bf16.msra.mxu0 0
        %2000 = vmatprep.subr.bf16.mxu0 0
        %2001 = vmatpush1.bf16.msra.mxu0 0
        %2002 = vmatprep.subr.bf16.mxu0 0
        %2003 = vmatpush1.bf16.msra.mxu0 0
        %2004 = vmatprep.subr.bf16.mxu0 0
        %2005 = vmatpush1.bf16.msra.mxu0 0
        %2006 = vmatprep.subr.bf16.mxu0 0
        %2007 = vmatpush1.bf16.msra.mxu0 %v1990
        %2008 = vmatprep.subr.bf16.mxu0 0
        %2009 = vmatpush2.bf16.msra.mxu0 0
        %2010 = vmatprep.subr.bf16.mxu0 0
        %2011 = vmatpush2.bf16.msra.mxu0 0
        %2012 = vmatprep.subr.bf16.mxu0 0
        %2013 = vmatpush2.bf16.msra.mxu0 0
        %2014 = vmatprep.subr.bf16.mxu0 0
        %2015 = vmatpush2.bf16.msra.mxu0 0
        %2016 = vmatprep.subr.bf16.mxu0 0
        %2017 = vmatpush2.bf16.msra.mxu0 0
        %2018 = vmatprep.subr.bf16.mxu0 0
        %2019 = vmatpush2.bf16.msra.mxu0 0
        %2020 = vmatprep.subr.bf16.mxu0 0
        %2021 = vmatpush2.bf16.msra.mxu0 0
        %2022 = vmatprep.subr.bf16.mxu0 0
        %2023 = vmatpush2.bf16.msra.mxu0 0
        %2024 = vmatprep.mubr.bf16.mxu0 0
        %2025 = vmatmul.mubr.bf16.gmra.mxu0 %v1987
        %v2026 = vpop.f32.mrf.mxu0
        %v2027 = vadd.f32 0.0, %v2026
        %v2028 = vpop.f32.mrf.mxu0
        %v2029 = vpop.f32.mrf.mxu0
        %v2030 = vadd.f32 0.0, %v2029
        %v2031 = vpop.f32.mrf.mxu0
        %2032 = vdwg.mxu0
        %v2033 = vadd.f32 %v1968, %v2027
        %v2034 = vadd.f32 %v1969, %v2030
        %s2035 = scalar_lea.vmem %s1246, 24
        %v2036 = vld [vmem:[%s2035] sm:$0x3]
        %v2037 = vrot.slane %v1920, 1
        %v2038 = vrot.slane %v1974, 1
        %v2039 = vsel %vm1381, %v2037, %v2038
        %v2041 = vsel %vm1281, %v2039, 0
        %v2044 = vand.u32 %v2036, %v1288
        %2046 = vmatprep.subr.bf16.mxu0 0
        %2047 = vmatpush1.bf16.msra.mxu0 0
        %2048 = vmatprep.subr.bf16.mxu0 0
        %2049 = vmatpush1.bf16.msra.mxu0 0
        %2050 = vmatprep.subr.bf16.mxu0 0
        %2051 = vmatpush1.bf16.msra.mxu0 0
        %2052 = vmatprep.subr.bf16.mxu0 0
        %2053 = vmatpush1.bf16.msra.mxu0 0
        %2054 = vmatprep.subr.bf16.mxu0 0
        %2055 = vmatpush1.bf16.msra.mxu0 0
        %2056 = vmatprep.subr.bf16.mxu0 0
        %2057 = vmatpush1.bf16.msra.mxu0 0
        %2058 = vmatprep.subr.bf16.mxu0 0
        %2059 = vmatpush1.bf16.msra.mxu0 0
        %2060 = vmatprep.subr.bf16.mxu0 0
        %2061 = vmatpush1.bf16.msra.mxu0 %v2044
        %2062 = vmatprep.subr.bf16.mxu0 0
        %2063 = vmatpush2.bf16.msra.mxu0 0
        %2064 = vmatprep.subr.bf16.mxu0 0
        %2065 = vmatpush2.bf16.msra.mxu0 0
        %2066 = vmatprep.subr.bf16.mxu0 0
        %2067 = vmatpush2.bf16.msra.mxu0 0
        %2068 = vmatprep.subr.bf16.mxu0 0
        %2069 = vmatpush2.bf16.msra.mxu0 0
        %2070 = vmatprep.subr.bf16.mxu0 0
        %2071 = vmatpush2.bf16.msra.mxu0 0
        %2072 = vmatprep.subr.bf16.mxu0 0
        %2073 = vmatpush2.bf16.msra.mxu0 0
        %2074 = vmatprep.subr.bf16.mxu0 0
        %2075 = vmatpush2.bf16.msra.mxu0 0
        %2076 = vmatprep.subr.bf16.mxu0 0
        %2077 = vmatpush2.bf16.msra.mxu0 0
        %2078 = vmatprep.mubr.bf16.mxu0 0
        %2079 = vmatmul.mubr.bf16.gmra.mxu0 %v2041
        %v2080 = vpop.f32.mrf.mxu0
        %v2081 = vadd.f32 0.0, %v2080
        %v2082 = vpop.f32.mrf.mxu0
        %v2083 = vpop.f32.mrf.mxu0
        %v2084 = vadd.f32 0.0, %v2083
        %v2085 = vpop.f32.mrf.mxu0
        %2086 = vdwg.mxu0
        %v2087 = vadd.f32 %v2033, %v2081
        %v2088 = vadd.f32 %v2034, %v2084
        %v2089 = vld [vmem:[%s1123] sm:$0xf]
        %v2090 = vld [vmem:[%s1123 + $0x4] sm:$0xf]
        %v2091 = vld [vmem:[%s1123 + $0x8] sm:$0x3]
        %s2092 = scalar_lea.vmem %s1246, 28
        %v2093 = vld [vmem:[%s2092] sm:$0x3]
        %v2096 = vunpack.c.l.b16 %v2089
        %v2097 = vunpack.c.l.b16 %v2090
        %v2098 = vpack.c.b16 %v2097, %v2096
        %v2100 = vsel %vm1281, %v2098, 0
        %v2103 = vand.u32 %v2093, %v1288
        %2105 = vmatprep.subr.bf16.mxu0 0
        %2106 = vmatpush1.bf16.msra.mxu0 0
        %2107 = vmatprep.subr.bf16.mxu0 0
        %2108 = vmatpush1.bf16.msra.mxu0 0
        %2109 = vmatprep.subr.bf16.mxu0 0
        %2110 = vmatpush1.bf16.msra.mxu0 0
        %2111 = vmatprep.subr.bf16.mxu0 0
        %2112 = vmatpush1.bf16.msra.mxu0 0
        %2113 = vmatprep.subr.bf16.mxu0 0
        %2114 = vmatpush1.bf16.msra.mxu0 0
        %2115 = vmatprep.subr.bf16.mxu0 0
        %2116 = vmatpush1.bf16.msra.mxu0 0
        %2117 = vmatprep.subr.bf16.mxu0 0
        %2118 = vmatpush1.bf16.msra.mxu0 0
        %2119 = vmatprep.subr.bf16.mxu0 0
        %2120 = vmatpush1.bf16.msra.mxu0 %v2103
        %2121 = vmatprep.subr.bf16.mxu0 0
        %2122 = vmatpush2.bf16.msra.mxu0 0
        %2123 = vmatprep.subr.bf16.mxu0 0
        %2124 = vmatpush2.bf16.msra.mxu0 0
        %2125 = vmatprep.subr.bf16.mxu0 0
        %2126 = vmatpush2.bf16.msra.mxu0 0
        %2127 = vmatprep.subr.bf16.mxu0 0
        %2128 = vmatpush2.bf16.msra.mxu0 0
        %2129 = vmatprep.subr.bf16.mxu0 0
        %2130 = vmatpush2.bf16.msra.mxu0 0
        %2131 = vmatprep.subr.bf16.mxu0 0
        %2132 = vmatpush2.bf16.msra.mxu0 0
        %2133 = vmatprep.subr.bf16.mxu0 0
        %2134 = vmatpush2.bf16.msra.mxu0 0
        %2135 = vmatprep.subr.bf16.mxu0 0
        %2136 = vmatpush2.bf16.msra.mxu0 0
        %2137 = vmatprep.mubr.bf16.mxu0 0
        %2138 = vmatmul.mubr.bf16.gmra.mxu0 %v2100
        %v2139 = vpop.f32.mrf.mxu0
        %v2140 = vadd.f32 0.0, %v2139
        %v2141 = vpop.f32.mrf.mxu0
        %v2142 = vpop.f32.mrf.mxu0
        %v2143 = vadd.f32 0.0, %v2142
        %v2144 = vpop.f32.mrf.mxu0
        %2145 = vdwg.mxu0
        %v2146 = vadd.f32 %v2087, %v2140
        %v2147 = vadd.f32 %v2088, %v2143
        %s2148 = scalar_lea.vmem %s1246, 32
        %v2149 = vld [vmem:[%s2148] sm:$0x3]
        %v2151 = vunpack.c.l.b16 %v2091
        %v2152 = vpack.c.b16 %v2151, %v2151
        %v2153 = vshrl.u32 %v2098, 16
        %v2155 = vshll.u32 %v2098, 16
        %v2157 = vrot.slane %v2155, 1
        %v2158 = vor.u32 %v2153, %v2157
        %v2160 = vshll.u32 %v2152, 16
        %v2162 = vrot.slane %v2160, 1
        %v2163 = vsel %vm1268, %v2158, %v2162
        %v2165 = vsel %vm1281, %v2163, 0
        %v2168 = vand.u32 %v2149, %v1288
        %2170 = vmatprep.subr.bf16.mxu0 0
        %2171 = vmatpush1.bf16.msra.mxu0 0
        %2172 = vmatprep.subr.bf16.mxu0 0
        %2173 = vmatpush1.bf16.msra.mxu0 0
        %2174 = vmatprep.subr.bf16.mxu0 0
        %2175 = vmatpush1.bf16.msra.mxu0 0
        %2176 = vmatprep.subr.bf16.mxu0 0
        %2177 = vmatpush1.bf16.msra.mxu0 0
        %2178 = vmatprep.subr.bf16.mxu0 0
        %2179 = vmatpush1.bf16.msra.mxu0 0
        %2180 = vmatprep.subr.bf16.mxu0 0
        %2181 = vmatpush1.bf16.msra.mxu0 0
        %2182 = vmatprep.subr.bf16.mxu0 0
        %2183 = vmatpush1.bf16.msra.mxu0 0
        %2184 = vmatprep.subr.bf16.mxu0 0
        %2185 = vmatpush1.bf16.msra.mxu0 %v2168
        %2186 = vmatprep.subr.bf16.mxu0 0
        %2187 = vmatpush2.bf16.msra.mxu0 0
        %2188 = vmatprep.subr.bf16.mxu0 0
        %2189 = vmatpush2.bf16.msra.mxu0 0
        %2190 = vmatprep.subr.bf16.mxu0 0
        %2191 = vmatpush2.bf16.msra.mxu0 0
        %2192 = vmatprep.subr.bf16.mxu0 0
        %2193 = vmatpush2.bf16.msra.mxu0 0
        %2194 = vmatprep.subr.bf16.mxu0 0
        %2195 = vmatpush2.bf16.msra.mxu0 0
        %2196 = vmatprep.subr.bf16.mxu0 0
        %2197 = vmatpush2.bf16.msra.mxu0 0
        %2198 = vmatprep.subr.bf16.mxu0 0
        %2199 = vmatpush2.bf16.msra.mxu0 0
        %2200 = vmatprep.subr.bf16.mxu0 0
        %2201 = vmatpush2.bf16.msra.mxu0 0
        %2202 = vmatprep.mubr.bf16.mxu0 0
        %2203 = vmatmul.mubr.bf16.gmra.mxu0 %v2165
        %v2204 = vpop.f32.mrf.mxu0
        %v2205 = vadd.f32 0.0, %v2204
        %v2206 = vpop.f32.mrf.mxu0
        %v2207 = vpop.f32.mrf.mxu0
        %v2208 = vadd.f32 0.0, %v2207
        %v2209 = vpop.f32.mrf.mxu0
        %2210 = vdwg.mxu0
        %v2211 = vadd.f32 %v2146, %v2205
        %v2212 = vadd.f32 %v2147, %v2208
        %s2213 = scalar_lea.vmem %s1246, 36
        %v2214 = vld [vmem:[%s2213] sm:$0x3]
        %v2215 = vrot.slane %v2098, 1
        %v2216 = vrot.slane %v2152, 1
        %v2217 = vsel %vm1381, %v2215, %v2216
        %v2219 = vsel %vm1281, %v2217, 0
        %v2222 = vand.u32 %v2214, %v1288
        %2224 = vmatprep.subr.bf16.mxu0 0
        %2225 = vmatpush1.bf16.msra.mxu0 0
        %2226 = vmatprep.subr.bf16.mxu0 0
        %2227 = vmatpush1.bf16.msra.mxu0 0
        %2228 = vmatprep.subr.bf16.mxu0 0
        %2229 = vmatpush1.bf16.msra.mxu0 0
        %2230 = vmatprep.subr.bf16.mxu0 0
        %2231 = vmatpush1.bf16.msra.mxu0 0
        %2232 = vmatprep.subr.bf16.mxu0 0
        %2233 = vmatpush1.bf16.msra.mxu0 0
        %2234 = vmatprep.subr.bf16.mxu0 0
        %2235 = vmatpush1.bf16.msra.mxu0 0
        %2236 = vmatprep.subr.bf16.mxu0 0
        %2237 = vmatpush1.bf16.msra.mxu0 0
        %2238 = vmatprep.subr.bf16.mxu0 0
        %2239 = vmatpush1.bf16.msra.mxu0 %v2222
        %2240 = vmatprep.subr.bf16.mxu0 0
        %2241 = vmatpush2.bf16.msra.mxu0 0
        %2242 = vmatprep.subr.bf16.mxu0 0
        %2243 = vmatpush2.bf16.msra.mxu0 0
        %2244 = vmatprep.subr.bf16.mxu0 0
        %2245 = vmatpush2.bf16.msra.mxu0 0
        %2246 = vmatprep.subr.bf16.mxu0 0
        %2247 = vmatpush2.bf16.msra.mxu0 0
        %2248 = vmatprep.subr.bf16.mxu0 0
        %2249 = vmatpush2.bf16.msra.mxu0 0
        %2250 = vmatprep.subr.bf16.mxu0 0
        %2251 = vmatpush2.bf16.msra.mxu0 0
        %2252 = vmatprep.subr.bf16.mxu0 0
        %2253 = vmatpush2.bf16.msra.mxu0 0
        %2254 = vmatprep.subr.bf16.mxu0 0
        %2255 = vmatpush2.bf16.msra.mxu0 0
        %2256 = vmatprep.mubr.bf16.mxu0 0
        %2257 = vmatmul.mubr.bf16.gmra.mxu0 %v2219
        %v2258 = vpop.f32.mrf.mxu0
        %v2259 = vadd.f32 0.0, %v2258
        %v2260 = vpop.f32.mrf.mxu0
        %v2261 = vpop.f32.mrf.mxu0
        %v2262 = vadd.f32 0.0, %v2261
        %v2263 = vpop.f32.mrf.mxu0
        %2264 = vdwg.mxu0
        %v2265 = vadd.f32 %v2211, %v2259
        %v2266 = vadd.f32 %v2212, %v2262
        %s2267 = scalar_lea.vmem %s1246, 40
        %v2268 = vld [vmem:[%s2267] sm:$0x3]
        %v2269 = vrot.slane %v2153, 1
        %v2270 = vrot.slane %v2155, 2
        %v2271 = vor.u32 %v2269, %v2270
        %v2272 = vshrl.u32 %v2152, 16
        %v2274 = vrot.slane %v2272, 1
        %v2275 = vrot.slane %v2160, 2
        %v2276 = vor.u32 %v2274, %v2275
        %v2277 = vsel %vm1436, %v2271, %v2276
        %v2279 = vsel %vm1281, %v2277, 0
        %v2282 = vand.u32 %v2268, %v1288
        %2284 = vmatprep.subr.bf16.mxu0 0
        %2285 = vmatpush1.bf16.msra.mxu0 0
        %2286 = vmatprep.subr.bf16.mxu0 0
        %2287 = vmatpush1.bf16.msra.mxu0 0
        %2288 = vmatprep.subr.bf16.mxu0 0
        %2289 = vmatpush1.bf16.msra.mxu0 0
        %2290 = vmatprep.subr.bf16.mxu0 0
        %2291 = vmatpush1.bf16.msra.mxu0 0
        %2292 = vmatprep.subr.bf16.mxu0 0
        %2293 = vmatpush1.bf16.msra.mxu0 0
        %2294 = vmatprep.subr.bf16.mxu0 0
        %2295 = vmatpush1.bf16.msra.mxu0 0
        %2296 = vmatprep.subr.bf16.mxu0 0
        %2297 = vmatpush1.bf16.msra.mxu0 0
        %2298 = vmatprep.subr.bf16.mxu0 0
        %2299 = vmatpush1.bf16.msra.mxu0 %v2282
        %2300 = vmatprep.subr.bf16.mxu0 0
        %2301 = vmatpush2.bf16.msra.mxu0 0
        %2302 = vmatprep.subr.bf16.mxu0 0
        %2303 = vmatpush2.bf16.msra.mxu0 0
        %2304 = vmatprep.subr.bf16.mxu0 0
        %2305 = vmatpush2.bf16.msra.mxu0 0
        %2306 = vmatprep.subr.bf16.mxu0 0
        %2307 = vmatpush2.bf16.msra.mxu0 0
        %2308 = vmatprep.subr.bf16.mxu0 0
        %2309 = vmatpush2.bf16.msra.mxu0 0
        %2310 = vmatprep.subr.bf16.mxu0 0
        %2311 = vmatpush2.bf16.msra.mxu0 0
        %2312 = vmatprep.subr.bf16.mxu0 0
        %2313 = vmatpush2.bf16.msra.mxu0 0
        %2314 = vmatprep.subr.bf16.mxu0 0
        %2315 = vmatpush2.bf16.msra.mxu0 0
        %2316 = vmatprep.mubr.bf16.mxu0 0
        %2317 = vmatmul.mubr.bf16.gmra.mxu0 %v2279
        %v2318 = vpop.f32.mrf.mxu0
        %v2319 = vadd.f32 0.0, %v2318
        %v2320 = vpop.f32.mrf.mxu0
        %v2321 = vpop.f32.mrf.mxu0
        %v2322 = vadd.f32 0.0, %v2321
        %v2323 = vpop.f32.mrf.mxu0
        %2324 = vdwg.mxu0
        %v2325 = vadd.f32 %v2265, %v2319
        %v2326 = vadd.f32 %v2266, %v2322
        %v2327 = vld [vmem:[%s1136] sm:$0xf]
        %v2328 = vld [vmem:[%s1136 + $0x4] sm:$0xf]
        %v2329 = vld [vmem:[%s1136 + $0x8] sm:$0x3]
        %s2330 = scalar_lea.vmem %s1246, 30
        %v2331 = vld [vmem:[%s2330] sm:$0x3]
        %v2334 = vunpack.c.l.b16 %v2327
        %v2335 = vunpack.c.l.b16 %v2328
        %v2336 = vpack.c.b16 %v2335, %v2334
        %v2338 = vsel %vm1281, %v2336, 0
        %v2341 = vand.u32 %v2331, %v1288
        %2343 = vmatprep.subr.bf16.mxu0 0
        %2344 = vmatpush1.bf16.msra.mxu0 0
        %2345 = vmatprep.subr.bf16.mxu0 0
        %2346 = vmatpush1.bf16.msra.mxu0 0
        %2347 = vmatprep.subr.bf16.mxu0 0
        %2348 = vmatpush1.bf16.msra.mxu0 0
        %2349 = vmatprep.subr.bf16.mxu0 0
        %2350 = vmatpush1.bf16.msra.mxu0 0
        %2351 = vmatprep.subr.bf16.mxu0 0
        %2352 = vmatpush1.bf16.msra.mxu0 0
        %2353 = vmatprep.subr.bf16.mxu0 0
        %2354 = vmatpush1.bf16.msra.mxu0 0
        %2355 = vmatprep.subr.bf16.mxu0 0
        %2356 = vmatpush1.bf16.msra.mxu0 0
        %2357 = vmatprep.subr.bf16.mxu0 0
        %2358 = vmatpush1.bf16.msra.mxu0 %v2341
        %2359 = vmatprep.subr.bf16.mxu0 0
        %2360 = vmatpush2.bf16.msra.mxu0 0
        %2361 = vmatprep.subr.bf16.mxu0 0
        %2362 = vmatpush2.bf16.msra.mxu0 0
        %2363 = vmatprep.subr.bf16.mxu0 0
        %2364 = vmatpush2.bf16.msra.mxu0 0
        %2365 = vmatprep.subr.bf16.mxu0 0
        %2366 = vmatpush2.bf16.msra.mxu0 0
        %2367 = vmatprep.subr.bf16.mxu0 0
        %2368 = vmatpush2.bf16.msra.mxu0 0
        %2369 = vmatprep.subr.bf16.mxu0 0
        %2370 = vmatpush2.bf16.msra.mxu0 0
        %2371 = vmatprep.subr.bf16.mxu0 0
        %2372 = vmatpush2.bf16.msra.mxu0 0
        %2373 = vmatprep.subr.bf16.mxu0 0
        %2374 = vmatpush2.bf16.msra.mxu0 0
        %2375 = vmatprep.mubr.bf16.mxu0 0
        %2376 = vmatmul.mubr.bf16.gmra.mxu0 %v2338
        %v2377 = vpop.f32.mrf.mxu0
        %v2378 = vadd.f32 0.0, %v2377
        %v2379 = vpop.f32.mrf.mxu0
        %v2380 = vpop.f32.mrf.mxu0
        %v2381 = vadd.f32 0.0, %v2380
        %v2382 = vpop.f32.mrf.mxu0
        %2383 = vdwg.mxu0
        %v2384 = vadd.f32 %v2325, %v2378
        %v2385 = vadd.f32 %v2326, %v2381
        %s2386 = scalar_lea.vmem %s1246, 34
        %v2387 = vld [vmem:[%s2386] sm:$0x3]
        %v2389 = vunpack.c.l.b16 %v2329
        %v2390 = vpack.c.b16 %v2389, %v2389
        %v2391 = vshrl.u32 %v2336, 16
        %v2393 = vshll.u32 %v2336, 16
        %v2395 = vrot.slane %v2393, 1
        %v2396 = vor.u32 %v2391, %v2395
        %v2398 = vshll.u32 %v2390, 16
        %v2400 = vrot.slane %v2398, 1
        %v2401 = vsel %vm1268, %v2396, %v2400
        %v2403 = vsel %vm1281, %v2401, 0
        %v2406 = vand.u32 %v2387, %v1288
        %2408 = vmatprep.subr.bf16.mxu0 0
        %2409 = vmatpush1.bf16.msra.mxu0 0
        %2410 = vmatprep.subr.bf16.mxu0 0
        %2411 = vmatpush1.bf16.msra.mxu0 0
        %2412 = vmatprep.subr.bf16.mxu0 0
        %2413 = vmatpush1.bf16.msra.mxu0 0
        %2414 = vmatprep.subr.bf16.mxu0 0
        %2415 = vmatpush1.bf16.msra.mxu0 0
        %2416 = vmatprep.subr.bf16.mxu0 0
        %2417 = vmatpush1.bf16.msra.mxu0 0
        %2418 = vmatprep.subr.bf16.mxu0 0
        %2419 = vmatpush1.bf16.msra.mxu0 0
        %2420 = vmatprep.subr.bf16.mxu0 0
        %2421 = vmatpush1.bf16.msra.mxu0 0
        %2422 = vmatprep.subr.bf16.mxu0 0
        %2423 = vmatpush1.bf16.msra.mxu0 %v2406
        %2424 = vmatprep.subr.bf16.mxu0 0
        %2425 = vmatpush2.bf16.msra.mxu0 0
        %2426 = vmatprep.subr.bf16.mxu0 0
        %2427 = vmatpush2.bf16.msra.mxu0 0
        %2428 = vmatprep.subr.bf16.mxu0 0
        %2429 = vmatpush2.bf16.msra.mxu0 0
        %2430 = vmatprep.subr.bf16.mxu0 0
        %2431 = vmatpush2.bf16.msra.mxu0 0
        %2432 = vmatprep.subr.bf16.mxu0 0
        %2433 = vmatpush2.bf16.msra.mxu0 0
        %2434 = vmatprep.subr.bf16.mxu0 0
        %2435 = vmatpush2.bf16.msra.mxu0 0
        %2436 = vmatprep.subr.bf16.mxu0 0
        %2437 = vmatpush2.bf16.msra.mxu0 0
        %2438 = vmatprep.subr.bf16.mxu0 0
        %2439 = vmatpush2.bf16.msra.mxu0 0
        %2440 = vmatprep.mubr.bf16.mxu0 0
        %2441 = vmatmul.mubr.bf16.gmra.mxu0 %v2403
        %v2442 = vpop.f32.mrf.mxu0
        %v2443 = vadd.f32 0.0, %v2442
        %v2444 = vpop.f32.mrf.mxu0
        %v2445 = vpop.f32.mrf.mxu0
        %v2446 = vadd.f32 0.0, %v2445
        %v2447 = vpop.f32.mrf.mxu0
        %2448 = vdwg.mxu0
        %v2449 = vadd.f32 %v2384, %v2443
        %v2450 = vadd.f32 %v2385, %v2446
        %s2451 = scalar_lea.vmem %s1246, 38
        %v2452 = vld [vmem:[%s2451] sm:$0x3]
        %v2453 = vrot.slane %v2336, 1
        %v2454 = vrot.slane %v2390, 1
        %v2455 = vsel %vm1381, %v2453, %v2454
        %v2457 = vsel %vm1281, %v2455, 0
        %v2460 = vand.u32 %v2452, %v1288
        %2462 = vmatprep.subr.bf16.mxu0 0
        %2463 = vmatpush1.bf16.msra.mxu0 0
        %2464 = vmatprep.subr.bf16.mxu0 0
        %2465 = vmatpush1.bf16.msra.mxu0 0
        %2466 = vmatprep.subr.bf16.mxu0 0
        %2467 = vmatpush1.bf16.msra.mxu0 0
        %2468 = vmatprep.subr.bf16.mxu0 0
        %2469 = vmatpush1.bf16.msra.mxu0 0
        %2470 = vmatprep.subr.bf16.mxu0 0
        %2471 = vmatpush1.bf16.msra.mxu0 0
        %2472 = vmatprep.subr.bf16.mxu0 0
        %2473 = vmatpush1.bf16.msra.mxu0 0
        %2474 = vmatprep.subr.bf16.mxu0 0
        %2475 = vmatpush1.bf16.msra.mxu0 0
        %2476 = vmatprep.subr.bf16.mxu0 0
        %2477 = vmatpush1.bf16.msra.mxu0 %v2460
        %2478 = vmatprep.subr.bf16.mxu0 0
        %2479 = vmatpush2.bf16.msra.mxu0 0
        %2480 = vmatprep.subr.bf16.mxu0 0
        %2481 = vmatpush2.bf16.msra.mxu0 0
        %2482 = vmatprep.subr.bf16.mxu0 0
        %2483 = vmatpush2.bf16.msra.mxu0 0
        %2484 = vmatprep.subr.bf16.mxu0 0
        %2485 = vmatpush2.bf16.msra.mxu0 0
        %2486 = vmatprep.subr.bf16.mxu0 0
        %2487 = vmatpush2.bf16.msra.mxu0 0
        %2488 = vmatprep.subr.bf16.mxu0 0
        %2489 = vmatpush2.bf16.msra.mxu0 0
        %2490 = vmatprep.subr.bf16.mxu0 0
        %2491 = vmatpush2.bf16.msra.mxu0 0
        %2492 = vmatprep.subr.bf16.mxu0 0
        %2493 = vmatpush2.bf16.msra.mxu0 0
        %2494 = vmatprep.mubr.bf16.mxu0 0
        %2495 = vmatmul.mubr.bf16.gmra.mxu0 %v2457
        %v2496 = vpop.f32.mrf.mxu0
        %v2497 = vadd.f32 0.0, %v2496
        %v2498 = vpop.f32.mrf.mxu0
        %v2499 = vpop.f32.mrf.mxu0
        %v2500 = vadd.f32 0.0, %v2499
        %v2501 = vpop.f32.mrf.mxu0
        %2502 = vdwg.mxu0
        %v2503 = vadd.f32 %v2449, %v2497
        %v2504 = vadd.f32 %v2450, %v2500
        %v2505 = vld [vmem:[%s1149] sm:$0xf]
        %v2506 = vld [vmem:[%s1149 + $0x4] sm:$0xf]
        %v2507 = vld [vmem:[%s1149 + $0x8] sm:$0x3]
        %s2508 = scalar_lea.vmem %s1246, 42
        %v2509 = vld [vmem:[%s2508] sm:$0x3]
        %v2512 = vunpack.c.l.b16 %v2505
        %v2513 = vunpack.c.l.b16 %v2506
        %v2514 = vpack.c.b16 %v2513, %v2512
        %v2516 = vsel %vm1281, %v2514, 0
        %v2519 = vand.u32 %v2509, %v1288
        %2521 = vmatprep.subr.bf16.mxu0 0
        %2522 = vmatpush1.bf16.msra.mxu0 0
        %2523 = vmatprep.subr.bf16.mxu0 0
        %2524 = vmatpush1.bf16.msra.mxu0 0
        %2525 = vmatprep.subr.bf16.mxu0 0
        %2526 = vmatpush1.bf16.msra.mxu0 0
        %2527 = vmatprep.subr.bf16.mxu0 0
        %2528 = vmatpush1.bf16.msra.mxu0 0
        %2529 = vmatprep.subr.bf16.mxu0 0
        %2530 = vmatpush1.bf16.msra.mxu0 0
        %2531 = vmatprep.subr.bf16.mxu0 0
        %2532 = vmatpush1.bf16.msra.mxu0 0
        %2533 = vmatprep.subr.bf16.mxu0 0
        %2534 = vmatpush1.bf16.msra.mxu0 0
        %2535 = vmatprep.subr.bf16.mxu0 0
        %2536 = vmatpush1.bf16.msra.mxu0 %v2519
        %2537 = vmatprep.subr.bf16.mxu0 0
        %2538 = vmatpush2.bf16.msra.mxu0 0
        %2539 = vmatprep.subr.bf16.mxu0 0
        %2540 = vmatpush2.bf16.msra.mxu0 0
        %2541 = vmatprep.subr.bf16.mxu0 0
        %2542 = vmatpush2.bf16.msra.mxu0 0
        %2543 = vmatprep.subr.bf16.mxu0 0
        %2544 = vmatpush2.bf16.msra.mxu0 0
        %2545 = vmatprep.subr.bf16.mxu0 0
        %2546 = vmatpush2.bf16.msra.mxu0 0
        %2547 = vmatprep.subr.bf16.mxu0 0
        %2548 = vmatpush2.bf16.msra.mxu0 0
        %2549 = vmatprep.subr.bf16.mxu0 0
        %2550 = vmatpush2.bf16.msra.mxu0 0
        %2551 = vmatprep.subr.bf16.mxu0 0
        %2552 = vmatpush2.bf16.msra.mxu0 0
        %2553 = vmatprep.mubr.bf16.mxu0 0
        %2554 = vmatmul.mubr.bf16.gmra.mxu0 %v2516
        %v2555 = vpop.f32.mrf.mxu0
        %v2556 = vadd.f32 0.0, %v2555
        %v2557 = vpop.f32.mrf.mxu0
        %v2558 = vpop.f32.mrf.mxu0
        %v2559 = vadd.f32 0.0, %v2558
        %v2560 = vpop.f32.mrf.mxu0
        %2561 = vdwg.mxu0
        %v2562 = vadd.f32 %v2503, %v2556
        %v2563 = vadd.f32 %v2504, %v2559
        %s2564 = scalar_lea.vmem %s1246, 46
        %v2565 = vld [vmem:[%s2564] sm:$0x3]
        %v2567 = vunpack.c.l.b16 %v2507
        %v2568 = vpack.c.b16 %v2567, %v2567
        %v2569 = vshrl.u32 %v2514, 16
        %v2571 = vshll.u32 %v2514, 16
        %v2573 = vrot.slane %v2571, 1
        %v2574 = vor.u32 %v2569, %v2573
        %v2576 = vshll.u32 %v2568, 16
        %v2578 = vrot.slane %v2576, 1
        %v2579 = vsel %vm1268, %v2574, %v2578
        %v2581 = vsel %vm1281, %v2579, 0
        %v2584 = vand.u32 %v2565, %v1288
        %2586 = vmatprep.subr.bf16.mxu0 0
        %2587 = vmatpush1.bf16.msra.mxu0 0
        %2588 = vmatprep.subr.bf16.mxu0 0
        %2589 = vmatpush1.bf16.msra.mxu0 0
        %2590 = vmatprep.subr.bf16.mxu0 0
        %2591 = vmatpush1.bf16.msra.mxu0 0
        %2592 = vmatprep.subr.bf16.mxu0 0
        %2593 = vmatpush1.bf16.msra.mxu0 0
        %2594 = vmatprep.subr.bf16.mxu0 0
        %2595 = vmatpush1.bf16.msra.mxu0 0
        %2596 = vmatprep.subr.bf16.mxu0 0
        %2597 = vmatpush1.bf16.msra.mxu0 0
        %2598 = vmatprep.subr.bf16.mxu0 0
        %2599 = vmatpush1.bf16.msra.mxu0 0
        %2600 = vmatprep.subr.bf16.mxu0 0
        %2601 = vmatpush1.bf16.msra.mxu0 %v2584
        %2602 = vmatprep.subr.bf16.mxu0 0
        %2603 = vmatpush2.bf16.msra.mxu0 0
        %2604 = vmatprep.subr.bf16.mxu0 0
        %2605 = vmatpush2.bf16.msra.mxu0 0
        %2606 = vmatprep.subr.bf16.mxu0 0
        %2607 = vmatpush2.bf16.msra.mxu0 0
        %2608 = vmatprep.subr.bf16.mxu0 0
        %2609 = vmatpush2.bf16.msra.mxu0 0
        %2610 = vmatprep.subr.bf16.mxu0 0
        %2611 = vmatpush2.bf16.msra.mxu0 0
        %2612 = vmatprep.subr.bf16.mxu0 0
        %2613 = vmatpush2.bf16.msra.mxu0 0
        %2614 = vmatprep.subr.bf16.mxu0 0
        %2615 = vmatpush2.bf16.msra.mxu0 0
        %2616 = vmatprep.subr.bf16.mxu0 0
        %2617 = vmatpush2.bf16.msra.mxu0 0
        %2618 = vmatprep.mubr.bf16.mxu0 0
        %2619 = vmatmul.mubr.bf16.gmra.mxu0 %v2581
        %v2620 = vpop.f32.mrf.mxu0
        %v2621 = vadd.f32 0.0, %v2620
        %v2622 = vpop.f32.mrf.mxu0
        %v2623 = vpop.f32.mrf.mxu0
        %v2624 = vadd.f32 0.0, %v2623
        %v2625 = vpop.f32.mrf.mxu0
        %2626 = vdwg.mxu0
        %v2627 = vadd.f32 %v2562, %v2621
        %v2628 = vadd.f32 %v2563, %v2624
        %s2629 = scalar_lea.vmem %s1246, 50
        %v2630 = vld [vmem:[%s2629] sm:$0x3]
        %v2631 = vrot.slane %v2514, 1
        %v2632 = vrot.slane %v2568, 1
        %v2633 = vsel %vm1381, %v2631, %v2632
        %v2635 = vsel %vm1281, %v2633, 0
        %v2638 = vand.u32 %v2630, %v1288
        %2640 = vmatprep.subr.bf16.mxu0 0
        %2641 = vmatpush1.bf16.msra.mxu0 0
        %2642 = vmatprep.subr.bf16.mxu0 0
        %2643 = vmatpush1.bf16.msra.mxu0 0
        %2644 = vmatprep.subr.bf16.mxu0 0
        %2645 = vmatpush1.bf16.msra.mxu0 0
        %2646 = vmatprep.subr.bf16.mxu0 0
        %2647 = vmatpush1.bf16.msra.mxu0 0
        %2648 = vmatprep.subr.bf16.mxu0 0
        %2649 = vmatpush1.bf16.msra.mxu0 0
        %2650 = vmatprep.subr.bf16.mxu0 0
        %2651 = vmatpush1.bf16.msra.mxu0 0
        %2652 = vmatprep.subr.bf16.mxu0 0
        %2653 = vmatpush1.bf16.msra.mxu0 0
        %2654 = vmatprep.subr.bf16.mxu0 0
        %2655 = vmatpush1.bf16.msra.mxu0 %v2638
        %2656 = vmatprep.subr.bf16.mxu0 0
        %2657 = vmatpush2.bf16.msra.mxu0 0
        %2658 = vmatprep.subr.bf16.mxu0 0
        %2659 = vmatpush2.bf16.msra.mxu0 0
        %2660 = vmatprep.subr.bf16.mxu0 0
        %2661 = vmatpush2.bf16.msra.mxu0 0
        %2662 = vmatprep.subr.bf16.mxu0 0
        %2663 = vmatpush2.bf16.msra.mxu0 0
        %2664 = vmatprep.subr.bf16.mxu0 0
        %2665 = vmatpush2.bf16.msra.mxu0 0
        %2666 = vmatprep.subr.bf16.mxu0 0
        %2667 = vmatpush2.bf16.msra.mxu0 0
        %2668 = vmatprep.subr.bf16.mxu0 0
        %2669 = vmatpush2.bf16.msra.mxu0 0
        %2670 = vmatprep.subr.bf16.mxu0 0
        %2671 = vmatpush2.bf16.msra.mxu0 0
        %2672 = vmatprep.mubr.bf16.mxu0 0
        %2673 = vmatmul.mubr.bf16.gmra.mxu0 %v2635
        %v2674 = vpop.f32.mrf.mxu0
        %v2675 = vadd.f32 0.0, %v2674
        %v2676 = vpop.f32.mrf.mxu0
        %v2677 = vpop.f32.mrf.mxu0
        %v2678 = vadd.f32 0.0, %v2677
        %v2679 = vpop.f32.mrf.mxu0
        %2680 = vdwg.mxu0
        %v2681 = vadd.f32 %v2627, %v2675
        %v2682 = vadd.f32 %v2628, %v2678
        %s2683 = scalar_lea.vmem %s1246, 54
        %v2684 = vld [vmem:[%s2683] sm:$0x3]
        %v2685 = vrot.slane %v2569, 1
        %v2686 = vrot.slane %v2571, 2
        %v2687 = vor.u32 %v2685, %v2686
        %v2688 = vshrl.u32 %v2568, 16
        %v2690 = vrot.slane %v2688, 1
        %v2691 = vrot.slane %v2576, 2
        %v2692 = vor.u32 %v2690, %v2691
        %v2693 = vsel %vm1436, %v2687, %v2692
        %v2695 = vsel %vm1281, %v2693, 0
        %v2698 = vand.u32 %v2684, %v1288
        %2700 = vmatprep.subr.bf16.mxu0 0
        %2701 = vmatpush1.bf16.msra.mxu0 0
        %2702 = vmatprep.subr.bf16.mxu0 0
        %2703 = vmatpush1.bf16.msra.mxu0 0
        %2704 = vmatprep.subr.bf16.mxu0 0
        %2705 = vmatpush1.bf16.msra.mxu0 0
        %2706 = vmatprep.subr.bf16.mxu0 0
        %2707 = vmatpush1.bf16.msra.mxu0 0
        %2708 = vmatprep.subr.bf16.mxu0 0
        %2709 = vmatpush1.bf16.msra.mxu0 0
        %2710 = vmatprep.subr.bf16.mxu0 0
        %2711 = vmatpush1.bf16.msra.mxu0 0
        %2712 = vmatprep.subr.bf16.mxu0 0
        %2713 = vmatpush1.bf16.msra.mxu0 0
        %2714 = vmatprep.subr.bf16.mxu0 0
        %2715 = vmatpush1.bf16.msra.mxu0 %v2698
        %2716 = vmatprep.subr.bf16.mxu0 0
        %2717 = vmatpush2.bf16.msra.mxu0 0
        %2718 = vmatprep.subr.bf16.mxu0 0
        %2719 = vmatpush2.bf16.msra.mxu0 0
        %2720 = vmatprep.subr.bf16.mxu0 0
        %2721 = vmatpush2.bf16.msra.mxu0 0
        %2722 = vmatprep.subr.bf16.mxu0 0
        %2723 = vmatpush2.bf16.msra.mxu0 0
        %2724 = vmatprep.subr.bf16.mxu0 0
        %2725 = vmatpush2.bf16.msra.mxu0 0
        %2726 = vmatprep.subr.bf16.mxu0 0
        %2727 = vmatpush2.bf16.msra.mxu0 0
        %2728 = vmatprep.subr.bf16.mxu0 0
        %2729 = vmatpush2.bf16.msra.mxu0 0
        %2730 = vmatprep.subr.bf16.mxu0 0
        %2731 = vmatpush2.bf16.msra.mxu0 0
        %2732 = vmatprep.mubr.bf16.mxu0 0
        %2733 = vmatmul.mubr.bf16.gmra.mxu0 %v2695
        %v2734 = vpop.f32.mrf.mxu0
        %v2735 = vadd.f32 0.0, %v2734
        %v2736 = vpop.f32.mrf.mxu0
        %v2737 = vpop.f32.mrf.mxu0
        %v2738 = vadd.f32 0.0, %v2737
        %v2739 = vpop.f32.mrf.mxu0
        %2740 = vdwg.mxu0
        %v2741 = vadd.f32 %v2681, %v2735
        %v2742 = vadd.f32 %v2682, %v2738
        %v2743 = vld [vmem:[%s1162] sm:$0xf]
        %v2744 = vld [vmem:[%s1162 + $0x4] sm:$0xf]
        %v2745 = vld [vmem:[%s1162 + $0x8] sm:$0x3]
        %s2746 = scalar_lea.vmem %s1246, 44
        %v2747 = vld [vmem:[%s2746] sm:$0x3]
        %v2750 = vunpack.c.l.b16 %v2743
        %v2751 = vunpack.c.l.b16 %v2744
        %v2752 = vpack.c.b16 %v2751, %v2750
        %v2754 = vsel %vm1281, %v2752, 0
        %v2757 = vand.u32 %v2747, %v1288
        %2759 = vmatprep.subr.bf16.mxu0 0
        %2760 = vmatpush1.bf16.msra.mxu0 0
        %2761 = vmatprep.subr.bf16.mxu0 0
        %2762 = vmatpush1.bf16.msra.mxu0 0
        %2763 = vmatprep.subr.bf16.mxu0 0
        %2764 = vmatpush1.bf16.msra.mxu0 0
        %2765 = vmatprep.subr.bf16.mxu0 0
        %2766 = vmatpush1.bf16.msra.mxu0 0
        %2767 = vmatprep.subr.bf16.mxu0 0
        %2768 = vmatpush1.bf16.msra.mxu0 0
        %2769 = vmatprep.subr.bf16.mxu0 0
        %2770 = vmatpush1.bf16.msra.mxu0 0
        %2771 = vmatprep.subr.bf16.mxu0 0
        %2772 = vmatpush1.bf16.msra.mxu0 0
        %2773 = vmatprep.subr.bf16.mxu0 0
        %2774 = vmatpush1.bf16.msra.mxu0 %v2757
        %2775 = vmatprep.subr.bf16.mxu0 0
        %2776 = vmatpush2.bf16.msra.mxu0 0
        %2777 = vmatprep.subr.bf16.mxu0 0
        %2778 = vmatpush2.bf16.msra.mxu0 0
        %2779 = vmatprep.subr.bf16.mxu0 0
        %2780 = vmatpush2.bf16.msra.mxu0 0
        %2781 = vmatprep.subr.bf16.mxu0 0
        %2782 = vmatpush2.bf16.msra.mxu0 0
        %2783 = vmatprep.subr.bf16.mxu0 0
        %2784 = vmatpush2.bf16.msra.mxu0 0
        %2785 = vmatprep.subr.bf16.mxu0 0
        %2786 = vmatpush2.bf16.msra.mxu0 0
        %2787 = vmatprep.subr.bf16.mxu0 0
        %2788 = vmatpush2.bf16.msra.mxu0 0
        %2789 = vmatprep.subr.bf16.mxu0 0
        %2790 = vmatpush2.bf16.msra.mxu0 0
        %2791 = vmatprep.mubr.bf16.mxu0 0
        %2792 = vmatmul.mubr.bf16.gmra.mxu0 %v2754
        %v2793 = vpop.f32.mrf.mxu0
        %v2794 = vadd.f32 0.0, %v2793
        %v2795 = vpop.f32.mrf.mxu0
        %v2796 = vpop.f32.mrf.mxu0
        %v2797 = vadd.f32 0.0, %v2796
        %v2798 = vpop.f32.mrf.mxu0
        %2799 = vdwg.mxu0
        %v2800 = vadd.f32 %v2741, %v2794
        %v2801 = vadd.f32 %v2742, %v2797
        %s2802 = scalar_lea.vmem %s1246, 48
        %v2803 = vld [vmem:[%s2802] sm:$0x3]
        %v2805 = vunpack.c.l.b16 %v2745
        %v2806 = vpack.c.b16 %v2805, %v2805
        %v2807 = vshrl.u32 %v2752, 16
        %v2809 = vshll.u32 %v2752, 16
        %v2811 = vrot.slane %v2809, 1
        %v2812 = vor.u32 %v2807, %v2811
        %v2814 = vshll.u32 %v2806, 16
        %v2816 = vrot.slane %v2814, 1
        %v2817 = vsel %vm1268, %v2812, %v2816
        %v2819 = vsel %vm1281, %v2817, 0
        %v2822 = vand.u32 %v2803, %v1288
        %2824 = vmatprep.subr.bf16.mxu0 0
        %2825 = vmatpush1.bf16.msra.mxu0 0
        %2826 = vmatprep.subr.bf16.mxu0 0
        %2827 = vmatpush1.bf16.msra.mxu0 0
        %2828 = vmatprep.subr.bf16.mxu0 0
        %2829 = vmatpush1.bf16.msra.mxu0 0
        %2830 = vmatprep.subr.bf16.mxu0 0
        %2831 = vmatpush1.bf16.msra.mxu0 0
        %2832 = vmatprep.subr.bf16.mxu0 0
        %2833 = vmatpush1.bf16.msra.mxu0 0
        %2834 = vmatprep.subr.bf16.mxu0 0
        %2835 = vmatpush1.bf16.msra.mxu0 0
        %2836 = vmatprep.subr.bf16.mxu0 0
        %2837 = vmatpush1.bf16.msra.mxu0 0
        %2838 = vmatprep.subr.bf16.mxu0 0
        %2839 = vmatpush1.bf16.msra.mxu0 %v2822
        %2840 = vmatprep.subr.bf16.mxu0 0
        %2841 = vmatpush2.bf16.msra.mxu0 0
        %2842 = vmatprep.subr.bf16.mxu0 0
        %2843 = vmatpush2.bf16.msra.mxu0 0
        %2844 = vmatprep.subr.bf16.mxu0 0
        %2845 = vmatpush2.bf16.msra.mxu0 0
        %2846 = vmatprep.subr.bf16.mxu0 0
        %2847 = vmatpush2.bf16.msra.mxu0 0
        %2848 = vmatprep.subr.bf16.mxu0 0
        %2849 = vmatpush2.bf16.msra.mxu0 0
        %2850 = vmatprep.subr.bf16.mxu0 0
        %2851 = vmatpush2.bf16.msra.mxu0 0
        %2852 = vmatprep.subr.bf16.mxu0 0
        %2853 = vmatpush2.bf16.msra.mxu0 0
        %2854 = vmatprep.subr.bf16.mxu0 0
        %2855 = vmatpush2.bf16.msra.mxu0 0
        %2856 = vmatprep.mubr.bf16.mxu0 0
        %2857 = vmatmul.mubr.bf16.gmra.mxu0 %v2819
        %v2858 = vpop.f32.mrf.mxu0
        %v2859 = vadd.f32 0.0, %v2858
        %v2860 = vpop.f32.mrf.mxu0
        %v2861 = vpop.f32.mrf.mxu0
        %v2862 = vadd.f32 0.0, %v2861
        %v2863 = vpop.f32.mrf.mxu0
        %2864 = vdwg.mxu0
        %v2865 = vadd.f32 %v2800, %v2859
        %v2866 = vadd.f32 %v2801, %v2862
        %s2867 = scalar_lea.vmem %s1246, 52
        %v2868 = vld [vmem:[%s2867] sm:$0x3]
        %v2869 = vrot.slane %v2752, 1
        %v2870 = vrot.slane %v2806, 1
        %v2871 = vsel %vm1381, %v2869, %v2870
        %v2873 = vsel %vm1281, %v2871, 0
        %v2876 = vand.u32 %v2868, %v1288
        %2878 = vmatprep.subr.bf16.mxu0 0
        %2879 = vmatpush1.bf16.msra.mxu0 0
        %2880 = vmatprep.subr.bf16.mxu0 0
        %2881 = vmatpush1.bf16.msra.mxu0 0
        %2882 = vmatprep.subr.bf16.mxu0 0
        %2883 = vmatpush1.bf16.msra.mxu0 0
        %2884 = vmatprep.subr.bf16.mxu0 0
        %2885 = vmatpush1.bf16.msra.mxu0 0
        %2886 = vmatprep.subr.bf16.mxu0 0
        %2887 = vmatpush1.bf16.msra.mxu0 0
        %2888 = vmatprep.subr.bf16.mxu0 0
        %2889 = vmatpush1.bf16.msra.mxu0 0
        %2890 = vmatprep.subr.bf16.mxu0 0
        %2891 = vmatpush1.bf16.msra.mxu0 0
        %2892 = vmatprep.subr.bf16.mxu0 0
        %2893 = vmatpush1.bf16.msra.mxu0 %v2876
        %2894 = vmatprep.subr.bf16.mxu0 0
        %2895 = vmatpush2.bf16.msra.mxu0 0
        %2896 = vmatprep.subr.bf16.mxu0 0
        %2897 = vmatpush2.bf16.msra.mxu0 0
        %2898 = vmatprep.subr.bf16.mxu0 0
        %2899 = vmatpush2.bf16.msra.mxu0 0
        %2900 = vmatprep.subr.bf16.mxu0 0
        %2901 = vmatpush2.bf16.msra.mxu0 0
        %2902 = vmatprep.subr.bf16.mxu0 0
        %2903 = vmatpush2.bf16.msra.mxu0 0
        %2904 = vmatprep.subr.bf16.mxu0 0
        %2905 = vmatpush2.bf16.msra.mxu0 0
        %2906 = vmatprep.subr.bf16.mxu0 0
        %2907 = vmatpush2.bf16.msra.mxu0 0
        %2908 = vmatprep.subr.bf16.mxu0 0
        %2909 = vmatpush2.bf16.msra.mxu0 0
        %2910 = vmatprep.mubr.bf16.mxu0 0
        %2911 = vmatmul.mubr.bf16.gmra.mxu0 %v2873
        %v2912 = vpop.f32.mrf.mxu0
        %v2913 = vadd.f32 0.0, %v2912
        %v2914 = vpop.f32.mrf.mxu0
        %v2915 = vpop.f32.mrf.mxu0
        %v2916 = vadd.f32 0.0, %v2915
        %v2917 = vpop.f32.mrf.mxu0
        %2918 = vdwg.mxu0
        %v2919 = vadd.f32 %v2865, %v2913
        %v2920 = vadd.f32 %v2866, %v2916
        %v2921 = vld [vmem:[%s1175] sm:$0xf]
        %v2922 = vld [vmem:[%s1175 + $0x4] sm:$0xf]
        %v2923 = vld [vmem:[%s1175 + $0x8] sm:$0x3]
        %s2924 = scalar_lea.vmem %s1246, 56
        %v2925 = vld [vmem:[%s2924] sm:$0x3]
        %v2928 = vunpack.c.l.b16 %v2921
        %v2929 = vunpack.c.l.b16 %v2922
        %v2930 = vpack.c.b16 %v2929, %v2928
        %v2932 = vsel %vm1281, %v2930, 0
        %v2935 = vand.u32 %v2925, %v1288
        %2937 = vmatprep.subr.bf16.mxu0 0
        %2938 = vmatpush1.bf16.msra.mxu0 0
        %2939 = vmatprep.subr.bf16.mxu0 0
        %2940 = vmatpush1.bf16.msra.mxu0 0
        %2941 = vmatprep.subr.bf16.mxu0 0
        %2942 = vmatpush1.bf16.msra.mxu0 0
        %2943 = vmatprep.subr.bf16.mxu0 0
        %2944 = vmatpush1.bf16.msra.mxu0 0
        %2945 = vmatprep.subr.bf16.mxu0 0
        %2946 = vmatpush1.bf16.msra.mxu0 0
        %2947 = vmatprep.subr.bf16.mxu0 0
        %2948 = vmatpush1.bf16.msra.mxu0 0
        %2949 = vmatprep.subr.bf16.mxu0 0
        %2950 = vmatpush1.bf16.msra.mxu0 0
        %2951 = vmatprep.subr.bf16.mxu0 0
        %2952 = vmatpush1.bf16.msra.mxu0 %v2935
        %2953 = vmatprep.subr.bf16.mxu0 0
        %2954 = vmatpush2.bf16.msra.mxu0 0
        %2955 = vmatprep.subr.bf16.mxu0 0
        %2956 = vmatpush2.bf16.msra.mxu0 0
        %2957 = vmatprep.subr.bf16.mxu0 0
        %2958 = vmatpush2.bf16.msra.mxu0 0
        %2959 = vmatprep.subr.bf16.mxu0 0
        %2960 = vmatpush2.bf16.msra.mxu0 0
        %2961 = vmatprep.subr.bf16.mxu0 0
        %2962 = vmatpush2.bf16.msra.mxu0 0
        %2963 = vmatprep.subr.bf16.mxu0 0
        %2964 = vmatpush2.bf16.msra.mxu0 0
        %2965 = vmatprep.subr.bf16.mxu0 0
        %2966 = vmatpush2.bf16.msra.mxu0 0
        %2967 = vmatprep.subr.bf16.mxu0 0
        %2968 = vmatpush2.bf16.msra.mxu0 0
        %2969 = vmatprep.mubr.bf16.mxu0 0
        %2970 = vmatmul.mubr.bf16.gmra.mxu0 %v2932
        %v2971 = vpop.f32.mrf.mxu0
        %v2972 = vadd.f32 0.0, %v2971
        %v2973 = vpop.f32.mrf.mxu0
        %v2974 = vpop.f32.mrf.mxu0
        %v2975 = vadd.f32 0.0, %v2974
        %v2976 = vpop.f32.mrf.mxu0
        %2977 = vdwg.mxu0
        %v2978 = vadd.f32 %v2919, %v2972
        %v2979 = vadd.f32 %v2920, %v2975
        %s2980 = scalar_lea.vmem %s1246, 60
        %v2981 = vld [vmem:[%s2980] sm:$0x3]
        %v2983 = vunpack.c.l.b16 %v2923
        %v2984 = vpack.c.b16 %v2983, %v2983
        %v2985 = vshrl.u32 %v2930, 16
        %v2987 = vshll.u32 %v2930, 16
        %v2989 = vrot.slane %v2987, 1
        %v2990 = vor.u32 %v2985, %v2989
        %v2992 = vshll.u32 %v2984, 16
        %v2994 = vrot.slane %v2992, 1
        %v2995 = vsel %vm1268, %v2990, %v2994
        %v2997 = vsel %vm1281, %v2995, 0
        %v3000 = vand.u32 %v2981, %v1288
        %3002 = vmatprep.subr.bf16.mxu0 0
        %3003 = vmatpush1.bf16.msra.mxu0 0
        %3004 = vmatprep.subr.bf16.mxu0 0
        %3005 = vmatpush1.bf16.msra.mxu0 0
        %3006 = vmatprep.subr.bf16.mxu0 0
        %3007 = vmatpush1.bf16.msra.mxu0 0
        %3008 = vmatprep.subr.bf16.mxu0 0
        %3009 = vmatpush1.bf16.msra.mxu0 0
        %3010 = vmatprep.subr.bf16.mxu0 0
        %3011 = vmatpush1.bf16.msra.mxu0 0
        %3012 = vmatprep.subr.bf16.mxu0 0
        %3013 = vmatpush1.bf16.msra.mxu0 0
        %3014 = vmatprep.subr.bf16.mxu0 0
        %3015 = vmatpush1.bf16.msra.mxu0 0
        %3016 = vmatprep.subr.bf16.mxu0 0
        %3017 = vmatpush1.bf16.msra.mxu0 %v3000
        %3018 = vmatprep.subr.bf16.mxu0 0
        %3019 = vmatpush2.bf16.msra.mxu0 0
        %3020 = vmatprep.subr.bf16.mxu0 0
        %3021 = vmatpush2.bf16.msra.mxu0 0
        %3022 = vmatprep.subr.bf16.mxu0 0
        %3023 = vmatpush2.bf16.msra.mxu0 0
        %3024 = vmatprep.subr.bf16.mxu0 0
        %3025 = vmatpush2.bf16.msra.mxu0 0
        %3026 = vmatprep.subr.bf16.mxu0 0
        %3027 = vmatpush2.bf16.msra.mxu0 0
        %3028 = vmatprep.subr.bf16.mxu0 0
        %3029 = vmatpush2.bf16.msra.mxu0 0
        %3030 = vmatprep.subr.bf16.mxu0 0
        %3031 = vmatpush2.bf16.msra.mxu0 0
        %3032 = vmatprep.subr.bf16.mxu0 0
        %3033 = vmatpush2.bf16.msra.mxu0 0
        %3034 = vmatprep.mubr.bf16.mxu0 0
        %3035 = vmatmul.mubr.bf16.gmra.mxu0 %v2997
        %v3036 = vpop.f32.mrf.mxu0
        %v3037 = vadd.f32 0.0, %v3036
        %v3038 = vpop.f32.mrf.mxu0
        %v3039 = vpop.f32.mrf.mxu0
        %v3040 = vadd.f32 0.0, %v3039
        %v3041 = vpop.f32.mrf.mxu0
        %3042 = vdwg.mxu0
        %v3043 = vadd.f32 %v2978, %v3037
        %v3044 = vadd.f32 %v2979, %v3040
        %s3045 = scalar_lea.vmem %s1246, 64
        %v3046 = vld [vmem:[%s3045] sm:$0x3]
        %v3047 = vrot.slane %v2930, 1
        %v3048 = vrot.slane %v2984, 1
        %v3049 = vsel %vm1381, %v3047, %v3048
        %v3051 = vsel %vm1281, %v3049, 0
        %v3054 = vand.u32 %v3046, %v1288
        %3056 = vmatprep.subr.bf16.mxu0 0
        %3057 = vmatpush1.bf16.msra.mxu0 0
        %3058 = vmatprep.subr.bf16.mxu0 0
        %3059 = vmatpush1.bf16.msra.mxu0 0
        %3060 = vmatprep.subr.bf16.mxu0 0
        %3061 = vmatpush1.bf16.msra.mxu0 0
        %3062 = vmatprep.subr.bf16.mxu0 0
        %3063 = vmatpush1.bf16.msra.mxu0 0
        %3064 = vmatprep.subr.bf16.mxu0 0
        %3065 = vmatpush1.bf16.msra.mxu0 0
        %3066 = vmatprep.subr.bf16.mxu0 0
        %3067 = vmatpush1.bf16.msra.mxu0 0
        %3068 = vmatprep.subr.bf16.mxu0 0
        %3069 = vmatpush1.bf16.msra.mxu0 0
        %3070 = vmatprep.subr.bf16.mxu0 0
        %3071 = vmatpush1.bf16.msra.mxu0 %v3054
        %3072 = vmatprep.subr.bf16.mxu0 0
        %3073 = vmatpush2.bf16.msra.mxu0 0
        %3074 = vmatprep.subr.bf16.mxu0 0
        %3075 = vmatpush2.bf16.msra.mxu0 0
        %3076 = vmatprep.subr.bf16.mxu0 0
        %3077 = vmatpush2.bf16.msra.mxu0 0
        %3078 = vmatprep.subr.bf16.mxu0 0
        %3079 = vmatpush2.bf16.msra.mxu0 0
        %3080 = vmatprep.subr.bf16.mxu0 0
        %3081 = vmatpush2.bf16.msra.mxu0 0
        %3082 = vmatprep.subr.bf16.mxu0 0
        %3083 = vmatpush2.bf16.msra.mxu0 0
        %3084 = vmatprep.subr.bf16.mxu0 0
        %3085 = vmatpush2.bf16.msra.mxu0 0
        %3086 = vmatprep.subr.bf16.mxu0 0
        %3087 = vmatpush2.bf16.msra.mxu0 0
        %3088 = vmatprep.mubr.bf16.mxu0 0
        %3089 = vmatmul.mubr.bf16.gmra.mxu0 %v3051
        %v3090 = vpop.f32.mrf.mxu0
        %v3091 = vadd.f32 0.0, %v3090
        %v3092 = vpop.f32.mrf.mxu0
        %v3093 = vpop.f32.mrf.mxu0
        %v3094 = vadd.f32 0.0, %v3093
        %v3095 = vpop.f32.mrf.mxu0
        %3096 = vdwg.mxu0
        %v3097 = vadd.f32 %v3043, %v3091
        %v3098 = vadd.f32 %v3044, %v3094
        %s3099 = scalar_lea.vmem %s1246, 68
        %v3100 = vld [vmem:[%s3099] sm:$0x3]
        %v3101 = vrot.slane %v2985, 1
        %v3102 = vrot.slane %v2987, 2
        %v3103 = vor.u32 %v3101, %v3102
        %v3104 = vshrl.u32 %v2984, 16
        %v3106 = vrot.slane %v3104, 1
        %v3107 = vrot.slane %v2992, 2
        %v3108 = vor.u32 %v3106, %v3107
        %v3109 = vsel %vm1436, %v3103, %v3108
        %v3111 = vsel %vm1281, %v3109, 0
        %v3114 = vand.u32 %v3100, %v1288
        %3116 = vmatprep.subr.bf16.mxu0 0
        %3117 = vmatpush1.bf16.msra.mxu0 0
        %3118 = vmatprep.subr.bf16.mxu0 0
        %3119 = vmatpush1.bf16.msra.mxu0 0
        %3120 = vmatprep.subr.bf16.mxu0 0
        %3121 = vmatpush1.bf16.msra.mxu0 0
        %3122 = vmatprep.subr.bf16.mxu0 0
        %3123 = vmatpush1.bf16.msra.mxu0 0
        %3124 = vmatprep.subr.bf16.mxu0 0
        %3125 = vmatpush1.bf16.msra.mxu0 0
        %3126 = vmatprep.subr.bf16.mxu0 0
        %3127 = vmatpush1.bf16.msra.mxu0 0
        %3128 = vmatprep.subr.bf16.mxu0 0
        %3129 = vmatpush1.bf16.msra.mxu0 0
        %3130 = vmatprep.subr.bf16.mxu0 0
        %3131 = vmatpush1.bf16.msra.mxu0 %v3114
        %3132 = vmatprep.subr.bf16.mxu0 0
        %3133 = vmatpush2.bf16.msra.mxu0 0
        %3134 = vmatprep.subr.bf16.mxu0 0
        %3135 = vmatpush2.bf16.msra.mxu0 0
        %3136 = vmatprep.subr.bf16.mxu0 0
        %3137 = vmatpush2.bf16.msra.mxu0 0
        %3138 = vmatprep.subr.bf16.mxu0 0
        %3139 = vmatpush2.bf16.msra.mxu0 0
        %3140 = vmatprep.subr.bf16.mxu0 0
        %3141 = vmatpush2.bf16.msra.mxu0 0
        %3142 = vmatprep.subr.bf16.mxu0 0
        %3143 = vmatpush2.bf16.msra.mxu0 0
        %3144 = vmatprep.subr.bf16.mxu0 0
        %3145 = vmatpush2.bf16.msra.mxu0 0
        %3146 = vmatprep.subr.bf16.mxu0 0
        %3147 = vmatpush2.bf16.msra.mxu0 0
        %3148 = vmatprep.mubr.bf16.mxu0 0
        %3149 = vmatmul.mubr.bf16.gmra.mxu0 %v3111
        %v3150 = vpop.f32.mrf.mxu0
        %v3151 = vadd.f32 0.0, %v3150
        %v3152 = vpop.f32.mrf.mxu0
        %v3153 = vpop.f32.mrf.mxu0
        %v3154 = vadd.f32 0.0, %v3153
        %v3155 = vpop.f32.mrf.mxu0
        %3156 = vdwg.mxu0
        %v3157 = vadd.f32 %v3097, %v3151
        %v3158 = vadd.f32 %v3098, %v3154
        %v3159 = vld [vmem:[%s1188] sm:$0xf]
        %v3160 = vld [vmem:[%s1188 + $0x4] sm:$0xf]
        %v3161 = vld [vmem:[%s1188 + $0x8] sm:$0x3]
        %s3162 = scalar_lea.vmem %s1246, 58
        %v3163 = vld [vmem:[%s3162] sm:$0x3]
        %v3166 = vunpack.c.l.b16 %v3159
        %v3167 = vunpack.c.l.b16 %v3160
        %v3168 = vpack.c.b16 %v3167, %v3166
        %v3170 = vsel %vm1281, %v3168, 0
        %v3173 = vand.u32 %v3163, %v1288
        %3175 = vmatprep.subr.bf16.mxu0 0
        %3176 = vmatpush1.bf16.msra.mxu0 0
        %3177 = vmatprep.subr.bf16.mxu0 0
        %3178 = vmatpush1.bf16.msra.mxu0 0
        %3179 = vmatprep.subr.bf16.mxu0 0
        %3180 = vmatpush1.bf16.msra.mxu0 0
        %3181 = vmatprep.subr.bf16.mxu0 0
        %3182 = vmatpush1.bf16.msra.mxu0 0
        %3183 = vmatprep.subr.bf16.mxu0 0
        %3184 = vmatpush1.bf16.msra.mxu0 0
        %3185 = vmatprep.subr.bf16.mxu0 0
        %3186 = vmatpush1.bf16.msra.mxu0 0
        %3187 = vmatprep.subr.bf16.mxu0 0
        %3188 = vmatpush1.bf16.msra.mxu0 0
        %3189 = vmatprep.subr.bf16.mxu0 0
        %3190 = vmatpush1.bf16.msra.mxu0 %v3173
        %3191 = vmatprep.subr.bf16.mxu0 0
        %3192 = vmatpush2.bf16.msra.mxu0 0
        %3193 = vmatprep.subr.bf16.mxu0 0
        %3194 = vmatpush2.bf16.msra.mxu0 0
        %3195 = vmatprep.subr.bf16.mxu0 0
        %3196 = vmatpush2.bf16.msra.mxu0 0
        %3197 = vmatprep.subr.bf16.mxu0 0
        %3198 = vmatpush2.bf16.msra.mxu0 0
        %3199 = vmatprep.subr.bf16.mxu0 0
        %3200 = vmatpush2.bf16.msra.mxu0 0
        %3201 = vmatprep.subr.bf16.mxu0 0
        %3202 = vmatpush2.bf16.msra.mxu0 0
        %3203 = vmatprep.subr.bf16.mxu0 0
        %3204 = vmatpush2.bf16.msra.mxu0 0
        %3205 = vmatprep.subr.bf16.mxu0 0
        %3206 = vmatpush2.bf16.msra.mxu0 0
        %3207 = vmatprep.mubr.bf16.mxu0 0
        %3208 = vmatmul.mubr.bf16.gmra.mxu0 %v3170
        %v3209 = vpop.f32.mrf.mxu0
        %v3210 = vadd.f32 0.0, %v3209
        %v3211 = vpop.f32.mrf.mxu0
        %v3212 = vpop.f32.mrf.mxu0
        %v3213 = vadd.f32 0.0, %v3212
        %v3214 = vpop.f32.mrf.mxu0
        %3215 = vdwg.mxu0
        %v3216 = vadd.f32 %v3157, %v3210
        %v3217 = vadd.f32 %v3158, %v3213
        %s3218 = scalar_lea.vmem %s1246, 62
        %v3219 = vld [vmem:[%s3218] sm:$0x3]
        %v3221 = vunpack.c.l.b16 %v3161
        %v3222 = vpack.c.b16 %v3221, %v3221
        %v3223 = vshrl.u32 %v3168, 16
        %v3225 = vshll.u32 %v3168, 16
        %v3227 = vrot.slane %v3225, 1
        %v3228 = vor.u32 %v3223, %v3227
        %v3230 = vshll.u32 %v3222, 16
        %v3232 = vrot.slane %v3230, 1
        %v3233 = vsel %vm1268, %v3228, %v3232
        %v3235 = vsel %vm1281, %v3233, 0
        %v3238 = vand.u32 %v3219, %v1288
        %3240 = vmatprep.subr.bf16.mxu0 0
        %3241 = vmatpush1.bf16.msra.mxu0 0
        %3242 = vmatprep.subr.bf16.mxu0 0
        %3243 = vmatpush1.bf16.msra.mxu0 0
        %3244 = vmatprep.subr.bf16.mxu0 0
        %3245 = vmatpush1.bf16.msra.mxu0 0
        %3246 = vmatprep.subr.bf16.mxu0 0
        %3247 = vmatpush1.bf16.msra.mxu0 0
        %3248 = vmatprep.subr.bf16.mxu0 0
        %3249 = vmatpush1.bf16.msra.mxu0 0
        %3250 = vmatprep.subr.bf16.mxu0 0
        %3251 = vmatpush1.bf16.msra.mxu0 0
        %3252 = vmatprep.subr.bf16.mxu0 0
        %3253 = vmatpush1.bf16.msra.mxu0 0
        %3254 = vmatprep.subr.bf16.mxu0 0
        %3255 = vmatpush1.bf16.msra.mxu0 %v3238
        %3256 = vmatprep.subr.bf16.mxu0 0
        %3257 = vmatpush2.bf16.msra.mxu0 0
        %3258 = vmatprep.subr.bf16.mxu0 0
        %3259 = vmatpush2.bf16.msra.mxu0 0
        %3260 = vmatprep.subr.bf16.mxu0 0
        %3261 = vmatpush2.bf16.msra.mxu0 0
        %3262 = vmatprep.subr.bf16.mxu0 0
        %3263 = vmatpush2.bf16.msra.mxu0 0
        %3264 = vmatprep.subr.bf16.mxu0 0
        %3265 = vmatpush2.bf16.msra.mxu0 0
        %3266 = vmatprep.subr.bf16.mxu0 0
        %3267 = vmatpush2.bf16.msra.mxu0 0
        %3268 = vmatprep.subr.bf16.mxu0 0
        %3269 = vmatpush2.bf16.msra.mxu0 0
        %3270 = vmatprep.subr.bf16.mxu0 0
        %3271 = vmatpush2.bf16.msra.mxu0 0
        %3272 = vmatprep.mubr.bf16.mxu0 0
        %3273 = vmatmul.mubr.bf16.gmra.mxu0 %v3235
        %v3274 = vpop.f32.mrf.mxu0
        %v3275 = vadd.f32 0.0, %v3274
        %v3276 = vpop.f32.mrf.mxu0
        %v3277 = vpop.f32.mrf.mxu0
        %v3278 = vadd.f32 0.0, %v3277
        %v3279 = vpop.f32.mrf.mxu0
        %3280 = vdwg.mxu0
        %v3281 = vadd.f32 %v3216, %v3275
        %v3282 = vadd.f32 %v3217, %v3278
        %s3283 = scalar_lea.vmem %s1246, 66
        %v3284 = vld [vmem:[%s3283] sm:$0x3]
        %v3285 = vrot.slane %v3168, 1
        %v3286 = vrot.slane %v3222, 1
        %v3287 = vsel %vm1381, %v3285, %v3286
        %v3289 = vsel %vm1281, %v3287, 0
        %v3292 = vand.u32 %v3284, %v1288
        %3294 = vmatprep.subr.bf16.mxu0 0
        %3295 = vmatpush1.bf16.msra.mxu0 0
        %3296 = vmatprep.subr.bf16.mxu0 0
        %3297 = vmatpush1.bf16.msra.mxu0 0
        %3298 = vmatprep.subr.bf16.mxu0 0
        %3299 = vmatpush1.bf16.msra.mxu0 0
        %3300 = vmatprep.subr.bf16.mxu0 0
        %3301 = vmatpush1.bf16.msra.mxu0 0
        %3302 = vmatprep.subr.bf16.mxu0 0
        %3303 = vmatpush1.bf16.msra.mxu0 0
        %3304 = vmatprep.subr.bf16.mxu0 0
        %3305 = vmatpush1.bf16.msra.mxu0 0
        %3306 = vmatprep.subr.bf16.mxu0 0
        %3307 = vmatpush1.bf16.msra.mxu0 0
        %3308 = vmatprep.subr.bf16.mxu0 0
        %3309 = vmatpush1.bf16.msra.mxu0 %v3292
        %3310 = vmatprep.subr.bf16.mxu0 0
        %3311 = vmatpush2.bf16.msra.mxu0 0
        %3312 = vmatprep.subr.bf16.mxu0 0
        %3313 = vmatpush2.bf16.msra.mxu0 0
        %3314 = vmatprep.subr.bf16.mxu0 0
        %3315 = vmatpush2.bf16.msra.mxu0 0
        %3316 = vmatprep.subr.bf16.mxu0 0
        %3317 = vmatpush2.bf16.msra.mxu0 0
        %3318 = vmatprep.subr.bf16.mxu0 0
        %3319 = vmatpush2.bf16.msra.mxu0 0
        %3320 = vmatprep.subr.bf16.mxu0 0
        %3321 = vmatpush2.bf16.msra.mxu0 0
        %3322 = vmatprep.subr.bf16.mxu0 0
        %3323 = vmatpush2.bf16.msra.mxu0 0
        %3324 = vmatprep.subr.bf16.mxu0 0
        %3325 = vmatpush2.bf16.msra.mxu0 0
        %3326 = vmatprep.mubr.bf16.mxu0 0
        %3327 = vmatmul.mubr.bf16.gmra.mxu0 %v3289
        %v3328 = vpop.f32.mrf.mxu0
        %v3329 = vadd.f32 0.0, %v3328
        %v3330 = vpop.f32.mrf.mxu0
        %v3331 = vpop.f32.mrf.mxu0
        %v3332 = vadd.f32 0.0, %v3331
        %v3333 = vpop.f32.mrf.mxu0
        %3334 = vdwg.mxu0
        %v3335 = vadd.f32 %v3281, %v3329
        %v3336 = vadd.f32 %v3282, %v3332
        %v3337 = vld [vmem:[%s1201] sm:$0xf]
        %v3338 = vld [vmem:[%s1201 + $0x4] sm:$0xf]
        %v3339 = vld [vmem:[%s1201 + $0x8] sm:$0x3]
        %s3340 = scalar_lea.vmem %s1246, 70
        %v3341 = vld [vmem:[%s3340] sm:$0x3]
        %v3344 = vunpack.c.l.b16 %v3337
        %v3345 = vunpack.c.l.b16 %v3338
        %v3346 = vpack.c.b16 %v3345, %v3344
        %v3348 = vsel %vm1281, %v3346, 0
        %v3351 = vand.u32 %v3341, %v1288
        %3353 = vmatprep.subr.bf16.mxu0 0
        %3354 = vmatpush1.bf16.msra.mxu0 0
        %3355 = vmatprep.subr.bf16.mxu0 0
        %3356 = vmatpush1.bf16.msra.mxu0 0
        %3357 = vmatprep.subr.bf16.mxu0 0
        %3358 = vmatpush1.bf16.msra.mxu0 0
        %3359 = vmatprep.subr.bf16.mxu0 0
        %3360 = vmatpush1.bf16.msra.mxu0 0
        %3361 = vmatprep.subr.bf16.mxu0 0
        %3362 = vmatpush1.bf16.msra.mxu0 0
        %3363 = vmatprep.subr.bf16.mxu0 0
        %3364 = vmatpush1.bf16.msra.mxu0 0
        %3365 = vmatprep.subr.bf16.mxu0 0
        %3366 = vmatpush1.bf16.msra.mxu0 0
        %3367 = vmatprep.subr.bf16.mxu0 0
        %3368 = vmatpush1.bf16.msra.mxu0 %v3351
        %3369 = vmatprep.subr.bf16.mxu0 0
        %3370 = vmatpush2.bf16.msra.mxu0 0
        %3371 = vmatprep.subr.bf16.mxu0 0
        %3372 = vmatpush2.bf16.msra.mxu0 0
        %3373 = vmatprep.subr.bf16.mxu0 0
        %3374 = vmatpush2.bf16.msra.mxu0 0
        %3375 = vmatprep.subr.bf16.mxu0 0
        %3376 = vmatpush2.bf16.msra.mxu0 0
        %3377 = vmatprep.subr.bf16.mxu0 0
        %3378 = vmatpush2.bf16.msra.mxu0 0
        %3379 = vmatprep.subr.bf16.mxu0 0
        %3380 = vmatpush2.bf16.msra.mxu0 0
        %3381 = vmatprep.subr.bf16.mxu0 0
        %3382 = vmatpush2.bf16.msra.mxu0 0
        %3383 = vmatprep.subr.bf16.mxu0 0
        %3384 = vmatpush2.bf16.msra.mxu0 0
        %3385 = vmatprep.mubr.bf16.mxu0 0
        %3386 = vmatmul.mubr.bf16.gmra.mxu0 %v3348
        %v3387 = vpop.f32.mrf.mxu0
        %v3388 = vadd.f32 0.0, %v3387
        %v3389 = vpop.f32.mrf.mxu0
        %v3390 = vpop.f32.mrf.mxu0
        %v3391 = vadd.f32 0.0, %v3390
        %v3392 = vpop.f32.mrf.mxu0
        %3393 = vdwg.mxu0
        %v3394 = vadd.f32 %v3335, %v3388
        %v3395 = vadd.f32 %v3336, %v3391
        %s3396 = scalar_lea.vmem %s1246, 74
        %v3397 = vld [vmem:[%s3396] sm:$0x3]
        %v3399 = vunpack.c.l.b16 %v3339
        %v3400 = vpack.c.b16 %v3399, %v3399
        %v3401 = vshrl.u32 %v3346, 16
        %v3403 = vshll.u32 %v3346, 16
        %v3405 = vrot.slane %v3403, 1
        %v3406 = vor.u32 %v3401, %v3405
        %v3408 = vshll.u32 %v3400, 16
        %v3410 = vrot.slane %v3408, 1
        %v3411 = vsel %vm1268, %v3406, %v3410
        %v3413 = vsel %vm1281, %v3411, 0
        %v3416 = vand.u32 %v3397, %v1288
        %3418 = vmatprep.subr.bf16.mxu0 0
        %3419 = vmatpush1.bf16.msra.mxu0 0
        %3420 = vmatprep.subr.bf16.mxu0 0
        %3421 = vmatpush1.bf16.msra.mxu0 0
        %3422 = vmatprep.subr.bf16.mxu0 0
        %3423 = vmatpush1.bf16.msra.mxu0 0
        %3424 = vmatprep.subr.bf16.mxu0 0
        %3425 = vmatpush1.bf16.msra.mxu0 0
        %3426 = vmatprep.subr.bf16.mxu0 0
        %3427 = vmatpush1.bf16.msra.mxu0 0
        %3428 = vmatprep.subr.bf16.mxu0 0
        %3429 = vmatpush1.bf16.msra.mxu0 0
        %3430 = vmatprep.subr.bf16.mxu0 0
        %3431 = vmatpush1.bf16.msra.mxu0 0
        %3432 = vmatprep.subr.bf16.mxu0 0
        %3433 = vmatpush1.bf16.msra.mxu0 %v3416
        %3434 = vmatprep.subr.bf16.mxu0 0
        %3435 = vmatpush2.bf16.msra.mxu0 0
        %3436 = vmatprep.subr.bf16.mxu0 0
        %3437 = vmatpush2.bf16.msra.mxu0 0
        %3438 = vmatprep.subr.bf16.mxu0 0
        %3439 = vmatpush2.bf16.msra.mxu0 0
        %3440 = vmatprep.subr.bf16.mxu0 0
        %3441 = vmatpush2.bf16.msra.mxu0 0
        %3442 = vmatprep.subr.bf16.mxu0 0
        %3443 = vmatpush2.bf16.msra.mxu0 0
        %3444 = vmatprep.subr.bf16.mxu0 0
        %3445 = vmatpush2.bf16.msra.mxu0 0
        %3446 = vmatprep.subr.bf16.mxu0 0
        %3447 = vmatpush2.bf16.msra.mxu0 0
        %3448 = vmatprep.subr.bf16.mxu0 0
        %3449 = vmatpush2.bf16.msra.mxu0 0
        %3450 = vmatprep.mubr.bf16.mxu0 0
        %3451 = vmatmul.mubr.bf16.gmra.mxu0 %v3413
        %v3452 = vpop.f32.mrf.mxu0
        %v3453 = vadd.f32 0.0, %v3452
        %v3454 = vpop.f32.mrf.mxu0
        %v3455 = vpop.f32.mrf.mxu0
        %v3456 = vadd.f32 0.0, %v3455
        %v3457 = vpop.f32.mrf.mxu0
        %3458 = vdwg.mxu0
        %v3459 = vadd.f32 %v3394, %v3453
        %v3460 = vadd.f32 %v3395, %v3456
        %s3461 = scalar_lea.vmem %s1246, 78
        %v3462 = vld [vmem:[%s3461] sm:$0x3]
        %v3463 = vrot.slane %v3346, 1
        %v3464 = vrot.slane %v3400, 1
        %v3465 = vsel %vm1381, %v3463, %v3464
        %v3467 = vsel %vm1281, %v3465, 0
        %v3470 = vand.u32 %v3462, %v1288
        %3472 = vmatprep.subr.bf16.mxu0 0
        %3473 = vmatpush1.bf16.msra.mxu0 0
        %3474 = vmatprep.subr.bf16.mxu0 0
        %3475 = vmatpush1.bf16.msra.mxu0 0
        %3476 = vmatprep.subr.bf16.mxu0 0
        %3477 = vmatpush1.bf16.msra.mxu0 0
        %3478 = vmatprep.subr.bf16.mxu0 0
        %3479 = vmatpush1.bf16.msra.mxu0 0
        %3480 = vmatprep.subr.bf16.mxu0 0
        %3481 = vmatpush1.bf16.msra.mxu0 0
        %3482 = vmatprep.subr.bf16.mxu0 0
        %3483 = vmatpush1.bf16.msra.mxu0 0
        %3484 = vmatprep.subr.bf16.mxu0 0
        %3485 = vmatpush1.bf16.msra.mxu0 0
        %3486 = vmatprep.subr.bf16.mxu0 0
        %3487 = vmatpush1.bf16.msra.mxu0 %v3470
        %3488 = vmatprep.subr.bf16.mxu0 0
        %3489 = vmatpush2.bf16.msra.mxu0 0
        %3490 = vmatprep.subr.bf16.mxu0 0
        %3491 = vmatpush2.bf16.msra.mxu0 0
        %3492 = vmatprep.subr.bf16.mxu0 0
        %3493 = vmatpush2.bf16.msra.mxu0 0
        %3494 = vmatprep.subr.bf16.mxu0 0
        %3495 = vmatpush2.bf16.msra.mxu0 0
        %3496 = vmatprep.subr.bf16.mxu0 0
        %3497 = vmatpush2.bf16.msra.mxu0 0
        %3498 = vmatprep.subr.bf16.mxu0 0
        %3499 = vmatpush2.bf16.msra.mxu0 0
        %3500 = vmatprep.subr.bf16.mxu0 0
        %3501 = vmatpush2.bf16.msra.mxu0 0
        %3502 = vmatprep.subr.bf16.mxu0 0
        %3503 = vmatpush2.bf16.msra.mxu0 0
        %3504 = vmatprep.mubr.bf16.mxu0 0
        %3505 = vmatmul.mubr.bf16.gmra.mxu0 %v3467
        %v3506 = vpop.f32.mrf.mxu0
        %v3507 = vadd.f32 0.0, %v3506
        %v3508 = vpop.f32.mrf.mxu0
        %v3509 = vpop.f32.mrf.mxu0
        %v3510 = vadd.f32 0.0, %v3509
        %v3511 = vpop.f32.mrf.mxu0
        %3512 = vdwg.mxu0
        %v3513 = vadd.f32 %v3459, %v3507
        %v3514 = vadd.f32 %v3460, %v3510
        %s3515 = scalar_lea.vmem %s1246, 82
        %v3516 = vld [vmem:[%s3515] sm:$0x3]
        %v3517 = vrot.slane %v3401, 1
        %v3518 = vrot.slane %v3403, 2
        %v3519 = vor.u32 %v3517, %v3518
        %v3520 = vshrl.u32 %v3400, 16
        %v3522 = vrot.slane %v3520, 1
        %v3523 = vrot.slane %v3408, 2
        %v3524 = vor.u32 %v3522, %v3523
        %v3525 = vsel %vm1436, %v3519, %v3524
        %v3527 = vsel %vm1281, %v3525, 0
        %v3530 = vand.u32 %v3516, %v1288
        %3532 = vmatprep.subr.bf16.mxu0 0
        %3533 = vmatpush1.bf16.msra.mxu0 0
        %3534 = vmatprep.subr.bf16.mxu0 0
        %3535 = vmatpush1.bf16.msra.mxu0 0
        %3536 = vmatprep.subr.bf16.mxu0 0
        %3537 = vmatpush1.bf16.msra.mxu0 0
        %3538 = vmatprep.subr.bf16.mxu0 0
        %3539 = vmatpush1.bf16.msra.mxu0 0
        %3540 = vmatprep.subr.bf16.mxu0 0
        %3541 = vmatpush1.bf16.msra.mxu0 0
        %3542 = vmatprep.subr.bf16.mxu0 0
        %3543 = vmatpush1.bf16.msra.mxu0 0
        %3544 = vmatprep.subr.bf16.mxu0 0
        %3545 = vmatpush1.bf16.msra.mxu0 0
        %3546 = vmatprep.subr.bf16.mxu0 0
        %3547 = vmatpush1.bf16.msra.mxu0 %v3530
        %3548 = vmatprep.subr.bf16.mxu0 0
        %3549 = vmatpush2.bf16.msra.mxu0 0
        %3550 = vmatprep.subr.bf16.mxu0 0
        %3551 = vmatpush2.bf16.msra.mxu0 0
        %3552 = vmatprep.subr.bf16.mxu0 0
        %3553 = vmatpush2.bf16.msra.mxu0 0
        %3554 = vmatprep.subr.bf16.mxu0 0
        %3555 = vmatpush2.bf16.msra.mxu0 0
        %3556 = vmatprep.subr.bf16.mxu0 0
        %3557 = vmatpush2.bf16.msra.mxu0 0
        %3558 = vmatprep.subr.bf16.mxu0 0
        %3559 = vmatpush2.bf16.msra.mxu0 0
        %3560 = vmatprep.subr.bf16.mxu0 0
        %3561 = vmatpush2.bf16.msra.mxu0 0
        %3562 = vmatprep.subr.bf16.mxu0 0
        %3563 = vmatpush2.bf16.msra.mxu0 0
        %3564 = vmatprep.mubr.bf16.mxu0 0
        %3565 = vmatmul.mubr.bf16.gmra.mxu0 %v3527
        %v3566 = vpop.f32.mrf.mxu0
        %v3567 = vadd.f32 0.0, %v3566
        %v3568 = vpop.f32.mrf.mxu0
        %v3569 = vpop.f32.mrf.mxu0
        %v3570 = vadd.f32 0.0, %v3569
        %v3571 = vpop.f32.mrf.mxu0
        %3572 = vdwg.mxu0
        %v3573 = vadd.f32 %v3513, %v3567
        %v3574 = vadd.f32 %v3514, %v3570
        %v3575 = vld [vmem:[%s1214] sm:$0xf]
        %v3576 = vld [vmem:[%s1214 + $0x4] sm:$0xf]
        %v3577 = vld [vmem:[%s1214 + $0x8] sm:$0x3]
        %s3578 = scalar_lea.vmem %s1246, 72
        %v3579 = vld [vmem:[%s3578] sm:$0x3]
        %v3582 = vunpack.c.l.b16 %v3575
        %v3583 = vunpack.c.l.b16 %v3576
        %v3584 = vpack.c.b16 %v3583, %v3582
        %v3586 = vsel %vm1281, %v3584, 0
        %v3589 = vand.u32 %v3579, %v1288
        %3591 = vmatprep.subr.bf16.mxu0 0
        %3592 = vmatpush1.bf16.msra.mxu0 0
        %3593 = vmatprep.subr.bf16.mxu0 0
        %3594 = vmatpush1.bf16.msra.mxu0 0
        %3595 = vmatprep.subr.bf16.mxu0 0
        %3596 = vmatpush1.bf16.msra.mxu0 0
        %3597 = vmatprep.subr.bf16.mxu0 0
        %3598 = vmatpush1.bf16.msra.mxu0 0
        %3599 = vmatprep.subr.bf16.mxu0 0
        %3600 = vmatpush1.bf16.msra.mxu0 0
        %3601 = vmatprep.subr.bf16.mxu0 0
        %3602 = vmatpush1.bf16.msra.mxu0 0
        %3603 = vmatprep.subr.bf16.mxu0 0
        %3604 = vmatpush1.bf16.msra.mxu0 0
        %3605 = vmatprep.subr.bf16.mxu0 0
        %3606 = vmatpush1.bf16.msra.mxu0 %v3589
        %3607 = vmatprep.subr.bf16.mxu0 0
        %3608 = vmatpush2.bf16.msra.mxu0 0
        %3609 = vmatprep.subr.bf16.mxu0 0
        %3610 = vmatpush2.bf16.msra.mxu0 0
        %3611 = vmatprep.subr.bf16.mxu0 0
        %3612 = vmatpush2.bf16.msra.mxu0 0
        %3613 = vmatprep.subr.bf16.mxu0 0
        %3614 = vmatpush2.bf16.msra.mxu0 0
        %3615 = vmatprep.subr.bf16.mxu0 0
        %3616 = vmatpush2.bf16.msra.mxu0 0
        %3617 = vmatprep.subr.bf16.mxu0 0
        %3618 = vmatpush2.bf16.msra.mxu0 0
        %3619 = vmatprep.subr.bf16.mxu0 0
        %3620 = vmatpush2.bf16.msra.mxu0 0
        %3621 = vmatprep.subr.bf16.mxu0 0
        %3622 = vmatpush2.bf16.msra.mxu0 0
        %3623 = vmatprep.mubr.bf16.mxu0 0
        %3624 = vmatmul.mubr.bf16.gmra.mxu0 %v3586
        %v3625 = vpop.f32.mrf.mxu0
        %v3626 = vadd.f32 0.0, %v3625
        %v3627 = vpop.f32.mrf.mxu0
        %v3628 = vpop.f32.mrf.mxu0
        %v3629 = vadd.f32 0.0, %v3628
        %v3630 = vpop.f32.mrf.mxu0
        %3631 = vdwg.mxu0
        %v3632 = vadd.f32 %v3573, %v3626
        %v3633 = vadd.f32 %v3574, %v3629
        %s3634 = scalar_lea.vmem %s1246, 76
        %v3635 = vld [vmem:[%s3634] sm:$0x3]
        %v3637 = vunpack.c.l.b16 %v3577
        %v3638 = vpack.c.b16 %v3637, %v3637
        %v3639 = vshrl.u32 %v3584, 16
        %v3641 = vshll.u32 %v3584, 16
        %v3643 = vrot.slane %v3641, 1
        %v3644 = vor.u32 %v3639, %v3643
        %v3646 = vshll.u32 %v3638, 16
        %v3648 = vrot.slane %v3646, 1
        %v3649 = vsel %vm1268, %v3644, %v3648
        %v3651 = vsel %vm1281, %v3649, 0
        %v3654 = vand.u32 %v3635, %v1288
        %3656 = vmatprep.subr.bf16.mxu0 0
        %3657 = vmatpush1.bf16.msra.mxu0 0
        %3658 = vmatprep.subr.bf16.mxu0 0
        %3659 = vmatpush1.bf16.msra.mxu0 0
        %3660 = vmatprep.subr.bf16.mxu0 0
        %3661 = vmatpush1.bf16.msra.mxu0 0
        %3662 = vmatprep.subr.bf16.mxu0 0
        %3663 = vmatpush1.bf16.msra.mxu0 0
        %3664 = vmatprep.subr.bf16.mxu0 0
        %3665 = vmatpush1.bf16.msra.mxu0 0
        %3666 = vmatprep.subr.bf16.mxu0 0
        %3667 = vmatpush1.bf16.msra.mxu0 0
        %3668 = vmatprep.subr.bf16.mxu0 0
        %3669 = vmatpush1.bf16.msra.mxu0 0
        %3670 = vmatprep.subr.bf16.mxu0 0
        %3671 = vmatpush1.bf16.msra.mxu0 %v3654
        %3672 = vmatprep.subr.bf16.mxu0 0
        %3673 = vmatpush2.bf16.msra.mxu0 0
        %3674 = vmatprep.subr.bf16.mxu0 0
        %3675 = vmatpush2.bf16.msra.mxu0 0
        %3676 = vmatprep.subr.bf16.mxu0 0
        %3677 = vmatpush2.bf16.msra.mxu0 0
        %3678 = vmatprep.subr.bf16.mxu0 0
        %3679 = vmatpush2.bf16.msra.mxu0 0
        %3680 = vmatprep.subr.bf16.mxu0 0
        %3681 = vmatpush2.bf16.msra.mxu0 0
        %3682 = vmatprep.subr.bf16.mxu0 0
        %3683 = vmatpush2.bf16.msra.mxu0 0
        %3684 = vmatprep.subr.bf16.mxu0 0
        %3685 = vmatpush2.bf16.msra.mxu0 0
        %3686 = vmatprep.subr.bf16.mxu0 0
        %3687 = vmatpush2.bf16.msra.mxu0 0
        %3688 = vmatprep.mubr.bf16.mxu0 0
        %3689 = vmatmul.mubr.bf16.gmra.mxu0 %v3651
        %v3690 = vpop.f32.mrf.mxu0
        %v3691 = vadd.f32 0.0, %v3690
        %v3692 = vpop.f32.mrf.mxu0
        %v3693 = vpop.f32.mrf.mxu0
        %v3694 = vadd.f32 0.0, %v3693
        %v3695 = vpop.f32.mrf.mxu0
        %3696 = vdwg.mxu0
        %v3697 = vadd.f32 %v3632, %v3691
        %v3698 = vadd.f32 %v3633, %v3694
        %s3699 = scalar_lea.vmem %s1246, 80
        %v3700 = vld [vmem:[%s3699] sm:$0x3]
        %v3701 = vrot.slane %v3584, 1
        %v3702 = vrot.slane %v3638, 1
        %v3703 = vsel %vm1381, %v3701, %v3702
        %v3705 = vsel %vm1281, %v3703, 0
        %v3708 = vand.u32 %v3700, %v1288
        %3710 = vmatprep.subr.bf16.mxu0 0
        %3711 = vmatpush1.bf16.msra.mxu0 0
        %3712 = vmatprep.subr.bf16.mxu0 0
        %3713 = vmatpush1.bf16.msra.mxu0 0
        %3714 = vmatprep.subr.bf16.mxu0 0
        %3715 = vmatpush1.bf16.msra.mxu0 0
        %3716 = vmatprep.subr.bf16.mxu0 0
        %3717 = vmatpush1.bf16.msra.mxu0 0
        %3718 = vmatprep.subr.bf16.mxu0 0
        %3719 = vmatpush1.bf16.msra.mxu0 0
        %3720 = vmatprep.subr.bf16.mxu0 0
        %3721 = vmatpush1.bf16.msra.mxu0 0
        %3722 = vmatprep.subr.bf16.mxu0 0
        %3723 = vmatpush1.bf16.msra.mxu0 0
        %3724 = vmatprep.subr.bf16.mxu0 0
        %3725 = vmatpush1.bf16.msra.mxu0 %v3708
        %3726 = vmatprep.subr.bf16.mxu0 0
        %3727 = vmatpush2.bf16.msra.mxu0 0
        %3728 = vmatprep.subr.bf16.mxu0 0
        %3729 = vmatpush2.bf16.msra.mxu0 0
        %3730 = vmatprep.subr.bf16.mxu0 0
        %3731 = vmatpush2.bf16.msra.mxu0 0
        %3732 = vmatprep.subr.bf16.mxu0 0
        %3733 = vmatpush2.bf16.msra.mxu0 0
        %3734 = vmatprep.subr.bf16.mxu0 0
        %3735 = vmatpush2.bf16.msra.mxu0 0
        %3736 = vmatprep.subr.bf16.mxu0 0
        %3737 = vmatpush2.bf16.msra.mxu0 0
        %3738 = vmatprep.subr.bf16.mxu0 0
        %3739 = vmatpush2.bf16.msra.mxu0 0
        %3740 = vmatprep.subr.bf16.mxu0 0
        %3741 = vmatpush2.bf16.msra.mxu0 0
        %3742 = vmatprep.mubr.bf16.mxu0 0
        %3743 = vmatmul.mubr.bf16.gmra.mxu0 %v3705
        %v3744 = vpop.f32.mrf.mxu0
        %v3745 = vadd.f32 0.0, %v3744
        %v3746 = vpop.f32.mrf.mxu0
        %v3747 = vpop.f32.mrf.mxu0
        %v3748 = vadd.f32 0.0, %v3747
        %v3749 = vpop.f32.mrf.mxu0
        %3750 = vdwg.mxu0
        %v3751 = vadd.f32 %v3697, %v3745
        %v3752 = vadd.f32 %v3698, %v3748
        %v3753 = vld [vmem:[%s1227] sm:$0xf]
        %v3754 = vld [vmem:[%s1227 + $0x4] sm:$0xf]
        %v3755 = vld [vmem:[%s1227 + $0x8] sm:$0x3]
        %s3756 = scalar_lea.vmem %s1246, 84
        %v3757 = vld [vmem:[%s3756] sm:$0x3]
        %v3760 = vunpack.c.l.b16 %v3753
        %v3761 = vunpack.c.l.b16 %v3754
        %v3762 = vpack.c.b16 %v3761, %v3760
        %v3764 = vsel %vm1281, %v3762, 0
        %v3767 = vand.u32 %v3757, %v1288
        %3769 = vmatprep.subr.bf16.mxu0 0
        %3770 = vmatpush1.bf16.msra.mxu0 0
        %3771 = vmatprep.subr.bf16.mxu0 0
        %3772 = vmatpush1.bf16.msra.mxu0 0
        %3773 = vmatprep.subr.bf16.mxu0 0
        %3774 = vmatpush1.bf16.msra.mxu0 0
        %3775 = vmatprep.subr.bf16.mxu0 0
        %3776 = vmatpush1.bf16.msra.mxu0 0
        %3777 = vmatprep.subr.bf16.mxu0 0
        %3778 = vmatpush1.bf16.msra.mxu0 0
        %3779 = vmatprep.subr.bf16.mxu0 0
        %3780 = vmatpush1.bf16.msra.mxu0 0
        %3781 = vmatprep.subr.bf16.mxu0 0
        %3782 = vmatpush1.bf16.msra.mxu0 0
        %3783 = vmatprep.subr.bf16.mxu0 0
        %3784 = vmatpush1.bf16.msra.mxu0 %v3767
        %3785 = vmatprep.subr.bf16.mxu0 0
        %3786 = vmatpush2.bf16.msra.mxu0 0
        %3787 = vmatprep.subr.bf16.mxu0 0
        %3788 = vmatpush2.bf16.msra.mxu0 0
        %3789 = vmatprep.subr.bf16.mxu0 0
        %3790 = vmatpush2.bf16.msra.mxu0 0
        %3791 = vmatprep.subr.bf16.mxu0 0
        %3792 = vmatpush2.bf16.msra.mxu0 0
        %3793 = vmatprep.subr.bf16.mxu0 0
        %3794 = vmatpush2.bf16.msra.mxu0 0
        %3795 = vmatprep.subr.bf16.mxu0 0
        %3796 = vmatpush2.bf16.msra.mxu0 0
        %3797 = vmatprep.subr.bf16.mxu0 0
        %3798 = vmatpush2.bf16.msra.mxu0 0
        %3799 = vmatprep.subr.bf16.mxu0 0
        %3800 = vmatpush2.bf16.msra.mxu0 0
        %3801 = vmatprep.mubr.bf16.mxu0 0
        %3802 = vmatmul.mubr.bf16.gmra.mxu0 %v3764
        %v3803 = vpop.f32.mrf.mxu0
        %v3804 = vadd.f32 0.0, %v3803
        %v3805 = vpop.f32.mrf.mxu0
        %v3806 = vpop.f32.mrf.mxu0
        %v3807 = vadd.f32 0.0, %v3806
        %v3808 = vpop.f32.mrf.mxu0
        %3809 = vdwg.mxu0
        %v3810 = vadd.f32 %v3751, %v3804
        %v3811 = vadd.f32 %v3752, %v3807
        %s3812 = scalar_lea.vmem %s1246, 88
        %v3813 = vld [vmem:[%s3812] sm:$0x3]
        %v3815 = vunpack.c.l.b16 %v3755
        %v3816 = vpack.c.b16 %v3815, %v3815
        %v3817 = vshrl.u32 %v3762, 16
        %v3819 = vshll.u32 %v3762, 16
        %v3821 = vrot.slane %v3819, 1
        %v3822 = vor.u32 %v3817, %v3821
        %v3824 = vshll.u32 %v3816, 16
        %v3826 = vrot.slane %v3824, 1
        %v3827 = vsel %vm1268, %v3822, %v3826
        %v3829 = vsel %vm1281, %v3827, 0
        %v3832 = vand.u32 %v3813, %v1288
        %3834 = vmatprep.subr.bf16.mxu0 0
        %3835 = vmatpush1.bf16.msra.mxu0 0
        %3836 = vmatprep.subr.bf16.mxu0 0
        %3837 = vmatpush1.bf16.msra.mxu0 0
        %3838 = vmatprep.subr.bf16.mxu0 0
        %3839 = vmatpush1.bf16.msra.mxu0 0
        %3840 = vmatprep.subr.bf16.mxu0 0
        %3841 = vmatpush1.bf16.msra.mxu0 0
        %3842 = vmatprep.subr.bf16.mxu0 0
        %3843 = vmatpush1.bf16.msra.mxu0 0
        %3844 = vmatprep.subr.bf16.mxu0 0
        %3845 = vmatpush1.bf16.msra.mxu0 0
        %3846 = vmatprep.subr.bf16.mxu0 0
        %3847 = vmatpush1.bf16.msra.mxu0 0
        %3848 = vmatprep.subr.bf16.mxu0 0
        %3849 = vmatpush1.bf16.msra.mxu0 %v3832
        %3850 = vmatprep.subr.bf16.mxu0 0
        %3851 = vmatpush2.bf16.msra.mxu0 0
        %3852 = vmatprep.subr.bf16.mxu0 0
        %3853 = vmatpush2.bf16.msra.mxu0 0
        %3854 = vmatprep.subr.bf16.mxu0 0
        %3855 = vmatpush2.bf16.msra.mxu0 0
        %3856 = vmatprep.subr.bf16.mxu0 0
        %3857 = vmatpush2.bf16.msra.mxu0 0
        %3858 = vmatprep.subr.bf16.mxu0 0
        %3859 = vmatpush2.bf16.msra.mxu0 0
        %3860 = vmatprep.subr.bf16.mxu0 0
        %3861 = vmatpush2.bf16.msra.mxu0 0
        %3862 = vmatprep.subr.bf16.mxu0 0
        %3863 = vmatpush2.bf16.msra.mxu0 0
        %3864 = vmatprep.subr.bf16.mxu0 0
        %3865 = vmatpush2.bf16.msra.mxu0 0
        %3866 = vmatprep.mubr.bf16.mxu0 0
        %3867 = vmatmul.mubr.bf16.gmra.mxu0 %v3829
        %v3868 = vpop.f32.mrf.mxu0
        %v3869 = vadd.f32 0.0, %v3868
        %v3870 = vpop.f32.mrf.mxu0
        %v3871 = vpop.f32.mrf.mxu0
        %v3872 = vadd.f32 0.0, %v3871
        %v3873 = vpop.f32.mrf.mxu0
        %3874 = vdwg.mxu0
        %v3875 = vadd.f32 %v3810, %v3869
        %v3876 = vadd.f32 %v3811, %v3872
        %s3877 = scalar_lea.vmem %s1246, 92
        %v3878 = vld [vmem:[%s3877] sm:$0x3]
        %v3879 = vrot.slane %v3762, 1
        %v3880 = vrot.slane %v3816, 1
        %v3881 = vsel %vm1381, %v3879, %v3880
        %v3883 = vsel %vm1281, %v3881, 0
        %v3886 = vand.u32 %v3878, %v1288
        %3888 = vmatprep.subr.bf16.mxu0 0
        %3889 = vmatpush1.bf16.msra.mxu0 0
        %3890 = vmatprep.subr.bf16.mxu0 0
        %3891 = vmatpush1.bf16.msra.mxu0 0
        %3892 = vmatprep.subr.bf16.mxu0 0
        %3893 = vmatpush1.bf16.msra.mxu0 0
        %3894 = vmatprep.subr.bf16.mxu0 0
        %3895 = vmatpush1.bf16.msra.mxu0 0
        %3896 = vmatprep.subr.bf16.mxu0 0
        %3897 = vmatpush1.bf16.msra.mxu0 0
        %3898 = vmatprep.subr.bf16.mxu0 0
        %3899 = vmatpush1.bf16.msra.mxu0 0
        %3900 = vmatprep.subr.bf16.mxu0 0
        %3901 = vmatpush1.bf16.msra.mxu0 0
        %3902 = vmatprep.subr.bf16.mxu0 0
        %3903 = vmatpush1.bf16.msra.mxu0 %v3886
        %3904 = vmatprep.subr.bf16.mxu0 0
        %3905 = vmatpush2.bf16.msra.mxu0 0
        %3906 = vmatprep.subr.bf16.mxu0 0
        %3907 = vmatpush2.bf16.msra.mxu0 0
        %3908 = vmatprep.subr.bf16.mxu0 0
        %3909 = vmatpush2.bf16.msra.mxu0 0
        %3910 = vmatprep.subr.bf16.mxu0 0
        %3911 = vmatpush2.bf16.msra.mxu0 0
        %3912 = vmatprep.subr.bf16.mxu0 0
        %3913 = vmatpush2.bf16.msra.mxu0 0
        %3914 = vmatprep.subr.bf16.mxu0 0
        %3915 = vmatpush2.bf16.msra.mxu0 0
        %3916 = vmatprep.subr.bf16.mxu0 0
        %3917 = vmatpush2.bf16.msra.mxu0 0
        %3918 = vmatprep.subr.bf16.mxu0 0
        %3919 = vmatpush2.bf16.msra.mxu0 0
        %3920 = vmatprep.mubr.bf16.mxu0 0
        %3921 = vmatmul.mubr.bf16.gmra.mxu0 %v3883
        %v3922 = vpop.f32.mrf.mxu0
        %v3923 = vadd.f32 0.0, %v3922
        %v3924 = vpop.f32.mrf.mxu0
        %v3925 = vpop.f32.mrf.mxu0
        %v3926 = vadd.f32 0.0, %v3925
        %v3927 = vpop.f32.mrf.mxu0
        %3928 = vdwg.mxu0
        %v3929 = vadd.f32 %v3875, %v3923
        %v3930 = vadd.f32 %v3876, %v3926
        %s3931 = scalar_lea.vmem %s1246, 96
        %v3932 = vld [vmem:[%s3931] sm:$0x3]
        %v3933 = vrot.slane %v3817, 1
        %v3934 = vrot.slane %v3819, 2
        %v3935 = vor.u32 %v3933, %v3934
        %v3936 = vshrl.u32 %v3816, 16
        %v3938 = vrot.slane %v3936, 1
        %v3939 = vrot.slane %v3824, 2
        %v3940 = vor.u32 %v3938, %v3939
        %v3941 = vsel %vm1436, %v3935, %v3940
        %v3943 = vsel %vm1281, %v3941, 0
        %v3946 = vand.u32 %v3932, %v1288
        %3948 = vmatprep.subr.bf16.mxu0 0
        %3949 = vmatpush1.bf16.msra.mxu0 0
        %3950 = vmatprep.subr.bf16.mxu0 0
        %3951 = vmatpush1.bf16.msra.mxu0 0
        %3952 = vmatprep.subr.bf16.mxu0 0
        %3953 = vmatpush1.bf16.msra.mxu0 0
        %3954 = vmatprep.subr.bf16.mxu0 0
        %3955 = vmatpush1.bf16.msra.mxu0 0
        %3956 = vmatprep.subr.bf16.mxu0 0
        %3957 = vmatpush1.bf16.msra.mxu0 0
        %3958 = vmatprep.subr.bf16.mxu0 0
        %3959 = vmatpush1.bf16.msra.mxu0 0
        %3960 = vmatprep.subr.bf16.mxu0 0
        %3961 = vmatpush1.bf16.msra.mxu0 0
        %3962 = vmatprep.subr.bf16.mxu0 0
        %3963 = vmatpush1.bf16.msra.mxu0 %v3946
        %3964 = vmatprep.subr.bf16.mxu0 0
        %3965 = vmatpush2.bf16.msra.mxu0 0
        %3966 = vmatprep.subr.bf16.mxu0 0
        %3967 = vmatpush2.bf16.msra.mxu0 0
        %3968 = vmatprep.subr.bf16.mxu0 0
        %3969 = vmatpush2.bf16.msra.mxu0 0
        %3970 = vmatprep.subr.bf16.mxu0 0
        %3971 = vmatpush2.bf16.msra.mxu0 0
        %3972 = vmatprep.subr.bf16.mxu0 0
        %3973 = vmatpush2.bf16.msra.mxu0 0
        %3974 = vmatprep.subr.bf16.mxu0 0
        %3975 = vmatpush2.bf16.msra.mxu0 0
        %3976 = vmatprep.subr.bf16.mxu0 0
        %3977 = vmatpush2.bf16.msra.mxu0 0
        %3978 = vmatprep.subr.bf16.mxu0 0
        %3979 = vmatpush2.bf16.msra.mxu0 0
        %3980 = vmatprep.mubr.bf16.mxu0 0
        %3981 = vmatmul.mubr.bf16.gmra.mxu0 %v3943
        %v3982 = vpop.f32.mrf.mxu0
        %v3983 = vadd.f32 0.0, %v3982
        %v3984 = vpop.f32.mrf.mxu0
        %v3985 = vpop.f32.mrf.mxu0
        %v3986 = vadd.f32 0.0, %v3985
        %v3987 = vpop.f32.mrf.mxu0
        %3988 = vdwg.mxu0
        %v3989 = vadd.f32 %v3929, %v3983
        %v3990 = vadd.f32 %v3930, %v3986
        %v3991 = vld [vmem:[%s1240] sm:$0xf]
        %v3992 = vld [vmem:[%s1240 + $0x4] sm:$0xf]
        %v3993 = vld [vmem:[%s1240 + $0x8] sm:$0x3]
        %s3994 = scalar_lea.vmem %s1246, 86
        %v3995 = vld [vmem:[%s3994] sm:$0x3]
        %v3998 = vunpack.c.l.b16 %v3991
        %v3999 = vunpack.c.l.b16 %v3992
        %v4000 = vpack.c.b16 %v3999, %v3998
        %v4002 = vsel %vm1281, %v4000, 0
        %v4005 = vand.u32 %v3995, %v1288
        %4007 = vmatprep.subr.bf16.mxu0 0
        %4008 = vmatpush1.bf16.msra.mxu0 0
        %4009 = vmatprep.subr.bf16.mxu0 0
        %4010 = vmatpush1.bf16.msra.mxu0 0
        %4011 = vmatprep.subr.bf16.mxu0 0
        %4012 = vmatpush1.bf16.msra.mxu0 0
        %4013 = vmatprep.subr.bf16.mxu0 0
        %4014 = vmatpush1.bf16.msra.mxu0 0
        %4015 = vmatprep.subr.bf16.mxu0 0
        %4016 = vmatpush1.bf16.msra.mxu0 0
        %4017 = vmatprep.subr.bf16.mxu0 0
        %4018 = vmatpush1.bf16.msra.mxu0 0
        %4019 = vmatprep.subr.bf16.mxu0 0
        %4020 = vmatpush1.bf16.msra.mxu0 0
        %4021 = vmatprep.subr.bf16.mxu0 0
        %4022 = vmatpush1.bf16.msra.mxu0 %v4005
        %4023 = vmatprep.subr.bf16.mxu0 0
        %4024 = vmatpush2.bf16.msra.mxu0 0
        %4025 = vmatprep.subr.bf16.mxu0 0
        %4026 = vmatpush2.bf16.msra.mxu0 0
        %4027 = vmatprep.subr.bf16.mxu0 0
        %4028 = vmatpush2.bf16.msra.mxu0 0
        %4029 = vmatprep.subr.bf16.mxu0 0
        %4030 = vmatpush2.bf16.msra.mxu0 0
        %4031 = vmatprep.subr.bf16.mxu0 0
        %4032 = vmatpush2.bf16.msra.mxu0 0
        %4033 = vmatprep.subr.bf16.mxu0 0
        %4034 = vmatpush2.bf16.msra.mxu0 0
        %4035 = vmatprep.subr.bf16.mxu0 0
        %4036 = vmatpush2.bf16.msra.mxu0 0
        %4037 = vmatprep.subr.bf16.mxu0 0
        %4038 = vmatpush2.bf16.msra.mxu0 0
        %4039 = vmatprep.mubr.bf16.mxu0 0
        %4040 = vmatmul.mubr.bf16.gmra.mxu0 %v4002
        %v4041 = vpop.f32.mrf.mxu0
        %v4042 = vadd.f32 0.0, %v4041
        %v4043 = vpop.f32.mrf.mxu0
        %v4044 = vpop.f32.mrf.mxu0
        %v4045 = vadd.f32 0.0, %v4044
        %v4046 = vpop.f32.mrf.mxu0
        %4047 = vdwg.mxu0
        %v4048 = vadd.f32 %v3989, %v4042
        %v4049 = vadd.f32 %v3990, %v4045
        %s4050 = scalar_lea.vmem %s1246, 90
        %v4051 = vld [vmem:[%s4050] sm:$0x3]
        %v4053 = vunpack.c.l.b16 %v3993
        %v4054 = vpack.c.b16 %v4053, %v4053
        %v4055 = vshrl.u32 %v4000, 16
        %v4057 = vshll.u32 %v4000, 16
        %v4059 = vrot.slane %v4057, 1
        %v4060 = vor.u32 %v4055, %v4059
        %v4062 = vshll.u32 %v4054, 16
        %v4064 = vrot.slane %v4062, 1
        %v4065 = vsel %vm1268, %v4060, %v4064
        %v4067 = vsel %vm1281, %v4065, 0
        %v4070 = vand.u32 %v4051, %v1288
        %4072 = vmatprep.subr.bf16.mxu0 0
        %4073 = vmatpush1.bf16.msra.mxu0 0
        %4074 = vmatprep.subr.bf16.mxu0 0
        %4075 = vmatpush1.bf16.msra.mxu0 0
        %4076 = vmatprep.subr.bf16.mxu0 0
        %4077 = vmatpush1.bf16.msra.mxu0 0
        %4078 = vmatprep.subr.bf16.mxu0 0
        %4079 = vmatpush1.bf16.msra.mxu0 0
        %4080 = vmatprep.subr.bf16.mxu0 0
        %4081 = vmatpush1.bf16.msra.mxu0 0
        %4082 = vmatprep.subr.bf16.mxu0 0
        %4083 = vmatpush1.bf16.msra.mxu0 0
        %4084 = vmatprep.subr.bf16.mxu0 0
        %4085 = vmatpush1.bf16.msra.mxu0 0
        %4086 = vmatprep.subr.bf16.mxu0 0
        %4087 = vmatpush1.bf16.msra.mxu0 %v4070
        %4088 = vmatprep.subr.bf16.mxu0 0
        %4089 = vmatpush2.bf16.msra.mxu0 0
        %4090 = vmatprep.subr.bf16.mxu0 0
        %4091 = vmatpush2.bf16.msra.mxu0 0
        %4092 = vmatprep.subr.bf16.mxu0 0
        %4093 = vmatpush2.bf16.msra.mxu0 0
        %4094 = vmatprep.subr.bf16.mxu0 0
        %4095 = vmatpush2.bf16.msra.mxu0 0
        %4096 = vmatprep.subr.bf16.mxu0 0
        %4097 = vmatpush2.bf16.msra.mxu0 0
        %4098 = vmatprep.subr.bf16.mxu0 0
        %4099 = vmatpush2.bf16.msra.mxu0 0
        %4100 = vmatprep.subr.bf16.mxu0 0
        %4101 = vmatpush2.bf16.msra.mxu0 0
        %4102 = vmatprep.subr.bf16.mxu0 0
        %4103 = vmatpush2.bf16.msra.mxu0 0
        %4104 = vmatprep.mubr.bf16.mxu0 0
        %4105 = vmatmul.mubr.bf16.gmra.mxu0 %v4067
        %v4106 = vpop.f32.mrf.mxu0
        %v4107 = vadd.f32 0.0, %v4106
        %v4108 = vpop.f32.mrf.mxu0
        %v4109 = vpop.f32.mrf.mxu0
        %v4110 = vadd.f32 0.0, %v4109
        %v4111 = vpop.f32.mrf.mxu0
        %4112 = vdwg.mxu0
        %v4113 = vadd.f32 %v4048, %v4107
        %v4114 = vadd.f32 %v4049, %v4110
        %s4115 = scalar_lea.vmem %s1246, 94
        %v4116 = vld [vmem:[%s4115] sm:$0x3]
        %v4117 = vrot.slane %v4000, 1
        %v4118 = vrot.slane %v4054, 1
        %v4119 = vsel %vm1381, %v4117, %v4118
        %v4121 = vsel %vm1281, %v4119, 0
        %v4124 = vand.u32 %v4116, %v1288
        %4126 = vmatprep.subr.bf16.mxu0 0
        %4127 = vmatpush1.bf16.msra.mxu0 0
        %4128 = vmatprep.subr.bf16.mxu0 0
        %4129 = vmatpush1.bf16.msra.mxu0 0
        %4130 = vmatprep.subr.bf16.mxu0 0
        %4131 = vmatpush1.bf16.msra.mxu0 0
        %4132 = vmatprep.subr.bf16.mxu0 0
        %4133 = vmatpush1.bf16.msra.mxu0 0
        %4134 = vmatprep.subr.bf16.mxu0 0
        %4135 = vmatpush1.bf16.msra.mxu0 0
        %4136 = vmatprep.subr.bf16.mxu0 0
        %4137 = vmatpush1.bf16.msra.mxu0 0
        %4138 = vmatprep.subr.bf16.mxu0 0
        %4139 = vmatpush1.bf16.msra.mxu0 0
        %4140 = vmatprep.subr.bf16.mxu0 0
        %4141 = vmatpush1.bf16.msra.mxu0 %v4124
        %4142 = vmatprep.subr.bf16.mxu0 0
        %4143 = vmatpush2.bf16.msra.mxu0 0
        %4144 = vmatprep.subr.bf16.mxu0 0
        %4145 = vmatpush2.bf16.msra.mxu0 0
        %4146 = vmatprep.subr.bf16.mxu0 0
        %4147 = vmatpush2.bf16.msra.mxu0 0
        %4148 = vmatprep.subr.bf16.mxu0 0
        %4149 = vmatpush2.bf16.msra.mxu0 0
        %4150 = vmatprep.subr.bf16.mxu0 0
        %4151 = vmatpush2.bf16.msra.mxu0 0
        %4152 = vmatprep.subr.bf16.mxu0 0
        %4153 = vmatpush2.bf16.msra.mxu0 0
        %4154 = vmatprep.subr.bf16.mxu0 0
        %4155 = vmatpush2.bf16.msra.mxu0 0
        %4156 = vmatprep.subr.bf16.mxu0 0
        %4157 = vmatpush2.bf16.msra.mxu0 0
        %4158 = vmatprep.mubr.bf16.mxu0 0
        %4159 = vmatmul.mubr.bf16.gmra.mxu0 %v4121
        %v4160 = vpop.f32.mrf.mxu0
        %v4161 = vadd.f32 0.0, %v4160
        %v4162 = vpop.f32.mrf.mxu0
        %v4163 = vpop.f32.mrf.mxu0
        %v4164 = vadd.f32 0.0, %v4163
        %v4165 = vpop.f32.mrf.mxu0
        %4166 = vdwg.mxu0
        %v4167 = vadd.f32 %v4113, %v4161
        %v4168 = vadd.f32 %v4114, %v4164
        %v4169 = vld [vmem:[%s1249] sm:$0x1]
        %v4171 = vlaneseq
        %v4172 = vshrl.u32 %v4171, 7
        %v4173 = vsub.s32 0, %v4172
        %v4174 = vrot.slane %v4169, %v4173
        %v4176 = vmul.f32 %v4167, %v4174
        %v4177 = vmul.f32 %v4168, %v4174
        %v4178 = vld [vmem:[%s1252] sm:$0x1]
        %v4180 = vlaneseq
        %v4181 = vshrl.u32 %v4180, 7
        %v4182 = vsub.s32 0, %v4181
        %v4183 = vrot.slane %v4178, %v4182
        %v4185 = vadd.f32 %v4176, %v4183
        %v4186 = vadd.f32 %v4177, %v4183
        %v4187 = vmax.f32 %v4185, 0.0
        %v4188 = vmax.f32 %v4186, 0.0
        %v4189 = vpack.c.bf16 %v4188, %v4187
        %v4191 = vunpack.c.l.b16 %v4189
        %v4192 = vunpack.c.h.b16 %v4189
        %v4193 = vpack.c.b16 %v4191, %v4191
        %v4194 = vpack.c.b16 %v4192, %v4192
        %vm4197 = vcmask 519168
        %4198 = vst.msk [vmem:[%s1064] sm:$0xf] %vm4197, %v4193
        %4199 = vst.msk [vmem:[%s1064 + $0x4] sm:$0xf] %vm4197, %v4194
        %s4200 = sand.u32 %s584, 1
        %s4201 = scalar_lea.sflag [#allocation3], %s4200
        %s4202 = sand.u32 %s584, 1
        %s4203 = smul.addr %s4202, 8
        %s4204 = scalar_lea.vmem [#allocation2], %s4203
        // Predicated region
        $region89: #{conv_bn_act_spatial.1} parent=87 // pred_check
          %p4205 = pneg %p594
        $region90: #{conv_bn_act_spatial.1} parent=87 // pred_check_branch
          %4207 = sbr.rel (%p4205) target = $region92
        $region91: #{conv_bn_act_spatial.1} parent=87 // pred_region
          %s4209 = ssub.s32 128, 128
          %4210 = vsyncadd %s4201, %s4209
          %s4211 = smul.addr %s38, 2
          %s4212 = sadd.s32 %s36, %s4211
          %s4213 = smul.addr %s37, 32
          %s4214 = sadd.s32 %s4212, %s4213
          %s4215 = smul.addr %s4214, 64
          %s4216 = scalar_lea.hbm %s17, %s4215
          %s4217 = sshll.u32 %s4204, 4
          %s4218 = int_to_ptr.vmem [resolvable:$true] %s4217
          %4223 = dma.vmem_to_hbm [thread:$0]  %s4218, 128, %s4216, %s4201, 64, 64, 4
        $region92: #{conv_bn_act_spatial.1} parent=87 // pred_fallthru
          _
      $region88: #{conv_bn_act_spatial.1} parent=5 // pred_fallthru
        _
      %p4224 = scmp.le.s32.totalorder 2, %s26
      // Predicated region
      $region93: #{conv_bn_act_spatial.1} parent=5 // pred_check
        %p4225 = pneg %p4224
      $region94: #{conv_bn_act_spatial.1} parent=5 // pred_check_branch
        %4227 = sbr.rel (%p4225) target = $region96
      $region95: #{conv_bn_act_spatial.1} parent=5 // pred_region
        %s4228 = ssub.s32 %s26, 2
        // Predicated region
        $region97: #{conv_bn_act_spatial.1} parent=95 // pred_check
          %p4229 = pneg %p600
        $region98: #{conv_bn_act_spatial.1} parent=95 // pred_check_branch
          %4231 = sbr.rel (%p4229) target = $region100
        $region99: #{conv_bn_act_spatial.1} parent=95 // pred_region
          %s4232 = sand.u32 %s585, 1
          %s4233 = scalar_lea.sflag [#allocation3], %s4232
          %s4234 = sand.u32 %s585, 1
          %s4235 = smul.addr %s4234, 8
          %s4236 = scalar_lea.vmem [#allocation2], %s4235
          %4237 = dma.done %s4233, 128
        $region100: #{conv_bn_act_spatial.1} parent=95 // pred_fallthru
          _
      $region96: #{conv_bn_act_spatial.1} parent=5 // pred_fallthru
        _
    $region6: #{conv_bn_act_spatial.1} parent=1 // loop_footer
      %s30 = sadd.s32 1, %s26
    $region7: #{conv_bn_act_spatial.1} parent=1 // loop_footer_branch
      %25 = sbr.rel target = $region3
    $region8: #{conv_bn_act_spatial.1} parent=1 // loop_exit
      _
    %4238 = vsyncpa [#allocation3], 1
    %s4239 = scalar_lea.sflag [#allocation3], 1
    %4240 = vsyncpa %s4239, 1

</llo_original>
